<compile_context>
chip_gen: v5e
topology: v5e:2x2
jax: 0.10.0
libtpu: 0.0.40
codegen_flags: <defaults>
</compile_context>

<pallas_src>
import numpy as np
import jax
import jax.numpy as jnp
from jax.experimental import pallas as pl
from jax.experimental.pallas import tpu as pltpu

# ----- config (consistent with the module defaults) -----
N_MAMBA = 2
D_MODEL = 32
D_STATE = 16
EXPAND = 2
D_CONV = 4
D_INNER = EXPAND * D_MODEL                 # 64
DT_RANK = (D_MODEL + 15) // 16             # 'auto' -> ceil(d_model/16) = 2
EPS = 1e-5
B = 2
L = 16
BD = B * D_MODEL                           # 64   (lane-packed model width)
DIP = B * D_INNER                          # 128  (lane-packed inner width)
BC_W = 2 * B * D_STATE                     # 64   (B/C columns for both batches)
F32 = jnp.float32


# ===================== in-kernel helpers =====================

def _sigmoid(x):
    # numerically stable sigmoid (no exp overflow), exact divide.
    e = jnp.exp(-jnp.abs(x))
    return jnp.where(x >= 0, 1.0, e) / (1.0 + e)


def _silu(x):
    return x * _sigmoid(x)


def _softplus(x):
    # numerically stable softplus (PyTorch semantics, no overflow).
    return jnp.maximum(x, 0.0) + jnp.log(1.0 + jnp.exp(-jnp.abs(x)))


def _seg_layernorm(x, seg_m, w, b):
    # Per-batch-block LayerNorm over D_MODEL lanes of the lane-packed (L, B*D)
    # layout.  seg_m is a block-diagonal mean matrix, so the segmented mean /
    # variance ride the (otherwise idle) MXU instead of cross-lane XLU reduces.
    mu = jnp.dot(x, seg_m, preferred_element_type=F32)
    xc = x - mu
    var = jnp.dot(xc * xc, seg_m, preferred_element_type=F32)
    return xc * jax.lax.rsqrt(var + EPS) * w + b


# ===================== fused Pallas kernel =====================

def _fused_mamba_kernel(
    x_ref,                     # (L, BD)              lane-packed input
    seg_m_ref,                 # (BD, BD)             block-diag mean matrix
    shift_ref,                 # ((D_CONV-1)*L, L)    stacked causal shift matrices
    ln_w_ref, ln_b_ref,        # (N, 1, BD)
    in_proj_ref,               # (N, BD, 2*DIP)       block-diag, cols [x_b0|x_b1|z_b0|z_b1]
    conv_w_ref,                # (N, D_CONV, DIP)
    conv_b_ref,                # (N, 1, DIP)
    xproj_ref,                 # (N, DIP, DIP+BC_W)   dt_proj folded, block-diag
    dt_b_ref,                  # (N, 1, DIP)
    a_neg_ref,                 # (N, D_STATE, DIP)    -exp(A_log), pre-tiled
    d_ref,                     # (N, 1, DIP)
    out_proj_ref,              # (N, DIP, BD)         block-diag
    nfw_ref, nfb_ref,          # (1, BD)
    o_ref,                     # (L, BD)
    da_scr,                    # (L, D_STATE, DIP)    VMEM scratch
    dbu_scr,                   # (L, D_STATE, DIP)    VMEM scratch
    cbc_scr,                   # (L, D_STATE, DIP)    VMEM scratch
    y_scr,                     # (L, DIP)             VMEM scratch
):
    seg_m = seg_m_ref[...]
    shifts = shift_ref[...]

    hidden = x_ref[...]                                       # (L, BD)
    residual = None

    for layer in range(N_MAMBA):
        ln_w = ln_w_ref[layer]
        ln_b = ln_b_ref[layer]
        w_in = in_proj_ref[layer]
        conv_w = conv_w_ref[layer]
        conv_b = conv_b_ref[layer]
        w_x = xproj_ref[layer]
        dt_bias = dt_b_ref[layer]
        a_neg = a_neg_ref[layer]
        d_par = d_ref[layer]
        w_out = out_proj_ref[layer]

        # ---- prenorm residual + per-batch LayerNorm ----
        res = hidden if residual is None else hidden + residual
        u = _seg_layernorm(res, seg_m, ln_w, ln_b)            # (L, BD)

        # ---- in_proj: output is already lane-packed [x_b0|x_b1 | z_b0|z_b1] ----
        xz = jnp.dot(u, w_in, preferred_element_type=F32)     # (L, 2*DIP)
        x_in = xz[:, :DIP]                                    # (L, 128)
        z_pk = xz[:, DIP:]                                    # (L, 128)

        # ---- causal depthwise conv: time shifts via one tiny MXU matmul ----
        sh = jnp.dot(shifts, x_in, preferred_element_type=F32)   # (3L, DIP)
        acc = conv_b + x_in * conv_w[D_CONV - 1:D_CONV, :]       # tap k = D_CONV-1
        for k in range(D_CONV - 1):
            s = D_CONV - 1 - k                                     # shift 3,2,1
            acc = acc + sh[(s - 1) * L:s * L, :] * conv_w[k:k + 1, :]
        x_act = _silu(acc)                                         # (L, 128)

        # ---- x_proj (+ folded dt_proj) for BOTH batches in one matmul ----
        proj = jnp.dot(x_act, w_x, preferred_element_type=F32)    # (L, DIP+BC_W)
        dt = _softplus(proj[:, :DIP] + dt_bias)                    # (L, 128)
        bc = proj[:, DIP:]                                         # (L, 64)
        dtu = dt * x_act                                            # (L, 128)

        # ---- precompute per-step scan tensors into VMEM scratch (streamed) ----
        half = L // 2
        for c in range(2):                                          # bound vreg pressure
            tsl = slice(c * half, (c + 1) * half)
            dt_c = dt[tsl]                                          # (L/2, 128)
            da_scr[tsl] = jnp.exp(dt_c[:, None, :] * a_neg[None, :, :])
        for b in range(B):
            lsl = slice(b * D_INNER, (b + 1) * D_INNER)
            b_b = bc[:, b * 2 * D_STATE:b * 2 * D_STATE + D_STATE]          # (L, DS)
            c_b = bc[:, b * 2 * D_STATE + D_STATE:(b + 1) * 2 * D_STATE]    # (L, DS)
            # TODO(synk): produce B/C in (DS, L) layout from the MXU to avoid this
            #             lane->sublane broadcast relayout (review item #6).
            dbu_scr[:, :, lsl] = b_b[:, :, None] * dtu[:, None, lsl]
            cbc_scr[:, :, lsl] = jnp.broadcast_to(
                c_b[:, :, None], (L, D_STATE, D_INNER))

        # ---- selective scan: only the fma recurrence + fused C-contraction ----
        h = jnp.zeros((D_STATE, DIP), F32)
        for t in range(L):
            h = da_scr[t] * h + dbu_scr[t]                              # (DS, 128)
            y_scr[t:t + 1, :] = jnp.sum(cbc_scr[t] * h, axis=0, keepdims=True)

        # ---- skip term + gating + out_proj (stays lane-packed) ----
        y = y_scr[...] + d_par * x_act
        y = y * _silu(z_pk)
        hidden = jnp.dot(y, w_out, preferred_element_type=F32)      # (L, BD)
        residual = res

    # ---- final fused add + LayerNorm (replaces Triton layer_norm_fn) ----
    o_ref[...] = _seg_layernorm(hidden + residual, seg_m, nfw_ref[...], nfb_ref[...])


# ===================== host-side parameter packing =====================

def _pack_params(layer_params, norm_f_w, norm_f_b):
    ln_w, ln_b, w_in_l, conv_w_l, conv_b_l = [], [], [], [], []
    w_x_l, dt_b_l, a_neg_l, d_l, w_out_l = [], [], [], [], []

    for p in layer_params:
        # in_proj: block-diagonal, columns permuted to [x_b0|x_b1|z_b0|z_b1]
        w_in = jnp.zeros((BD, 2 * DIP), F32)
        for b in range(B):
            r = slice(b * D_MODEL, (b + 1) * D_MODEL)
            w_in = w_in.at[r, b * D_INNER:(b + 1) * D_INNER].set(
                p['in_proj_w'][:, :D_INNER])
            w_in = w_in.at[r, DIP + b * D_INNER:DIP + (b + 1) * D_INNER].set(
                p['in_proj_w'][:, D_INNER:])

        # x_proj with dt_proj folded: (x@Wx)[:, :R]@Wdt == x@(Wx[:, :R]@Wdt)
        w_dt = p['x_proj_w'][:, :DT_RANK] @ p['dt_proj_w']             # (DI, DI)
        w_b = p['x_proj_w'][:, DT_RANK:DT_RANK + D_STATE]              # (DI, DS)
        w_c = p['x_proj_w'][:, DT_RANK + D_STATE:]                     # (DI, DS)
        w_x = jnp.zeros((DIP, DIP + BC_W), F32)
        for b in range(B):
            r = slice(b * D_INNER, (b + 1) * D_INNER)
            w_x = w_x.at[r, b * D_INNER:(b + 1) * D_INNER].set(w_dt)
            base = DIP + b * 2 * D_STATE
            w_x = w_x.at[r, base:base + D_STATE].set(w_b)
            w_x = w_x.at[r, base + D_STATE:base + 2 * D_STATE].set(w_c)

        # out_proj: block-diagonal back to lane-packed (L, B*D)
        w_out = jnp.zeros((DIP, BD), F32)
        for b in range(B):
            w_out = w_out.at[b * D_INNER:(b + 1) * D_INNER,
                             b * D_MODEL:(b + 1) * D_MODEL].set(p['out_proj_w'])

        ln_w.append(jnp.tile(p['ln_w'], (1, B)))
        ln_b.append(jnp.tile(p['ln_b'], (1, B)))
        w_in_l.append(w_in)
        conv_w_l.append(jnp.tile(p['conv_w'], (1, B)))
        conv_b_l.append(jnp.tile(p['conv_b'], (1, B)))
        w_x_l.append(w_x)
        dt_b_l.append(jnp.tile(p['dt_proj_b'], (1, B)))
        a_neg_l.append(jnp.tile(-jnp.exp(p['a_log_t']), (1, B)))      # precompute -exp(A_log)
        d_l.append(jnp.tile(p['d_param'], (1, B)))
        w_out_l.append(w_out)

    # segmented-LayerNorm block-mean matrix (per batch block over D_MODEL lanes)
    seg_m = jnp.kron(jnp.eye(B, dtype=F32),
                     jnp.ones((D_MODEL, D_MODEL), F32) / D_MODEL)

    # stacked causal time-shift matrices (zero rows encode the causal padding)
    sh = np.zeros(((D_CONV - 1) * L, L), np.float32)
    for s in range(1, D_CONV):
        for t in range(s, L):
            sh[(s - 1) * L + t, t - s] = 1.0
    shift_stack = jnp.asarray(sh)

    stk = jnp.stack
    return dict(seg_m=seg_m, shift=shift_stack,
                ln_w=stk(ln_w), ln_b=stk(ln_b), w_in=stk(w_in_l),
                conv_w=stk(conv_w_l), conv_b=stk(conv_b_l), w_x=stk(w_x_l),
                dt_b=stk(dt_b_l), a_neg=stk(a_neg_l), d=stk(d_l),
                w_out=stk(w_out_l),
                nfw=jnp.tile(norm_f_w, (1, B)), nfb=jnp.tile(norm_f_b, (1, B)))


# ===================== wrapper =====================

def mamba_blocks_forward(x, layer_params, norm_f_w, norm_f_b):
    Bb, Ll, Dd = x.shape
    assert (Bb, Ll, Dd) == (B, L, D_MODEL)
    pk = _pack_params(layer_params, norm_f_w, norm_f_b)

    # lane-pack the batch host-side: (B, L, D) -> (L, B*D)
    x_pk = jnp.transpose(x, (1, 0, 2)).reshape(L, BD)

    vmem = pl.BlockSpec(memory_space=pltpu.MemorySpace.VMEM)
    out_pk = pl.pallas_call(
        _fused_mamba_kernel,
        out_shape=jax.ShapeDtypeStruct((L, BD), F32),
        in_specs=[vmem] * 15,
        out_specs=vmem,
        scratch_shapes=[
            pltpu.VMEM((L, D_STATE, DIP), F32),   # dA
            pltpu.VMEM((L, D_STATE, DIP), F32),   # dB*u
            pltpu.VMEM((L, D_STATE, DIP), F32),   # broadcast C
            pltpu.VMEM((L, DIP), F32),            # y
        ],
    )(x_pk, pk['seg_m'], pk['shift'], pk['ln_w'], pk['ln_b'], pk['w_in'],
      pk['conv_w'], pk['conv_b'], pk['w_x'], pk['dt_b'], pk['a_neg'], pk['d'],
      pk['w_out'], pk['nfw'], pk['nfb'])

    return jnp.transpose(out_pk.reshape(L, B, D_MODEL), (1, 0, 2))


# ===================== deterministic parameter init =====================

def init_params(key):
    layers = []
    for _ in range(N_MAMBA):
        key, k1, k2, k3, k4, k5 = jax.random.split(key, 6)
        layers.append(dict(
            ln_w=jnp.ones((1, D_MODEL), F32),
            ln_b=jnp.zeros((1, D_MODEL), F32),
            in_proj_w=(jax.random.normal(k1, (D_MODEL, 2 * D_INNER), F32) * 0.05),
            conv_w=(jax.random.normal(k2, (D_CONV, D_INNER), F32) * 0.2),
            conv_b=jnp.zeros((1, D_INNER), F32),
            x_proj_w=(jax.random.normal(k3, (D_INNER, DT_RANK + 2 * D_STATE), F32) * 0.05),
            dt_proj_w=(jax.random.normal(k4, (DT_RANK, D_INNER), F32) * (DT_RANK ** -0.5)),
            dt_proj_b=jnp.full((1, D_INNER), float(np.log(np.expm1(0.01))), F32),
            # Mamba S4D-real init: A = arange(1, d_state+1) broadcast over d_inner
            a_log_t=(jnp.log(jnp.arange(1, D_STATE + 1, dtype=F32))[:, None]
                     * jnp.ones((1, D_INNER), F32)),
            d_param=jnp.ones((1, D_INNER), F32),
            out_proj_w=(jax.random.normal(k5, (D_INNER, D_MODEL), F32)
                        * (0.05 / np.sqrt(N_MAMBA))),
        ))
    norm_f_w = jnp.ones((1, D_MODEL), F32)
    norm_f_b = jnp.zeros((1, D_MODEL), F32)
    return layers, norm_f_w, norm_f_b


# ===================== pure-JAX reference (for checking) =====================

def _layernorm_ref(x, w, b):
    mu = jnp.mean(x, axis=-1, keepdims=True)
    xc = x - mu
    var = jnp.mean(xc * xc, axis=-1, keepdims=True)
    return xc * jax.lax.rsqrt(var + EPS) * w + b


def _softplus_ref(x):
    return jnp.maximum(x, 0.0) + jnp.log(1.0 + jnp.exp(-jnp.abs(x)))


def _mamba_ref(u, p):
    xz = jnp.einsum('bld,de->ble', u, p['in_proj_w'])
    x_in, z = xz[..., :D_INNER], xz[..., D_INNER:]
    x_pad = jnp.pad(x_in, ((0, 0), (D_CONV - 1, 0), (0, 0)))
    conv = p['conv_b'][None, :, :]
    for k in range(D_CONV):
        conv = conv + x_pad[:, k:k + L, :] * p['conv_w'][k][None, None, :]
    x_act = conv * (1.0 / (1.0 + jnp.exp(-conv)))
    x_dbl = jnp.einsum('bli,ik->blk', x_act, p['x_proj_w'])
    dt_lr = x_dbl[..., :DT_RANK]
    Bm = x_dbl[..., DT_RANK:DT_RANK + D_STATE]
    Cm = x_dbl[..., DT_RANK + D_STATE:]
    dt = jnp.einsum('blr,ri->bli', dt_lr, p['dt_proj_w']) + p['dt_proj_b'][None]
    dt = _softplus_ref(dt)
    A_t = -jnp.exp(p['a_log_t'])                        # (d_state, d_inner)
    h = jnp.zeros((u.shape[0], D_STATE, D_INNER), F32)
    ys = []
    for t in range(L):
        dA = jnp.exp(dt[:, t, None, :] * A_t[None])
        dBu = Bm[:, t, :, None] * (dt[:, t, None, :] * x_act[:, t, None, :])
        h = dA * h + dBu
        ys.append(jnp.sum(h * Cm[:, t, :, None], axis=1))
    y = jnp.stack(ys, axis=1) + p['d_param'][None] * x_act
    y = y * (z * (1.0 / (1.0 + jnp.exp(-z))))
    return jnp.einsum('bli,id->bld', y, p['out_proj_w'])


def ref_forward(x, layers, norm_f_w, norm_f_b):
    hidden = x
    residual = jnp.zeros_like(x)
    for p in layers:
        residual = hidden + residual
        u = _layernorm_ref(residual, p['ln_w'][0], p['ln_b'][0])
        hidden = _mamba_ref(u, p)
    return _layernorm_ref(hidden + residual, norm_f_w[0], norm_f_b[0])


# ===================== main =====================

if __name__ == "__main__":
    key = jax.random.PRNGKey(0)
    kx, kp = jax.random.split(key)
    x = jax.random.normal(kx, (B, L, D_MODEL), F32)
    layers, nfw, nfb = init_params(kp)

    fwd = jax.jit(mamba_blocks_forward)
    out = fwd(x, layers, nfw, nfb)
    out = jax.block_until_ready(out)
    assert out.shape == (B, L, D_MODEL)

    ref = ref_forward(x, layers, nfw, nfb)
    np.testing.assert_allclose(np.asarray(out), np.asarray(ref),
                               atol=2e-2, rtol=2e-2)
    print("KERNEL_OK")
</pallas_src>

<mosaic_0001>
module attributes {stable_mosaic.version = 11 : i64} {
  func.func @_fused_mamba_kernel(%arg0: memref<16x64xf32, #tpu.memory_space<vmem>>, %arg1: memref<64x64xf32, #tpu.memory_space<vmem>>, %arg2: memref<48x16xf32, #tpu.memory_space<vmem>>, %arg3: memref<2x1x64xf32, #tpu.memory_space<vmem>>, %arg4: memref<2x1x64xf32, #tpu.memory_space<vmem>>, %arg5: memref<2x64x256xf32, #tpu.memory_space<vmem>>, %arg6: memref<2x4x128xf32, #tpu.memory_space<vmem>>, %arg7: memref<2x1x128xf32, #tpu.memory_space<vmem>>, %arg8: memref<2x128x192xf32, #tpu.memory_space<vmem>>, %arg9: memref<2x1x128xf32, #tpu.memory_space<vmem>>, %arg10: memref<2x16x128xf32, #tpu.memory_space<vmem>>, %arg11: memref<2x1x128xf32, #tpu.memory_space<vmem>>, %arg12: memref<2x128x64xf32, #tpu.memory_space<vmem>>, %arg13: memref<1x64xf32, #tpu.memory_space<vmem>>, %arg14: memref<1x64xf32, #tpu.memory_space<vmem>>, %arg15: memref<16x64xf32, #tpu.memory_space<vmem>>, %arg16: memref<16x16x128xf32, #tpu.memory_space<vmem>>, %arg17: memref<16x16x128xf32, #tpu.memory_space<vmem>>, %arg18: memref<16x16x128xf32, #tpu.memory_space<vmem>>, %arg19: memref<16x128xf32, #tpu.memory_space<vmem>>) attributes {dimension_semantics = [], scalar_prefetch = 0 : i64, scratch_operands = 4 : i64, tpu.core_type = #tpu.core_type<tc>} {
    %c0 = arith.constant 0 : index
    %c0_0 = arith.constant 0 : index
    %0 = vector.load %arg1[%c0, %c0_0] : memref<64x64xf32, #tpu.memory_space<vmem>>, vector<64x64xf32>
    %c0_1 = arith.constant 0 : index
    %c0_2 = arith.constant 0 : index
    %1 = vector.load %arg2[%c0_1, %c0_2] : memref<48x16xf32, #tpu.memory_space<vmem>>, vector<48x16xf32>
    %c0_3 = arith.constant 0 : index
    %c0_4 = arith.constant 0 : index
    %2 = vector.load %arg0[%c0_3, %c0_4] : memref<16x64xf32, #tpu.memory_space<vmem>>, vector<16x64xf32>
    %c0_5 = arith.constant 0 : index
    %c0_6 = arith.constant 0 : index
    %c0_7 = arith.constant 0 : index
    %3 = vector.load %arg3[%c0_5, %c0_6, %c0_7] : memref<2x1x64xf32, #tpu.memory_space<vmem>>, vector<1x1x64xf32>
    %4 = vector.shape_cast %3 : vector<1x1x64xf32> to vector<1x64xf32>
    %c0_8 = arith.constant 0 : index
    %c0_9 = arith.constant 0 : index
    %c0_10 = arith.constant 0 : index
    %5 = vector.load %arg4[%c0_8, %c0_9, %c0_10] : memref<2x1x64xf32, #tpu.memory_space<vmem>>, vector<1x1x64xf32>
    %6 = vector.shape_cast %5 : vector<1x1x64xf32> to vector<1x64xf32>
    %c0_11 = arith.constant 0 : index
    %c0_12 = arith.constant 0 : index
    %c0_13 = arith.constant 0 : index
    %7 = vector.load %arg5[%c0_11, %c0_12, %c0_13] : memref<2x64x256xf32, #tpu.memory_space<vmem>>, vector<1x64x256xf32>
    %8 = vector.shape_cast %7 : vector<1x64x256xf32> to vector<64x256xf32>
    %c0_14 = arith.constant 0 : index
    %c0_15 = arith.constant 0 : index
    %c0_16 = arith.constant 0 : index
    %9 = vector.load %arg6[%c0_14, %c0_15, %c0_16] : memref<2x4x128xf32, #tpu.memory_space<vmem>>, vector<1x4x128xf32>
    %10 = vector.shape_cast %9 : vector<1x4x128xf32> to vector<4x128xf32>
    %c0_17 = arith.constant 0 : index
    %c0_18 = arith.constant 0 : index
    %c0_19 = arith.constant 0 : index
    %11 = vector.load %arg7[%c0_17, %c0_18, %c0_19] : memref<2x1x128xf32, #tpu.memory_space<vmem>>, vector<1x1x128xf32>
    %12 = vector.shape_cast %11 : vector<1x1x128xf32> to vector<1x128xf32>
    %c0_20 = arith.constant 0 : index
    %c0_21 = arith.constant 0 : index
    %c0_22 = arith.constant 0 : index
    %13 = vector.load %arg8[%c0_20, %c0_21, %c0_22] : memref<2x128x192xf32, #tpu.memory_space<vmem>>, vector<1x128x192xf32>
    %14 = vector.shape_cast %13 : vector<1x128x192xf32> to vector<128x192xf32>
    %c0_23 = arith.constant 0 : index
    %c0_24 = arith.constant 0 : index
    %c0_25 = arith.constant 0 : index
    %15 = vector.load %arg9[%c0_23, %c0_24, %c0_25] : memref<2x1x128xf32, #tpu.memory_space<vmem>>, vector<1x1x128xf32>
    %16 = vector.shape_cast %15 : vector<1x1x128xf32> to vector<1x128xf32>
    %c0_26 = arith.constant 0 : index
    %c0_27 = arith.constant 0 : index
    %c0_28 = arith.constant 0 : index
    %17 = vector.load %arg10[%c0_26, %c0_27, %c0_28] : memref<2x16x128xf32, #tpu.memory_space<vmem>>, vector<1x16x128xf32>
    %18 = vector.shape_cast %17 : vector<1x16x128xf32> to vector<16x128xf32>
    %c0_29 = arith.constant 0 : index
    %c0_30 = arith.constant 0 : index
    %c0_31 = arith.constant 0 : index
    %19 = vector.load %arg11[%c0_29, %c0_30, %c0_31] : memref<2x1x128xf32, #tpu.memory_space<vmem>>, vector<1x1x128xf32>
    %20 = vector.shape_cast %19 : vector<1x1x128xf32> to vector<1x128xf32>
    %c0_32 = arith.constant 0 : index
    %c0_33 = arith.constant 0 : index
    %c0_34 = arith.constant 0 : index
    %21 = vector.load %arg12[%c0_32, %c0_33, %c0_34] : memref<2x128x64xf32, #tpu.memory_space<vmem>>, vector<1x128x64xf32>
    %22 = vector.shape_cast %21 : vector<1x128x64xf32> to vector<128x64xf32>
    %cst = arith.constant dense<0.000000e+00> : vector<16x64xf32>
    %23 = tpu.matmul %2, %0, %cst {dimension_numbers = #tpu.dot_dimension_numbers<[1], [0], [0], [1], [0, 0, 1, 1], [], []>} : vector<16x64xf32>, vector<64x64xf32>, vector<16x64xf32> -> vector<16x64xf32>
    %24 = arith.subf %2, %23 : vector<16x64xf32>
    %25 = arith.mulf %24, %24 : vector<16x64xf32>
    %cst_35 = arith.constant dense<0.000000e+00> : vector<16x64xf32>
    %26 = tpu.matmul %25, %0, %cst_35 {dimension_numbers = #tpu.dot_dimension_numbers<[1], [0], [0], [1], [0, 0, 1, 1], [], []>} : vector<16x64xf32>, vector<64x64xf32>, vector<16x64xf32> -> vector<16x64xf32>
    %cst_36 = arith.constant 9.99999974E-6 : f32
    %27 = vector.broadcast %cst_36 : f32 to vector<16x64xf32>
    %28 = arith.addf %26, %27 : vector<16x64xf32>
    %29 = math.rsqrt %28 : vector<16x64xf32>
    %30 = arith.mulf %24, %29 : vector<16x64xf32>
    %31 = vector.broadcast %4 : vector<1x64xf32> to vector<16x64xf32>
    %32 = arith.mulf %30, %31 : vector<16x64xf32>
    %33 = vector.broadcast %6 : vector<1x64xf32> to vector<16x64xf32>
    %34 = arith.addf %32, %33 : vector<16x64xf32>
    %cst_37 = arith.constant dense<0.000000e+00> : vector<16x256xf32>
    %35 = tpu.matmul %34, %8, %cst_37 {dimension_numbers = #tpu.dot_dimension_numbers<[1], [0], [0], [1], [0, 0, 1, 1], [], []>} : vector<16x64xf32>, vector<64x256xf32>, vector<16x256xf32> -> vector<16x256xf32>
    %36 = vector.extract_strided_slice %35 {offsets = [0, 0], sizes = [16, 128], strides = [1, 1]} : vector<16x256xf32> to vector<16x128xf32>
    %37 = vector.extract_strided_slice %35 {offsets = [0, 128], sizes = [16, 128], strides = [1, 1]} : vector<16x256xf32> to vector<16x128xf32>
    %cst_38 = arith.constant dense<0.000000e+00> : vector<48x128xf32>
    %38 = tpu.matmul %1, %36, %cst_38 {dimension_numbers = #tpu.dot_dimension_numbers<[1], [0], [0], [1], [0, 0, 1, 1], [], []>} : vector<48x16xf32>, vector<16x128xf32>, vector<48x128xf32> -> vector<48x128xf32>
    %39 = vector.extract_strided_slice %10 {offsets = [3, 0], sizes = [1, 128], strides = [1, 1]} : vector<4x128xf32> to vector<1x128xf32>
    %40 = vector.broadcast %39 : vector<1x128xf32> to vector<16x128xf32>
    %41 = arith.mulf %36, %40 : vector<16x128xf32>
    %42 = vector.broadcast %12 : vector<1x128xf32> to vector<16x128xf32>
    %43 = arith.addf %42, %41 : vector<16x128xf32>
    %44 = vector.extract_strided_slice %38 {offsets = [32, 0], sizes = [16, 128], strides = [1, 1]} : vector<48x128xf32> to vector<16x128xf32>
    %45 = vector.extract_strided_slice %10 {offsets = [0, 0], sizes = [1, 128], strides = [1, 1]} : vector<4x128xf32> to vector<1x128xf32>
    %46 = vector.broadcast %45 : vector<1x128xf32> to vector<16x128xf32>
    %47 = arith.mulf %44, %46 : vector<16x128xf32>
    %48 = arith.addf %43, %47 : vector<16x128xf32>
    %49 = vector.extract_strided_slice %38 {offsets = [16, 0], sizes = [16, 128], strides = [1, 1]} : vector<48x128xf32> to vector<16x128xf32>
    %50 = vector.extract_strided_slice %10 {offsets = [1, 0], sizes = [1, 128], strides = [1, 1]} : vector<4x128xf32> to vector<1x128xf32>
    %51 = vector.broadcast %50 : vector<1x128xf32> to vector<16x128xf32>
    %52 = arith.mulf %49, %51 : vector<16x128xf32>
    %53 = arith.addf %48, %52 : vector<16x128xf32>
    %54 = vector.extract_strided_slice %38 {offsets = [0, 0], sizes = [16, 128], strides = [1, 1]} : vector<48x128xf32> to vector<16x128xf32>
    %55 = vector.extract_strided_slice %10 {offsets = [2, 0], sizes = [1, 128], strides = [1, 1]} : vector<4x128xf32> to vector<1x128xf32>
    %56 = vector.broadcast %55 : vector<1x128xf32> to vector<16x128xf32>
    %57 = arith.mulf %54, %56 : vector<16x128xf32>
    %58 = arith.addf %53, %57 : vector<16x128xf32>
    %59 = math.absf %58 : vector<16x128xf32>
    %cst_39 = arith.constant 0.000000e+00 : f32
    %60 = vector.broadcast %cst_39 : f32 to vector<16x128xf32>
    %61 = arith.subf %60, %59 : vector<16x128xf32>
    %62 = math.exp %61 : vector<16x128xf32>
    %cst_40 = arith.constant 0.000000e+00 : f32
    %63 = vector.broadcast %cst_40 : f32 to vector<16x128xf32>
    %64 = arith.cmpf oge, %58, %63 : vector<16x128xf32>
    %cst_41 = arith.constant 1.000000e+00 : f32
    %65 = vector.broadcast %cst_41 : f32 to vector<16x128xf32>
    %66 = arith.select %64, %65, %62 : vector<16x128xi1>, vector<16x128xf32>
    %cst_42 = arith.constant 1.000000e+00 : f32
    %67 = vector.broadcast %cst_42 : f32 to vector<16x128xf32>
    %68 = arith.addf %67, %62 : vector<16x128xf32>
    %69 = arith.divf %66, %68 : vector<16x128xf32>
    %70 = arith.mulf %58, %69 : vector<16x128xf32>
    %cst_43 = arith.constant dense<0.000000e+00> : vector<16x192xf32>
    %71 = tpu.matmul %70, %14, %cst_43 {dimension_numbers = #tpu.dot_dimension_numbers<[1], [0], [0], [1], [0, 0, 1, 1], [], []>} : vector<16x128xf32>, vector<128x192xf32>, vector<16x192xf32> -> vector<16x192xf32>
    %72 = vector.extract_strided_slice %71 {offsets = [0, 0], sizes = [16, 128], strides = [1, 1]} : vector<16x192xf32> to vector<16x128xf32>
    %73 = vector.broadcast %16 : vector<1x128xf32> to vector<16x128xf32>
    %74 = arith.addf %72, %73 : vector<16x128xf32>
    %cst_44 = arith.constant 0.000000e+00 : f32
    %75 = vector.broadcast %cst_44 : f32 to vector<16x128xf32>
    %76 = arith.maximumf %74, %75 : vector<16x128xf32>
    %77 = math.absf %74 : vector<16x128xf32>
    %cst_45 = arith.constant 0.000000e+00 : f32
    %78 = vector.broadcast %cst_45 : f32 to vector<16x128xf32>
    %79 = arith.subf %78, %77 : vector<16x128xf32>
    %80 = math.exp %79 : vector<16x128xf32>
    %cst_46 = arith.constant 1.000000e+00 : f32
    %81 = vector.broadcast %cst_46 : f32 to vector<16x128xf32>
    %82 = arith.addf %81, %80 : vector<16x128xf32>
    %83 = math.log %82 : vector<16x128xf32>
    %84 = arith.addf %76, %83 : vector<16x128xf32>
    %85 = vector.extract_strided_slice %71 {offsets = [0, 128], sizes = [16, 64], strides = [1, 1]} : vector<16x192xf32> to vector<16x64xf32>
    %86 = arith.mulf %84, %70 : vector<16x128xf32>
    %87 = vector.extract_strided_slice %84 {offsets = [0, 0], sizes = [8, 128], strides = [1, 1]} : vector<16x128xf32> to vector<8x128xf32>
    %88 = vector.shape_cast %87 : vector<8x128xf32> to vector<8x1x128xf32>
    %89 = vector.shape_cast %18 : vector<16x128xf32> to vector<1x16x128xf32>
    %90 = vector.broadcast %88 : vector<8x1x128xf32> to vector<8x16x128xf32>
    %91 = vector.broadcast %89 : vector<1x16x128xf32> to vector<8x16x128xf32>
    %92 = arith.mulf %90, %91 : vector<8x16x128xf32>
    %93 = math.exp %92 : vector<8x16x128xf32>
    %c0_47 = arith.constant 0 : index
    %c0_48 = arith.constant 0 : index
    %c0_49 = arith.constant 0 : index
    %94 = vector.load %arg16[%c0_47, %c0_48, %c0_49] : memref<16x16x128xf32, #tpu.memory_space<vmem>>, vector<8x16x128xf32>
    tpu.vector_store %arg16[%c0_47, %c0_48, %c0_49], %93 {strides = array<i32>} : memref<16x16x128xf32, #tpu.memory_space<vmem>>, vector<8x16x128xf32>,
    %95 = vector.extract_strided_slice %84 {offsets = [8, 0], sizes = [8, 128], strides = [1, 1]} : vector<16x128xf32> to vector<8x128xf32>
    %96 = vector.shape_cast %95 : vector<8x128xf32> to vector<8x1x128xf32>
    %97 = vector.shape_cast %18 : vector<16x128xf32> to vector<1x16x128xf32>
    %98 = vector.broadcast %96 : vector<8x1x128xf32> to vector<8x16x128xf32>
    %99 = vector.broadcast %97 : vector<1x16x128xf32> to vector<8x16x128xf32>
    %100 = arith.mulf %98, %99 : vector<8x16x128xf32>
    %101 = math.exp %100 : vector<8x16x128xf32>
    %c8 = arith.constant 8 : index
    %c0_50 = arith.constant 0 : index
    %c0_51 = arith.constant 0 : index
    %102 = vector.load %arg16[%c8, %c0_50, %c0_51] : memref<16x16x128xf32, #tpu.memory_space<vmem>>, vector<8x16x128xf32>
    tpu.vector_store %arg16[%c8, %c0_50, %c0_51], %101 {strides = array<i32>} : memref<16x16x128xf32, #tpu.memory_space<vmem>>, vector<8x16x128xf32>,
    %103 = vector.extract_strided_slice %85 {offsets = [0, 0], sizes = [16, 16], strides = [1, 1]} : vector<16x64xf32> to vector<16x16xf32>
    %104 = vector.extract_strided_slice %85 {offsets = [0, 16], sizes = [16, 16], strides = [1, 1]} : vector<16x64xf32> to vector<16x16xf32>
    %105 = vector.shape_cast %103 : vector<16x16xf32> to vector<16x16x1xf32>
    %106 = vector.extract_strided_slice %86 {offsets = [0, 0], sizes = [16, 64], strides = [1, 1]} : vector<16x128xf32> to vector<16x64xf32>
    %107 = vector.shape_cast %106 : vector<16x64xf32> to vector<16x1x64xf32>
    %108 = vector.broadcast %105 : vector<16x16x1xf32> to vector<16x16x64xf32>
    %109 = vector.broadcast %107 : vector<16x1x64xf32> to vector<16x16x64xf32>
    %110 = arith.mulf %108, %109 : vector<16x16x64xf32>
    %c0_52 = arith.constant 0 : index
    %c0_53 = arith.constant 0 : index
    %c0_54 = arith.constant 0 : index
    %111 = vector.load %arg17[%c0_52, %c0_53, %c0_54] : memref<16x16x128xf32, #tpu.memory_space<vmem>>, vector<16x16x64xf32>
    tpu.vector_store %arg17[%c0_52, %c0_53, %c0_54], %110 {strides = array<i32>} : memref<16x16x128xf32, #tpu.memory_space<vmem>>, vector<16x16x64xf32>,
    %112 = vector.shape_cast %104 : vector<16x16xf32> to vector<16x16x1xf32>
    %113 = vector.shape_cast %112 : vector<16x16x1xf32> to vector<16x16x1xf32>
    %114 = vector.broadcast %113 : vector<16x16x1xf32> to vector<16x16x64xf32>
    %c0_55 = arith.constant 0 : index
    %c0_56 = arith.constant 0 : index
    %c0_57 = arith.constant 0 : index
    %115 = vector.load %arg18[%c0_55, %c0_56, %c0_57] : memref<16x16x128xf32, #tpu.memory_space<vmem>>, vector<16x16x64xf32>
    tpu.vector_store %arg18[%c0_55, %c0_56, %c0_57], %114 {strides = array<i32>} : memref<16x16x128xf32, #tpu.memory_space<vmem>>, vector<16x16x64xf32>,
    %116 = vector.extract_strided_slice %85 {offsets = [0, 32], sizes = [16, 16], strides = [1, 1]} : vector<16x64xf32> to vector<16x16xf32>
    %117 = vector.extract_strided_slice %85 {offsets = [0, 48], sizes = [16, 16], strides = [1, 1]} : vector<16x64xf32> to vector<16x16xf32>
    %118 = vector.shape_cast %116 : vector<16x16xf32> to vector<16x16x1xf32>
    %119 = vector.extract_strided_slice %86 {offsets = [0, 64], sizes = [16, 64], strides = [1, 1]} : vector<16x128xf32> to vector<16x64xf32>
    %120 = vector.shape_cast %119 : vector<16x64xf32> to vector<16x1x64xf32>
    %121 = vector.broadcast %118 : vector<16x16x1xf32> to vector<16x16x64xf32>
    %122 = vector.broadcast %120 : vector<16x1x64xf32> to vector<16x16x64xf32>
    %123 = arith.mulf %121, %122 : vector<16x16x64xf32>
    %c0_58 = arith.constant 0 : index
    %c0_59 = arith.constant 0 : index
    %c64 = arith.constant 64 : index
    %124 = vector.load %arg17[%c0_58, %c0_59, %c64] : memref<16x16x128xf32, #tpu.memory_space<vmem>>, vector<16x16x64xf32>
    tpu.vector_store %arg17[%c0_58, %c0_59, %c64], %123 {strides = array<i32>} : memref<16x16x128xf32, #tpu.memory_space<vmem>>, vector<16x16x64xf32>,
    %125 = vector.shape_cast %117 : vector<16x16xf32> to vector<16x16x1xf32>
    %126 = vector.shape_cast %125 : vector<16x16x1xf32> to vector<16x16x1xf32>
    %127 = vector.broadcast %126 : vector<16x16x1xf32> to vector<16x16x64xf32>
    %c0_60 = arith.constant 0 : index
    %c0_61 = arith.constant 0 : index
    %c64_62 = arith.constant 64 : index
    %128 = vector.load %arg18[%c0_60, %c0_61, %c64_62] : memref<16x16x128xf32, #tpu.memory_space<vmem>>, vector<16x16x64xf32>
    tpu.vector_store %arg18[%c0_60, %c0_61, %c64_62], %127 {strides = array<i32>} : memref<16x16x128xf32, #tpu.memory_space<vmem>>, vector<16x16x64xf32>,
    %cst_63 = arith.constant 0.000000e+00 : f32
    %129 = vector.broadcast %cst_63 : f32 to vector<16x128xf32>
    %c0_64 = arith.constant 0 : index
    %c0_65 = arith.constant 0 : index
    %c0_66 = arith.constant 0 : index
    %130 = vector.load %arg16[%c0_64, %c0_65, %c0_66] : memref<16x16x128xf32, #tpu.memory_space<vmem>>, vector<1x16x128xf32>
    %131 = vector.shape_cast %130 : vector<1x16x128xf32> to vector<16x128xf32>
    %132 = arith.mulf %131, %129 : vector<16x128xf32>
    %c0_67 = arith.constant 0 : index
    %c0_68 = arith.constant 0 : index
    %c0_69 = arith.constant 0 : index
    %133 = vector.load %arg17[%c0_67, %c0_68, %c0_69] : memref<16x16x128xf32, #tpu.memory_space<vmem>>, vector<1x16x128xf32>
    %134 = vector.shape_cast %133 : vector<1x16x128xf32> to vector<16x128xf32>
    %135 = arith.addf %132, %134 : vector<16x128xf32>
    %c0_70 = arith.constant 0 : index
    %c0_71 = arith.constant 0 : index
    %c0_72 = arith.constant 0 : index
    %136 = vector.load %arg18[%c0_70, %c0_71, %c0_72] : memref<16x16x128xf32, #tpu.memory_space<vmem>>, vector<1x16x128xf32>
    %137 = vector.shape_cast %136 : vector<1x16x128xf32> to vector<16x128xf32>
    %138 = arith.mulf %137, %135 : vector<16x128xf32>
    %cst_73 = arith.constant dense<0.000000e+00> : vector<128xf32>
    %139 = vector.multi_reduction <add>, %138, %cst_73 [0] : vector<16x128xf32> to vector<128xf32>
    %140 = vector.shape_cast %139 : vector<128xf32> to vector<1x128xf32>
    %c0_74 = arith.constant 0 : index
    %c0_75 = arith.constant 0 : index
    %141 = vector.load %arg19[%c0_74, %c0_75] : memref<16x128xf32, #tpu.memory_space<vmem>>, vector<1x128xf32>
    tpu.vector_store %arg19[%c0_74, %c0_75], %140 {strides = array<i32>} : memref<16x128xf32, #tpu.memory_space<vmem>>, vector<1x128xf32>,
    %c1 = arith.constant 1 : index
    %c0_76 = arith.constant 0 : index
    %c0_77 = arith.constant 0 : index
    %142 = vector.load %arg16[%c1, %c0_76, %c0_77] : memref<16x16x128xf32, #tpu.memory_space<vmem>>, vector<1x16x128xf32>
    %143 = vector.shape_cast %142 : vector<1x16x128xf32> to vector<16x128xf32>
    %144 = arith.mulf %143, %135 : vector<16x128xf32>
    %c1_78 = arith.constant 1 : index
    %c0_79 = arith.constant 0 : index
    %c0_80 = arith.constant 0 : index
    %145 = vector.load %arg17[%c1_78, %c0_79, %c0_80] : memref<16x16x128xf32, #tpu.memory_space<vmem>>, vector<1x16x128xf32>
    %146 = vector.shape_cast %145 : vector<1x16x128xf32> to vector<16x128xf32>
    %147 = arith.addf %144, %146 : vector<16x128xf32>
    %c1_81 = arith.constant 1 : index
    %c0_82 = arith.constant 0 : index
    %c0_83 = arith.constant 0 : index
    %148 = vector.load %arg18[%c1_81, %c0_82, %c0_83] : memref<16x16x128xf32, #tpu.memory_space<vmem>>, vector<1x16x128xf32>
    %149 = vector.shape_cast %148 : vector<1x16x128xf32> to vector<16x128xf32>
    %150 = arith.mulf %149, %147 : vector<16x128xf32>
    %cst_84 = arith.constant dense<0.000000e+00> : vector<128xf32>
    %151 = vector.multi_reduction <add>, %150, %cst_84 [0] : vector<16x128xf32> to vector<128xf32>
    %152 = vector.shape_cast %151 : vector<128xf32> to vector<1x128xf32>
    %c1_85 = arith.constant 1 : index
    %c0_86 = arith.constant 0 : index
    %153 = vector.load %arg19[%c1_85, %c0_86] : memref<16x128xf32, #tpu.memory_space<vmem>>, vector<1x128xf32>
    tpu.vector_store %arg19[%c1_85, %c0_86], %152 {strides = array<i32>} : memref<16x128xf32, #tpu.memory_space<vmem>>, vector<1x128xf32>,
    %c2 = arith.constant 2 : index
    %c0_87 = arith.constant 0 : index
    %c0_88 = arith.constant 0 : index
    %154 = vector.load %arg16[%c2, %c0_87, %c0_88] : memref<16x16x128xf32, #tpu.memory_space<vmem>>, vector<1x16x128xf32>
    %155 = vector.shape_cast %154 : vector<1x16x128xf32> to vector<16x128xf32>
    %156 = arith.mulf %155, %147 : vector<16x128xf32>
    %c2_89 = arith.constant 2 : index
    %c0_90 = arith.constant 0 : index
    %c0_91 = arith.constant 0 : index
    %157 = vector.load %arg17[%c2_89, %c0_90, %c0_91] : memref<16x16x128xf32, #tpu.memory_space<vmem>>, vector<1x16x128xf32>
    %158 = vector.shape_cast %157 : vector<1x16x128xf32> to vector<16x128xf32>
    %159 = arith.addf %156, %158 : vector<16x128xf32>
    %c2_92 = arith.constant 2 : index
    %c0_93 = arith.constant 0 : index
    %c0_94 = arith.constant 0 : index
    %160 = vector.load %arg18[%c2_92, %c0_93, %c0_94] : memref<16x16x128xf32, #tpu.memory_space<vmem>>, vector<1x16x128xf32>
    %161 = vector.shape_cast %160 : vector<1x16x128xf32> to vector<16x128xf32>
    %162 = arith.mulf %161, %159 : vector<16x128xf32>
    %cst_95 = arith.constant dense<0.000000e+00> : vector<128xf32>
    %163 = vector.multi_reduction <add>, %162, %cst_95 [0] : vector<16x128xf32> to vector<128xf32>
    %164 = vector.shape_cast %163 : vector<128xf32> to vector<1x128xf32>
    %c2_96 = arith.constant 2 : index
    %c0_97 = arith.constant 0 : index
    %165 = vector.load %arg19[%c2_96, %c0_97] : memref<16x128xf32, #tpu.memory_space<vmem>>, vector<1x128xf32>
    tpu.vector_store %arg19[%c2_96, %c0_97], %164 {strides = array<i32>} : memref<16x128xf32, #tpu.memory_space<vmem>>, vector<1x128xf32>,
    %c3 = arith.constant 3 : index
    %c0_98 = arith.constant 0 : index
    %c0_99 = arith.constant 0 : index
    %166 = vector.load %arg16[%c3, %c0_98, %c0_99] : memref<16x16x128xf32, #tpu.memory_space<vmem>>, vector<1x16x128xf32>
    %167 = vector.shape_cast %166 : vector<1x16x128xf32> to vector<16x128xf32>
    %168 = arith.mulf %167, %159 : vector<16x128xf32>
    %c3_100 = arith.constant 3 : index
    %c0_101 = arith.constant 0 : index
    %c0_102 = arith.constant 0 : index
    %169 = vector.load %arg17[%c3_100, %c0_101, %c0_102] : memref<16x16x128xf32, #tpu.memory_space<vmem>>, vector<1x16x128xf32>
    %170 = vector.shape_cast %169 : vector<1x16x128xf32> to vector<16x128xf32>
    %171 = arith.addf %168, %170 : vector<16x128xf32>
    %c3_103 = arith.constant 3 : index
    %c0_104 = arith.constant 0 : index
    %c0_105 = arith.constant 0 : index
    %172 = vector.load %arg18[%c3_103, %c0_104, %c0_105] : memref<16x16x128xf32, #tpu.memory_space<vmem>>, vector<1x16x128xf32>
    %173 = vector.shape_cast %172 : vector<1x16x128xf32> to vector<16x128xf32>
    %174 = arith.mulf %173, %171 : vector<16x128xf32>
    %cst_106 = arith.constant dense<0.000000e+00> : vector<128xf32>
    %175 = vector.multi_reduction <add>, %174, %cst_106 [0] : vector<16x128xf32> to vector<128xf32>
    %176 = vector.shape_cast %175 : vector<128xf32> to vector<1x128xf32>
    %c3_107 = arith.constant 3 : index
    %c0_108 = arith.constant 0 : index
    %177 = vector.load %arg19[%c3_107, %c0_108] : memref<16x128xf32, #tpu.memory_space<vmem>>, vector<1x128xf32>
    tpu.vector_store %arg19[%c3_107, %c0_108], %176 {strides = array<i32>} : memref<16x128xf32, #tpu.memory_space<vmem>>, vector<1x128xf32>,
    %c4 = arith.constant 4 : index
    %c0_109 = arith.constant 0 : index
    %c0_110 = arith.constant 0 : index
    %178 = vector.load %arg16[%c4, %c0_109, %c0_110] : memref<16x16x128xf32, #tpu.memory_space<vmem>>, vector<1x16x128xf32>
    %179 = vector.shape_cast %178 : vector<1x16x128xf32> to vector<16x128xf32>
    %180 = arith.mulf %179, %171 : vector<16x128xf32>
    %c4_111 = arith.constant 4 : index
    %c0_112 = arith.constant 0 : index
    %c0_113 = arith.constant 0 : index
    %181 = vector.load %arg17[%c4_111, %c0_112, %c0_113] : memref<16x16x128xf32, #tpu.memory_space<vmem>>, vector<1x16x128xf32>
    %182 = vector.shape_cast %181 : vector<1x16x128xf32> to vector<16x128xf32>
    %183 = arith.addf %180, %182 : vector<16x128xf32>
    %c4_114 = arith.constant 4 : index
    %c0_115 = arith.constant 0 : index
    %c0_116 = arith.constant 0 : index
    %184 = vector.load %arg18[%c4_114, %c0_115, %c0_116] : memref<16x16x128xf32, #tpu.memory_space<vmem>>, vector<1x16x128xf32>
    %185 = vector.shape_cast %184 : vector<1x16x128xf32> to vector<16x128xf32>
    %186 = arith.mulf %185, %183 : vector<16x128xf32>
    %cst_117 = arith.constant dense<0.000000e+00> : vector<128xf32>
    %187 = vector.multi_reduction <add>, %186, %cst_117 [0] : vector<16x128xf32> to vector<128xf32>
    %188 = vector.shape_cast %187 : vector<128xf32> to vector<1x128xf32>
    %c4_118 = arith.constant 4 : index
    %c0_119 = arith.constant 0 : index
    %189 = vector.load %arg19[%c4_118, %c0_119] : memref<16x128xf32, #tpu.memory_space<vmem>>, vector<1x128xf32>
    tpu.vector_store %arg19[%c4_118, %c0_119], %188 {strides = array<i32>} : memref<16x128xf32, #tpu.memory_space<vmem>>, vector<1x128xf32>,
    %c5 = arith.constant 5 : index
    %c0_120 = arith.constant 0 : index
    %c0_121 = arith.constant 0 : index
    %190 = vector.load %arg16[%c5, %c0_120, %c0_121] : memref<16x16x128xf32, #tpu.memory_space<vmem>>, vector<1x16x128xf32>
    %191 = vector.shape_cast %190 : vector<1x16x128xf32> to vector<16x128xf32>
    %192 = arith.mulf %191, %183 : vector<16x128xf32>
    %c5_122 = arith.constant 5 : index
    %c0_123 = arith.constant 0 : index
    %c0_124 = arith.constant 0 : index
    %193 = vector.load %arg17[%c5_122, %c0_123, %c0_124] : memref<16x16x128xf32, #tpu.memory_space<vmem>>, vector<1x16x128xf32>
    %194 = vector.shape_cast %193 : vector<1x16x128xf32> to vector<16x128xf32>
    %195 = arith.addf %192, %194 : vector<16x128xf32>
    %c5_125 = arith.constant 5 : index
    %c0_126 = arith.constant 0 : index
    %c0_127 = arith.constant 0 : index
    %196 = vector.load %arg18[%c5_125, %c0_126, %c0_127] : memref<16x16x128xf32, #tpu.memory_space<vmem>>, vector<1x16x128xf32>
    %197 = vector.shape_cast %196 : vector<1x16x128xf32> to vector<16x128xf32>
    %198 = arith.mulf %197, %195 : vector<16x128xf32>
    %cst_128 = arith.constant dense<0.000000e+00> : vector<128xf32>
    %199 = vector.multi_reduction <add>, %198, %cst_128 [0] : vector<16x128xf32> to vector<128xf32>
    %200 = vector.shape_cast %199 : vector<128xf32> to vector<1x128xf32>
    %c5_129 = arith.constant 5 : index
    %c0_130 = arith.constant 0 : index
    %201 = vector.load %arg19[%c5_129, %c0_130] : memref<16x128xf32, #tpu.memory_space<vmem>>, vector<1x128xf32>
    tpu.vector_store %arg19[%c5_129, %c0_130], %200 {strides = array<i32>} : memref<16x128xf32, #tpu.memory_space<vmem>>, vector<1x128xf32>,
    %c6 = arith.constant 6 : index
    %c0_131 = arith.constant 0 : index
    %c0_132 = arith.constant 0 : index
    %202 = vector.load %arg16[%c6, %c0_131, %c0_132] : memref<16x16x128xf32, #tpu.memory_space<vmem>>, vector<1x16x128xf32>
    %203 = vector.shape_cast %202 : vector<1x16x128xf32> to vector<16x128xf32>
    %204 = arith.mulf %203, %195 : vector<16x128xf32>
    %c6_133 = arith.constant 6 : index
    %c0_134 = arith.constant 0 : index
    %c0_135 = arith.constant 0 : index
    %205 = vector.load %arg17[%c6_133, %c0_134, %c0_135] : memref<16x16x128xf32, #tpu.memory_space<vmem>>, vector<1x16x128xf32>
    %206 = vector.shape_cast %205 : vector<1x16x128xf32> to vector<16x128xf32>
    %207 = arith.addf %204, %206 : vector<16x128xf32>
    %c6_136 = arith.constant 6 : index
    %c0_137 = arith.constant 0 : index
    %c0_138 = arith.constant 0 : index
    %208 = vector.load %arg18[%c6_136, %c0_137, %c0_138] : memref<16x16x128xf32, #tpu.memory_space<vmem>>, vector<1x16x128xf32>
    %209 = vector.shape_cast %208 : vector<1x16x128xf32> to vector<16x128xf32>
    %210 = arith.mulf %209, %207 : vector<16x128xf32>
    %cst_139 = arith.constant dense<0.000000e+00> : vector<128xf32>
    %211 = vector.multi_reduction <add>, %210, %cst_139 [0] : vector<16x128xf32> to vector<128xf32>
    %212 = vector.shape_cast %211 : vector<128xf32> to vector<1x128xf32>
    %c6_140 = arith.constant 6 : index
    %c0_141 = arith.constant 0 : index
    %213 = vector.load %arg19[%c6_140, %c0_141] : memref<16x128xf32, #tpu.memory_space<vmem>>, vector<1x128xf32>
    tpu.vector_store %arg19[%c6_140, %c0_141], %212 {strides = array<i32>} : memref<16x128xf32, #tpu.memory_space<vmem>>, vector<1x128xf32>,
    %c7 = arith.constant 7 : index
    %c0_142 = arith.constant 0 : index
    %c0_143 = arith.constant 0 : index
    %214 = vector.load %arg16[%c7, %c0_142, %c0_143] : memref<16x16x128xf32, #tpu.memory_space<vmem>>, vector<1x16x128xf32>
    %215 = vector.shape_cast %214 : vector<1x16x128xf32> to vector<16x128xf32>
    %216 = arith.mulf %215, %207 : vector<16x128xf32>
    %c7_144 = arith.constant 7 : index
    %c0_145 = arith.constant 0 : index
    %c0_146 = arith.constant 0 : index
    %217 = vector.load %arg17[%c7_144, %c0_145, %c0_146] : memref<16x16x128xf32, #tpu.memory_space<vmem>>, vector<1x16x128xf32>
    %218 = vector.shape_cast %217 : vector<1x16x128xf32> to vector<16x128xf32>
    %219 = arith.addf %216, %218 : vector<16x128xf32>
    %c7_147 = arith.constant 7 : index
    %c0_148 = arith.constant 0 : index
    %c0_149 = arith.constant 0 : index
    %220 = vector.load %arg18[%c7_147, %c0_148, %c0_149] : memref<16x16x128xf32, #tpu.memory_space<vmem>>, vector<1x16x128xf32>
    %221 = vector.shape_cast %220 : vector<1x16x128xf32> to vector<16x128xf32>
    %222 = arith.mulf %221, %219 : vector<16x128xf32>
    %cst_150 = arith.constant dense<0.000000e+00> : vector<128xf32>
    %223 = vector.multi_reduction <add>, %222, %cst_150 [0] : vector<16x128xf32> to vector<128xf32>
    %224 = vector.shape_cast %223 : vector<128xf32> to vector<1x128xf32>
    %c7_151 = arith.constant 7 : index
    %c0_152 = arith.constant 0 : index
    %225 = vector.load %arg19[%c7_151, %c0_152] : memref<16x128xf32, #tpu.memory_space<vmem>>, vector<1x128xf32>
    tpu.vector_store %arg19[%c7_151, %c0_152], %224 {strides = array<i32>} : memref<16x128xf32, #tpu.memory_space<vmem>>, vector<1x128xf32>,
    %c8_153 = arith.constant 8 : index
    %c0_154 = arith.constant 0 : index
    %c0_155 = arith.constant 0 : index
    %226 = vector.load %arg16[%c8_153, %c0_154, %c0_155] : memref<16x16x128xf32, #tpu.memory_space<vmem>>, vector<1x16x128xf32>
    %227 = vector.shape_cast %226 : vector<1x16x128xf32> to vector<16x128xf32>
    %228 = arith.mulf %227, %219 : vector<16x128xf32>
    %c8_156 = arith.constant 8 : index
    %c0_157 = arith.constant 0 : index
    %c0_158 = arith.constant 0 : index
    %229 = vector.load %arg17[%c8_156, %c0_157, %c0_158] : memref<16x16x128xf32, #tpu.memory_space<vmem>>, vector<1x16x128xf32>
    %230 = vector.shape_cast %229 : vector<1x16x128xf32> to vector<16x128xf32>
    %231 = arith.addf %228, %230 : vector<16x128xf32>
    %c8_159 = arith.constant 8 : index
    %c0_160 = arith.constant 0 : index
    %c0_161 = arith.constant 0 : index
    %232 = vector.load %arg18[%c8_159, %c0_160, %c0_161] : memref<16x16x128xf32, #tpu.memory_space<vmem>>, vector<1x16x128xf32>
    %233 = vector.shape_cast %232 : vector<1x16x128xf32> to vector<16x128xf32>
    %234 = arith.mulf %233, %231 : vector<16x128xf32>
    %cst_162 = arith.constant dense<0.000000e+00> : vector<128xf32>
    %235 = vector.multi_reduction <add>, %234, %cst_162 [0] : vector<16x128xf32> to vector<128xf32>
    %236 = vector.shape_cast %235 : vector<128xf32> to vector<1x128xf32>
    %c8_163 = arith.constant 8 : index
    %c0_164 = arith.constant 0 : index
    %237 = vector.load %arg19[%c8_163, %c0_164] : memref<16x128xf32, #tpu.memory_space<vmem>>, vector<1x128xf32>
    tpu.vector_store %arg19[%c8_163, %c0_164], %236 {strides = array<i32>} : memref<16x128xf32, #tpu.memory_space<vmem>>, vector<1x128xf32>,
    %c9 = arith.constant 9 : index
    %c0_165 = arith.constant 0 : index
    %c0_166 = arith.constant 0 : index
    %238 = vector.load %arg16[%c9, %c0_165, %c0_166] : memref<16x16x128xf32, #tpu.memory_space<vmem>>, vector<1x16x128xf32>
    %239 = vector.shape_cast %238 : vector<1x16x128xf32> to vector<16x128xf32>
    %240 = arith.mulf %239, %231 : vector<16x128xf32>
    %c9_167 = arith.constant 9 : index
    %c0_168 = arith.constant 0 : index
    %c0_169 = arith.constant 0 : index
    %241 = vector.load %arg17[%c9_167, %c0_168, %c0_169] : memref<16x16x128xf32, #tpu.memory_space<vmem>>, vector<1x16x128xf32>
    %242 = vector.shape_cast %241 : vector<1x16x128xf32> to vector<16x128xf32>
    %243 = arith.addf %240, %242 : vector<16x128xf32>
    %c9_170 = arith.constant 9 : index
    %c0_171 = arith.constant 0 : index
    %c0_172 = arith.constant 0 : index
    %244 = vector.load %arg18[%c9_170, %c0_171, %c0_172] : memref<16x16x128xf32, #tpu.memory_space<vmem>>, vector<1x16x128xf32>
    %245 = vector.shape_cast %244 : vector<1x16x128xf32> to vector<16x128xf32>
    %246 = arith.mulf %245, %243 : vector<16x128xf32>
    %cst_173 = arith.constant dense<0.000000e+00> : vector<128xf32>
    %247 = vector.multi_reduction <add>, %246, %cst_173 [0] : vector<16x128xf32> to vector<128xf32>
    %248 = vector.shape_cast %247 : vector<128xf32> to vector<1x128xf32>
    %c9_174 = arith.constant 9 : index
    %c0_175 = arith.constant 0 : index
    %249 = vector.load %arg19[%c9_174, %c0_175] : memref<16x128xf32, #tpu.memory_space<vmem>>, vector<1x128xf32>
    tpu.vector_store %arg19[%c9_174, %c0_175], %248 {strides = array<i32>} : memref<16x128xf32, #tpu.memory_space<vmem>>, vector<1x128xf32>,
    %c10 = arith.constant 10 : index
    %c0_176 = arith.constant 0 : index
    %c0_177 = arith.constant 0 : index
    %250 = vector.load %arg16[%c10, %c0_176, %c0_177] : memref<16x16x128xf32, #tpu.memory_space<vmem>>, vector<1x16x128xf32>
    %251 = vector.shape_cast %250 : vector<1x16x128xf32> to vector<16x128xf32>
    %252 = arith.mulf %251, %243 : vector<16x128xf32>
    %c10_178 = arith.constant 10 : index
    %c0_179 = arith.constant 0 : index
    %c0_180 = arith.constant 0 : index
    %253 = vector.load %arg17[%c10_178, %c0_179, %c0_180] : memref<16x16x128xf32, #tpu.memory_space<vmem>>, vector<1x16x128xf32>
    %254 = vector.shape_cast %253 : vector<1x16x128xf32> to vector<16x128xf32>
    %255 = arith.addf %252, %254 : vector<16x128xf32>
    %c10_181 = arith.constant 10 : index
    %c0_182 = arith.constant 0 : index
    %c0_183 = arith.constant 0 : index
    %256 = vector.load %arg18[%c10_181, %c0_182, %c0_183] : memref<16x16x128xf32, #tpu.memory_space<vmem>>, vector<1x16x128xf32>
    %257 = vector.shape_cast %256 : vector<1x16x128xf32> to vector<16x128xf32>
    %258 = arith.mulf %257, %255 : vector<16x128xf32>
    %cst_184 = arith.constant dense<0.000000e+00> : vector<128xf32>
    %259 = vector.multi_reduction <add>, %258, %cst_184 [0] : vector<16x128xf32> to vector<128xf32>
    %260 = vector.shape_cast %259 : vector<128xf32> to vector<1x128xf32>
    %c10_185 = arith.constant 10 : index
    %c0_186 = arith.constant 0 : index
    %261 = vector.load %arg19[%c10_185, %c0_186] : memref<16x128xf32, #tpu.memory_space<vmem>>, vector<1x128xf32>
    tpu.vector_store %arg19[%c10_185, %c0_186], %260 {strides = array<i32>} : memref<16x128xf32, #tpu.memory_space<vmem>>, vector<1x128xf32>,
    %c11 = arith.constant 11 : index
    %c0_187 = arith.constant 0 : index
    %c0_188 = arith.constant 0 : index
    %262 = vector.load %arg16[%c11, %c0_187, %c0_188] : memref<16x16x128xf32, #tpu.memory_space<vmem>>, vector<1x16x128xf32>
    %263 = vector.shape_cast %262 : vector<1x16x128xf32> to vector<16x128xf32>
    %264 = arith.mulf %263, %255 : vector<16x128xf32>
    %c11_189 = arith.constant 11 : index
    %c0_190 = arith.constant 0 : index
    %c0_191 = arith.constant 0 : index
    %265 = vector.load %arg17[%c11_189, %c0_190, %c0_191] : memref<16x16x128xf32, #tpu.memory_space<vmem>>, vector<1x16x128xf32>
    %266 = vector.shape_cast %265 : vector<1x16x128xf32> to vector<16x128xf32>
    %267 = arith.addf %264, %266 : vector<16x128xf32>
    %c11_192 = arith.constant 11 : index
    %c0_193 = arith.constant 0 : index
    %c0_194 = arith.constant 0 : index
    %268 = vector.load %arg18[%c11_192, %c0_193, %c0_194] : memref<16x16x128xf32, #tpu.memory_space<vmem>>, vector<1x16x128xf32>
    %269 = vector.shape_cast %268 : vector<1x16x128xf32> to vector<16x128xf32>
    %270 = arith.mulf %269, %267 : vector<16x128xf32>
    %cst_195 = arith.constant dense<0.000000e+00> : vector<128xf32>
    %271 = vector.multi_reduction <add>, %270, %cst_195 [0] : vector<16x128xf32> to vector<128xf32>
    %272 = vector.shape_cast %271 : vector<128xf32> to vector<1x128xf32>
    %c11_196 = arith.constant 11 : index
    %c0_197 = arith.constant 0 : index
    %273 = vector.load %arg19[%c11_196, %c0_197] : memref<16x128xf32, #tpu.memory_space<vmem>>, vector<1x128xf32>
    tpu.vector_store %arg19[%c11_196, %c0_197], %272 {strides = array<i32>} : memref<16x128xf32, #tpu.memory_space<vmem>>, vector<1x128xf32>,
    %c12 = arith.constant 12 : index
    %c0_198 = arith.constant 0 : index
    %c0_199 = arith.constant 0 : index
    %274 = vector.load %arg16[%c12, %c0_198, %c0_199] : memref<16x16x128xf32, #tpu.memory_space<vmem>>, vector<1x16x128xf32>
    %275 = vector.shape_cast %274 : vector<1x16x128xf32> to vector<16x128xf32>
    %276 = arith.mulf %275, %267 : vector<16x128xf32>
    %c12_200 = arith.constant 12 : index
    %c0_201 = arith.constant 0 : index
    %c0_202 = arith.constant 0 : index
    %277 = vector.load %arg17[%c12_200, %c0_201, %c0_202] : memref<16x16x128xf32, #tpu.memory_space<vmem>>, vector<1x16x128xf32>
    %278 = vector.shape_cast %277 : vector<1x16x128xf32> to vector<16x128xf32>
    %279 = arith.addf %276, %278 : vector<16x128xf32>
    %c12_203 = arith.constant 12 : index
    %c0_204 = arith.constant 0 : index
    %c0_205 = arith.constant 0 : index
    %280 = vector.load %arg18[%c12_203, %c0_204, %c0_205] : memref<16x16x128xf32, #tpu.memory_space<vmem>>, vector<1x16x128xf32>
    %281 = vector.shape_cast %280 : vector<1x16x128xf32> to vector<16x128xf32>
    %282 = arith.mulf %281, %279 : vector<16x128xf32>
    %cst_206 = arith.constant dense<0.000000e+00> : vector<128xf32>
    %283 = vector.multi_reduction <add>, %282, %cst_206 [0] : vector<16x128xf32> to vector<128xf32>
    %284 = vector.shape_cast %283 : vector<128xf32> to vector<1x128xf32>
    %c12_207 = arith.constant 12 : index
    %c0_208 = arith.constant 0 : index
    %285 = vector.load %arg19[%c12_207, %c0_208] : memref<16x128xf32, #tpu.memory_space<vmem>>, vector<1x128xf32>
    tpu.vector_store %arg19[%c12_207, %c0_208], %284 {strides = array<i32>} : memref<16x128xf32, #tpu.memory_space<vmem>>, vector<1x128xf32>,
    %c13 = arith.constant 13 : index
    %c0_209 = arith.constant 0 : index
    %c0_210 = arith.constant 0 : index
    %286 = vector.load %arg16[%c13, %c0_209, %c0_210] : memref<16x16x128xf32, #tpu.memory_space<vmem>>, vector<1x16x128xf32>
    %287 = vector.shape_cast %286 : vector<1x16x128xf32> to vector<16x128xf32>
    %288 = arith.mulf %287, %279 : vector<16x128xf32>
    %c13_211 = arith.constant 13 : index
    %c0_212 = arith.constant 0 : index
    %c0_213 = arith.constant 0 : index
    %289 = vector.load %arg17[%c13_211, %c0_212, %c0_213] : memref<16x16x128xf32, #tpu.memory_space<vmem>>, vector<1x16x128xf32>
    %290 = vector.shape_cast %289 : vector<1x16x128xf32> to vector<16x128xf32>
    %291 = arith.addf %288, %290 : vector<16x128xf32>
    %c13_214 = arith.constant 13 : index
    %c0_215 = arith.constant 0 : index
    %c0_216 = arith.constant 0 : index
    %292 = vector.load %arg18[%c13_214, %c0_215, %c0_216] : memref<16x16x128xf32, #tpu.memory_space<vmem>>, vector<1x16x128xf32>
    %293 = vector.shape_cast %292 : vector<1x16x128xf32> to vector<16x128xf32>
    %294 = arith.mulf %293, %291 : vector<16x128xf32>
    %cst_217 = arith.constant dense<0.000000e+00> : vector<128xf32>
    %295 = vector.multi_reduction <add>, %294, %cst_217 [0] : vector<16x128xf32> to vector<128xf32>
    %296 = vector.shape_cast %295 : vector<128xf32> to vector<1x128xf32>
    %c13_218 = arith.constant 13 : index
    %c0_219 = arith.constant 0 : index
    %297 = vector.load %arg19[%c13_218, %c0_219] : memref<16x128xf32, #tpu.memory_space<vmem>>, vector<1x128xf32>
    tpu.vector_store %arg19[%c13_218, %c0_219], %296 {strides = array<i32>} : memref<16x128xf32, #tpu.memory_space<vmem>>, vector<1x128xf32>,
    %c14 = arith.constant 14 : index
    %c0_220 = arith.constant 0 : index
    %c0_221 = arith.constant 0 : index
    %298 = vector.load %arg16[%c14, %c0_220, %c0_221] : memref<16x16x128xf32, #tpu.memory_space<vmem>>, vector<1x16x128xf32>
    %299 = vector.shape_cast %298 : vector<1x16x128xf32> to vector<16x128xf32>
    %300 = arith.mulf %299, %291 : vector<16x128xf32>
    %c14_222 = arith.constant 14 : index
    %c0_223 = arith.constant 0 : index
    %c0_224 = arith.constant 0 : index
    %301 = vector.load %arg17[%c14_222, %c0_223, %c0_224] : memref<16x16x128xf32, #tpu.memory_space<vmem>>, vector<1x16x128xf32>
    %302 = vector.shape_cast %301 : vector<1x16x128xf32> to vector<16x128xf32>
    %303 = arith.addf %300, %302 : vector<16x128xf32>
    %c14_225 = arith.constant 14 : index
    %c0_226 = arith.constant 0 : index
    %c0_227 = arith.constant 0 : index
    %304 = vector.load %arg18[%c14_225, %c0_226, %c0_227] : memref<16x16x128xf32, #tpu.memory_space<vmem>>, vector<1x16x128xf32>
    %305 = vector.shape_cast %304 : vector<1x16x128xf32> to vector<16x128xf32>
    %306 = arith.mulf %305, %303 : vector<16x128xf32>
    %cst_228 = arith.constant dense<0.000000e+00> : vector<128xf32>
    %307 = vector.multi_reduction <add>, %306, %cst_228 [0] : vector<16x128xf32> to vector<128xf32>
    %308 = vector.shape_cast %307 : vector<128xf32> to vector<1x128xf32>
    %c14_229 = arith.constant 14 : index
    %c0_230 = arith.constant 0 : index
    %309 = vector.load %arg19[%c14_229, %c0_230] : memref<16x128xf32, #tpu.memory_space<vmem>>, vector<1x128xf32>
    tpu.vector_store %arg19[%c14_229, %c0_230], %308 {strides = array<i32>} : memref<16x128xf32, #tpu.memory_space<vmem>>, vector<1x128xf32>,
    %c15 = arith.constant 15 : index
    %c0_231 = arith.constant 0 : index
    %c0_232 = arith.constant 0 : index
    %310 = vector.load %arg16[%c15, %c0_231, %c0_232] : memref<16x16x128xf32, #tpu.memory_space<vmem>>, vector<1x16x128xf32>
    %311 = vector.shape_cast %310 : vector<1x16x128xf32> to vector<16x128xf32>
    %312 = arith.mulf %311, %303 : vector<16x128xf32>
    %c15_233 = arith.constant 15 : index
    %c0_234 = arith.constant 0 : index
    %c0_235 = arith.constant 0 : index
    %313 = vector.load %arg17[%c15_233, %c0_234, %c0_235] : memref<16x16x128xf32, #tpu.memory_space<vmem>>, vector<1x16x128xf32>
    %314 = vector.shape_cast %313 : vector<1x16x128xf32> to vector<16x128xf32>
    %315 = arith.addf %312, %314 : vector<16x128xf32>
    %c15_236 = arith.constant 15 : index
    %c0_237 = arith.constant 0 : index
    %c0_238 = arith.constant 0 : index
    %316 = vector.load %arg18[%c15_236, %c0_237, %c0_238] : memref<16x16x128xf32, #tpu.memory_space<vmem>>, vector<1x16x128xf32>
    %317 = vector.shape_cast %316 : vector<1x16x128xf32> to vector<16x128xf32>
    %318 = arith.mulf %317, %315 : vector<16x128xf32>
    %cst_239 = arith.constant dense<0.000000e+00> : vector<128xf32>
    %319 = vector.multi_reduction <add>, %318, %cst_239 [0] : vector<16x128xf32> to vector<128xf32>
    %320 = vector.shape_cast %319 : vector<128xf32> to vector<1x128xf32>
    %c15_240 = arith.constant 15 : index
    %c0_241 = arith.constant 0 : index
    %321 = vector.load %arg19[%c15_240, %c0_241] : memref<16x128xf32, #tpu.memory_space<vmem>>, vector<1x128xf32>
    tpu.vector_store %arg19[%c15_240, %c0_241], %320 {strides = array<i32>} : memref<16x128xf32, #tpu.memory_space<vmem>>, vector<1x128xf32>,
    %c0_242 = arith.constant 0 : index
    %c0_243 = arith.constant 0 : index
    %322 = vector.load %arg19[%c0_242, %c0_243] : memref<16x128xf32, #tpu.memory_space<vmem>>, vector<16x128xf32>
    %323 = vector.broadcast %20 : vector<1x128xf32> to vector<16x128xf32>
    %324 = arith.mulf %323, %70 : vector<16x128xf32>
    %325 = arith.addf %322, %324 : vector<16x128xf32>
    %326 = math.absf %37 : vector<16x128xf32>
    %cst_244 = arith.constant 0.000000e+00 : f32
    %327 = vector.broadcast %cst_244 : f32 to vector<16x128xf32>
    %328 = arith.subf %327, %326 : vector<16x128xf32>
    %329 = math.exp %328 : vector<16x128xf32>
    %cst_245 = arith.constant 0.000000e+00 : f32
    %330 = vector.broadcast %cst_245 : f32 to vector<16x128xf32>
    %331 = arith.cmpf oge, %37, %330 : vector<16x128xf32>
    %cst_246 = arith.constant 1.000000e+00 : f32
    %332 = vector.broadcast %cst_246 : f32 to vector<16x128xf32>
    %333 = arith.select %331, %332, %329 : vector<16x128xi1>, vector<16x128xf32>
    %cst_247 = arith.constant 1.000000e+00 : f32
    %334 = vector.broadcast %cst_247 : f32 to vector<16x128xf32>
    %335 = arith.addf %334, %329 : vector<16x128xf32>
    %336 = arith.divf %333, %335 : vector<16x128xf32>
    %337 = arith.mulf %37, %336 : vector<16x128xf32>
    %338 = arith.mulf %325, %337 : vector<16x128xf32>
    %cst_248 = arith.constant dense<0.000000e+00> : vector<16x64xf32>
    %339 = tpu.matmul %338, %22, %cst_248 {dimension_numbers = #tpu.dot_dimension_numbers<[1], [0], [0], [1], [0, 0, 1, 1], [], []>} : vector<16x128xf32>, vector<128x64xf32>, vector<16x64xf32> -> vector<16x64xf32>
    %c1_249 = arith.constant 1 : index
    %c0_250 = arith.constant 0 : index
    %c0_251 = arith.constant 0 : index
    %340 = vector.load %arg3[%c1_249, %c0_250, %c0_251] : memref<2x1x64xf32, #tpu.memory_space<vmem>>, vector<1x1x64xf32>
    %341 = vector.shape_cast %340 : vector<1x1x64xf32> to vector<1x64xf32>
    %c1_252 = arith.constant 1 : index
    %c0_253 = arith.constant 0 : index
    %c0_254 = arith.constant 0 : index
    %342 = vector.load %arg4[%c1_252, %c0_253, %c0_254] : memref<2x1x64xf32, #tpu.memory_space<vmem>>, vector<1x1x64xf32>
    %343 = vector.shape_cast %342 : vector<1x1x64xf32> to vector<1x64xf32>
    %c1_255 = arith.constant 1 : index
    %c0_256 = arith.constant 0 : index
    %c0_257 = arith.constant 0 : index
    %344 = vector.load %arg5[%c1_255, %c0_256, %c0_257] : memref<2x64x256xf32, #tpu.memory_space<vmem>>, vector<1x64x256xf32>
    %345 = vector.shape_cast %344 : vector<1x64x256xf32> to vector<64x256xf32>
    %c1_258 = arith.constant 1 : index
    %c0_259 = arith.constant 0 : index
    %c0_260 = arith.constant 0 : index
    %346 = vector.load %arg6[%c1_258, %c0_259, %c0_260] : memref<2x4x128xf32, #tpu.memory_space<vmem>>, vector<1x4x128xf32>
    %347 = vector.shape_cast %346 : vector<1x4x128xf32> to vector<4x128xf32>
    %c1_261 = arith.constant 1 : index
    %c0_262 = arith.constant 0 : index
    %c0_263 = arith.constant 0 : index
    %348 = vector.load %arg7[%c1_261, %c0_262, %c0_263] : memref<2x1x128xf32, #tpu.memory_space<vmem>>, vector<1x1x128xf32>
    %349 = vector.shape_cast %348 : vector<1x1x128xf32> to vector<1x128xf32>
    %c1_264 = arith.constant 1 : index
    %c0_265 = arith.constant 0 : index
    %c0_266 = arith.constant 0 : index
    %350 = vector.load %arg8[%c1_264, %c0_265, %c0_266] : memref<2x128x192xf32, #tpu.memory_space<vmem>>, vector<1x128x192xf32>
    %351 = vector.shape_cast %350 : vector<1x128x192xf32> to vector<128x192xf32>
    %c1_267 = arith.constant 1 : index
    %c0_268 = arith.constant 0 : index
    %c0_269 = arith.constant 0 : index
    %352 = vector.load %arg9[%c1_267, %c0_268, %c0_269] : memref<2x1x128xf32, #tpu.memory_space<vmem>>, vector<1x1x128xf32>
    %353 = vector.shape_cast %352 : vector<1x1x128xf32> to vector<1x128xf32>
    %c1_270 = arith.constant 1 : index
    %c0_271 = arith.constant 0 : index
    %c0_272 = arith.constant 0 : index
    %354 = vector.load %arg10[%c1_270, %c0_271, %c0_272] : memref<2x16x128xf32, #tpu.memory_space<vmem>>, vector<1x16x128xf32>
    %355 = vector.shape_cast %354 : vector<1x16x128xf32> to vector<16x128xf32>
    %c1_273 = arith.constant 1 : index
    %c0_274 = arith.constant 0 : index
    %c0_275 = arith.constant 0 : index
    %356 = vector.load %arg11[%c1_273, %c0_274, %c0_275] : memref<2x1x128xf32, #tpu.memory_space<vmem>>, vector<1x1x128xf32>
    %357 = vector.shape_cast %356 : vector<1x1x128xf32> to vector<1x128xf32>
    %c1_276 = arith.constant 1 : index
    %c0_277 = arith.constant 0 : index
    %c0_278 = arith.constant 0 : index
    %358 = vector.load %arg12[%c1_276, %c0_277, %c0_278] : memref<2x128x64xf32, #tpu.memory_space<vmem>>, vector<1x128x64xf32>
    %359 = vector.shape_cast %358 : vector<1x128x64xf32> to vector<128x64xf32>
    %360 = arith.addf %339, %2 : vector<16x64xf32>
    %cst_279 = arith.constant dense<0.000000e+00> : vector<16x64xf32>
    %361 = tpu.matmul %360, %0, %cst_279 {dimension_numbers = #tpu.dot_dimension_numbers<[1], [0], [0], [1], [0, 0, 1, 1], [], []>} : vector<16x64xf32>, vector<64x64xf32>, vector<16x64xf32> -> vector<16x64xf32>
    %362 = arith.subf %360, %361 : vector<16x64xf32>
    %363 = arith.mulf %362, %362 : vector<16x64xf32>
    %cst_280 = arith.constant dense<0.000000e+00> : vector<16x64xf32>
    %364 = tpu.matmul %363, %0, %cst_280 {dimension_numbers = #tpu.dot_dimension_numbers<[1], [0], [0], [1], [0, 0, 1, 1], [], []>} : vector<16x64xf32>, vector<64x64xf32>, vector<16x64xf32> -> vector<16x64xf32>
    %cst_281 = arith.constant 9.99999974E-6 : f32
    %365 = vector.broadcast %cst_281 : f32 to vector<16x64xf32>
    %366 = arith.addf %364, %365 : vector<16x64xf32>
    %367 = math.rsqrt %366 : vector<16x64xf32>
    %368 = arith.mulf %362, %367 : vector<16x64xf32>
    %369 = vector.broadcast %341 : vector<1x64xf32> to vector<16x64xf32>
    %370 = arith.mulf %368, %369 : vector<16x64xf32>
    %371 = vector.broadcast %343 : vector<1x64xf32> to vector<16x64xf32>
    %372 = arith.addf %370, %371 : vector<16x64xf32>
    %cst_282 = arith.constant dense<0.000000e+00> : vector<16x256xf32>
    %373 = tpu.matmul %372, %345, %cst_282 {dimension_numbers = #tpu.dot_dimension_numbers<[1], [0], [0], [1], [0, 0, 1, 1], [], []>} : vector<16x64xf32>, vector<64x256xf32>, vector<16x256xf32> -> vector<16x256xf32>
    %374 = vector.extract_strided_slice %373 {offsets = [0, 0], sizes = [16, 128], strides = [1, 1]} : vector<16x256xf32> to vector<16x128xf32>
    %375 = vector.extract_strided_slice %373 {offsets = [0, 128], sizes = [16, 128], strides = [1, 1]} : vector<16x256xf32> to vector<16x128xf32>
    %cst_283 = arith.constant dense<0.000000e+00> : vector<48x128xf32>
    %376 = tpu.matmul %1, %374, %cst_283 {dimension_numbers = #tpu.dot_dimension_numbers<[1], [0], [0], [1], [0, 0, 1, 1], [], []>} : vector<48x16xf32>, vector<16x128xf32>, vector<48x128xf32> -> vector<48x128xf32>
    %377 = vector.extract_strided_slice %347 {offsets = [3, 0], sizes = [1, 128], strides = [1, 1]} : vector<4x128xf32> to vector<1x128xf32>
    %378 = vector.broadcast %377 : vector<1x128xf32> to vector<16x128xf32>
    %379 = arith.mulf %374, %378 : vector<16x128xf32>
    %380 = vector.broadcast %349 : vector<1x128xf32> to vector<16x128xf32>
    %381 = arith.addf %380, %379 : vector<16x128xf32>
    %382 = vector.extract_strided_slice %376 {offsets = [32, 0], sizes = [16, 128], strides = [1, 1]} : vector<48x128xf32> to vector<16x128xf32>
    %383 = vector.extract_strided_slice %347 {offsets = [0, 0], sizes = [1, 128], strides = [1, 1]} : vector<4x128xf32> to vector<1x128xf32>
    %384 = vector.broadcast %383 : vector<1x128xf32> to vector<16x128xf32>
    %385 = arith.mulf %382, %384 : vector<16x128xf32>
    %386 = arith.addf %381, %385 : vector<16x128xf32>
    %387 = vector.extract_strided_slice %376 {offsets = [16, 0], sizes = [16, 128], strides = [1, 1]} : vector<48x128xf32> to vector<16x128xf32>
    %388 = vector.extract_strided_slice %347 {offsets = [1, 0], sizes = [1, 128], strides = [1, 1]} : vector<4x128xf32> to vector<1x128xf32>
    %389 = vector.broadcast %388 : vector<1x128xf32> to vector<16x128xf32>
    %390 = arith.mulf %387, %389 : vector<16x128xf32>
    %391 = arith.addf %386, %390 : vector<16x128xf32>
    %392 = vector.extract_strided_slice %376 {offsets = [0, 0], sizes = [16, 128], strides = [1, 1]} : vector<48x128xf32> to vector<16x128xf32>
    %393 = vector.extract_strided_slice %347 {offsets = [2, 0], sizes = [1, 128], strides = [1, 1]} : vector<4x128xf32> to vector<1x128xf32>
    %394 = vector.broadcast %393 : vector<1x128xf32> to vector<16x128xf32>
    %395 = arith.mulf %392, %394 : vector<16x128xf32>
    %396 = arith.addf %391, %395 : vector<16x128xf32>
    %397 = math.absf %396 : vector<16x128xf32>
    %cst_284 = arith.constant 0.000000e+00 : f32
    %398 = vector.broadcast %cst_284 : f32 to vector<16x128xf32>
    %399 = arith.subf %398, %397 : vector<16x128xf32>
    %400 = math.exp %399 : vector<16x128xf32>
    %cst_285 = arith.constant 0.000000e+00 : f32
    %401 = vector.broadcast %cst_285 : f32 to vector<16x128xf32>
    %402 = arith.cmpf oge, %396, %401 : vector<16x128xf32>
    %cst_286 = arith.constant 1.000000e+00 : f32
    %403 = vector.broadcast %cst_286 : f32 to vector<16x128xf32>
    %404 = arith.select %402, %403, %400 : vector<16x128xi1>, vector<16x128xf32>
    %cst_287 = arith.constant 1.000000e+00 : f32
    %405 = vector.broadcast %cst_287 : f32 to vector<16x128xf32>
    %406 = arith.addf %405, %400 : vector<16x128xf32>
    %407 = arith.divf %404, %406 : vector<16x128xf32>
    %408 = arith.mulf %396, %407 : vector<16x128xf32>
    %cst_288 = arith.constant dense<0.000000e+00> : vector<16x192xf32>
    %409 = tpu.matmul %408, %351, %cst_288 {dimension_numbers = #tpu.dot_dimension_numbers<[1], [0], [0], [1], [0, 0, 1, 1], [], []>} : vector<16x128xf32>, vector<128x192xf32>, vector<16x192xf32> -> vector<16x192xf32>
    %410 = vector.extract_strided_slice %409 {offsets = [0, 0], sizes = [16, 128], strides = [1, 1]} : vector<16x192xf32> to vector<16x128xf32>
    %411 = vector.broadcast %353 : vector<1x128xf32> to vector<16x128xf32>
    %412 = arith.addf %410, %411 : vector<16x128xf32>
    %cst_289 = arith.constant 0.000000e+00 : f32
    %413 = vector.broadcast %cst_289 : f32 to vector<16x128xf32>
    %414 = arith.maximumf %412, %413 : vector<16x128xf32>
    %415 = math.absf %412 : vector<16x128xf32>
    %cst_290 = arith.constant 0.000000e+00 : f32
    %416 = vector.broadcast %cst_290 : f32 to vector<16x128xf32>
    %417 = arith.subf %416, %415 : vector<16x128xf32>
    %418 = math.exp %417 : vector<16x128xf32>
    %cst_291 = arith.constant 1.000000e+00 : f32
    %419 = vector.broadcast %cst_291 : f32 to vector<16x128xf32>
    %420 = arith.addf %419, %418 : vector<16x128xf32>
    %421 = math.log %420 : vector<16x128xf32>
    %422 = arith.addf %414, %421 : vector<16x128xf32>
    %423 = vector.extract_strided_slice %409 {offsets = [0, 128], sizes = [16, 64], strides = [1, 1]} : vector<16x192xf32> to vector<16x64xf32>
    %424 = arith.mulf %422, %408 : vector<16x128xf32>
    %425 = vector.extract_strided_slice %422 {offsets = [0, 0], sizes = [8, 128], strides = [1, 1]} : vector<16x128xf32> to vector<8x128xf32>
    %426 = vector.shape_cast %425 : vector<8x128xf32> to vector<8x1x128xf32>
    %427 = vector.shape_cast %355 : vector<16x128xf32> to vector<1x16x128xf32>
    %428 = vector.broadcast %426 : vector<8x1x128xf32> to vector<8x16x128xf32>
    %429 = vector.broadcast %427 : vector<1x16x128xf32> to vector<8x16x128xf32>
    %430 = arith.mulf %428, %429 : vector<8x16x128xf32>
    %431 = math.exp %430 : vector<8x16x128xf32>
    %c0_292 = arith.constant 0 : index
    %c0_293 = arith.constant 0 : index
    %c0_294 = arith.constant 0 : index
    %432 = vector.load %arg16[%c0_292, %c0_293, %c0_294] : memref<16x16x128xf32, #tpu.memory_space<vmem>>, vector<8x16x128xf32>
    tpu.vector_store %arg16[%c0_292, %c0_293, %c0_294], %431 {strides = array<i32>} : memref<16x16x128xf32, #tpu.memory_space<vmem>>, vector<8x16x128xf32>,
    %433 = vector.extract_strided_slice %422 {offsets = [8, 0], sizes = [8, 128], strides = [1, 1]} : vector<16x128xf32> to vector<8x128xf32>
    %434 = vector.shape_cast %433 : vector<8x128xf32> to vector<8x1x128xf32>
    %435 = vector.shape_cast %355 : vector<16x128xf32> to vector<1x16x128xf32>
    %436 = vector.broadcast %434 : vector<8x1x128xf32> to vector<8x16x128xf32>
    %437 = vector.broadcast %435 : vector<1x16x128xf32> to vector<8x16x128xf32>
    %438 = arith.mulf %436, %437 : vector<8x16x128xf32>
    %439 = math.exp %438 : vector<8x16x128xf32>
    %c8_295 = arith.constant 8 : index
    %c0_296 = arith.constant 0 : index
    %c0_297 = arith.constant 0 : index
    %440 = vector.load %arg16[%c8_295, %c0_296, %c0_297] : memref<16x16x128xf32, #tpu.memory_space<vmem>>, vector<8x16x128xf32>
    tpu.vector_store %arg16[%c8_295, %c0_296, %c0_297], %439 {strides = array<i32>} : memref<16x16x128xf32, #tpu.memory_space<vmem>>, vector<8x16x128xf32>,
    %441 = vector.extract_strided_slice %423 {offsets = [0, 0], sizes = [16, 16], strides = [1, 1]} : vector<16x64xf32> to vector<16x16xf32>
    %442 = vector.extract_strided_slice %423 {offsets = [0, 16], sizes = [16, 16], strides = [1, 1]} : vector<16x64xf32> to vector<16x16xf32>
    %443 = vector.shape_cast %441 : vector<16x16xf32> to vector<16x16x1xf32>
    %444 = vector.extract_strided_slice %424 {offsets = [0, 0], sizes = [16, 64], strides = [1, 1]} : vector<16x128xf32> to vector<16x64xf32>
    %445 = vector.shape_cast %444 : vector<16x64xf32> to vector<16x1x64xf32>
    %446 = vector.broadcast %443 : vector<16x16x1xf32> to vector<16x16x64xf32>
    %447 = vector.broadcast %445 : vector<16x1x64xf32> to vector<16x16x64xf32>
    %448 = arith.mulf %446, %447 : vector<16x16x64xf32>
    %c0_298 = arith.constant 0 : index
    %c0_299 = arith.constant 0 : index
    %c0_300 = arith.constant 0 : index
    %449 = vector.load %arg17[%c0_298, %c0_299, %c0_300] : memref<16x16x128xf32, #tpu.memory_space<vmem>>, vector<16x16x64xf32>
    tpu.vector_store %arg17[%c0_298, %c0_299, %c0_300], %448 {strides = array<i32>} : memref<16x16x128xf32, #tpu.memory_space<vmem>>, vector<16x16x64xf32>,
    %450 = vector.shape_cast %442 : vector<16x16xf32> to vector<16x16x1xf32>
    %451 = vector.shape_cast %450 : vector<16x16x1xf32> to vector<16x16x1xf32>
    %452 = vector.broadcast %451 : vector<16x16x1xf32> to vector<16x16x64xf32>
    %c0_301 = arith.constant 0 : index
    %c0_302 = arith.constant 0 : index
    %c0_303 = arith.constant 0 : index
    %453 = vector.load %arg18[%c0_301, %c0_302, %c0_303] : memref<16x16x128xf32, #tpu.memory_space<vmem>>, vector<16x16x64xf32>
    tpu.vector_store %arg18[%c0_301, %c0_302, %c0_303], %452 {strides = array<i32>} : memref<16x16x128xf32, #tpu.memory_space<vmem>>, vector<16x16x64xf32>,
    %454 = vector.extract_strided_slice %423 {offsets = [0, 32], sizes = [16, 16], strides = [1, 1]} : vector<16x64xf32> to vector<16x16xf32>
    %455 = vector.extract_strided_slice %423 {offsets = [0, 48], sizes = [16, 16], strides = [1, 1]} : vector<16x64xf32> to vector<16x16xf32>
    %456 = vector.shape_cast %454 : vector<16x16xf32> to vector<16x16x1xf32>
    %457 = vector.extract_strided_slice %424 {offsets = [0, 64], sizes = [16, 64], strides = [1, 1]} : vector<16x128xf32> to vector<16x64xf32>
    %458 = vector.shape_cast %457 : vector<16x64xf32> to vector<16x1x64xf32>
    %459 = vector.broadcast %456 : vector<16x16x1xf32> to vector<16x16x64xf32>
    %460 = vector.broadcast %458 : vector<16x1x64xf32> to vector<16x16x64xf32>
    %461 = arith.mulf %459, %460 : vector<16x16x64xf32>
    %c0_304 = arith.constant 0 : index
    %c0_305 = arith.constant 0 : index
    %c64_306 = arith.constant 64 : index
    %462 = vector.load %arg17[%c0_304, %c0_305, %c64_306] : memref<16x16x128xf32, #tpu.memory_space<vmem>>, vector<16x16x64xf32>
    tpu.vector_store %arg17[%c0_304, %c0_305, %c64_306], %461 {strides = array<i32>} : memref<16x16x128xf32, #tpu.memory_space<vmem>>, vector<16x16x64xf32>,
    %463 = vector.shape_cast %455 : vector<16x16xf32> to vector<16x16x1xf32>
    %464 = vector.shape_cast %463 : vector<16x16x1xf32> to vector<16x16x1xf32>
    %465 = vector.broadcast %464 : vector<16x16x1xf32> to vector<16x16x64xf32>
    %c0_307 = arith.constant 0 : index
    %c0_308 = arith.constant 0 : index
    %c64_309 = arith.constant 64 : index
    %466 = vector.load %arg18[%c0_307, %c0_308, %c64_309] : memref<16x16x128xf32, #tpu.memory_space<vmem>>, vector<16x16x64xf32>
    tpu.vector_store %arg18[%c0_307, %c0_308, %c64_309], %465 {strides = array<i32>} : memref<16x16x128xf32, #tpu.memory_space<vmem>>, vector<16x16x64xf32>,
    %cst_310 = arith.constant 0.000000e+00 : f32
    %467 = vector.broadcast %cst_310 : f32 to vector<16x128xf32>
    %c0_311 = arith.constant 0 : index
    %c0_312 = arith.constant 0 : index
    %c0_313 = arith.constant 0 : index
    %468 = vector.load %arg16[%c0_311, %c0_312, %c0_313] : memref<16x16x128xf32, #tpu.memory_space<vmem>>, vector<1x16x128xf32>
    %469 = vector.shape_cast %468 : vector<1x16x128xf32> to vector<16x128xf32>
    %470 = arith.mulf %469, %467 : vector<16x128xf32>
    %c0_314 = arith.constant 0 : index
    %c0_315 = arith.constant 0 : index
    %c0_316 = arith.constant 0 : index
    %471 = vector.load %arg17[%c0_314, %c0_315, %c0_316] : memref<16x16x128xf32, #tpu.memory_space<vmem>>, vector<1x16x128xf32>
    %472 = vector.shape_cast %471 : vector<1x16x128xf32> to vector<16x128xf32>
    %473 = arith.addf %470, %472 : vector<16x128xf32>
    %c0_317 = arith.constant 0 : index
    %c0_318 = arith.constant 0 : index
    %c0_319 = arith.constant 0 : index
    %474 = vector.load %arg18[%c0_317, %c0_318, %c0_319] : memref<16x16x128xf32, #tpu.memory_space<vmem>>, vector<1x16x128xf32>
    %475 = vector.shape_cast %474 : vector<1x16x128xf32> to vector<16x128xf32>
    %476 = arith.mulf %475, %473 : vector<16x128xf32>
    %cst_320 = arith.constant dense<0.000000e+00> : vector<128xf32>
    %477 = vector.multi_reduction <add>, %476, %cst_320 [0] : vector<16x128xf32> to vector<128xf32>
    %478 = vector.shape_cast %477 : vector<128xf32> to vector<1x128xf32>
    %c0_321 = arith.constant 0 : index
    %c0_322 = arith.constant 0 : index
    %479 = vector.load %arg19[%c0_321, %c0_322] : memref<16x128xf32, #tpu.memory_space<vmem>>, vector<1x128xf32>
    tpu.vector_store %arg19[%c0_321, %c0_322], %478 {strides = array<i32>} : memref<16x128xf32, #tpu.memory_space<vmem>>, vector<1x128xf32>,
    %c1_323 = arith.constant 1 : index
    %c0_324 = arith.constant 0 : index
    %c0_325 = arith.constant 0 : index
    %480 = vector.load %arg16[%c1_323, %c0_324, %c0_325] : memref<16x16x128xf32, #tpu.memory_space<vmem>>, vector<1x16x128xf32>
    %481 = vector.shape_cast %480 : vector<1x16x128xf32> to vector<16x128xf32>
    %482 = arith.mulf %481, %473 : vector<16x128xf32>
    %c1_326 = arith.constant 1 : index
    %c0_327 = arith.constant 0 : index
    %c0_328 = arith.constant 0 : index
    %483 = vector.load %arg17[%c1_326, %c0_327, %c0_328] : memref<16x16x128xf32, #tpu.memory_space<vmem>>, vector<1x16x128xf32>
    %484 = vector.shape_cast %483 : vector<1x16x128xf32> to vector<16x128xf32>
    %485 = arith.addf %482, %484 : vector<16x128xf32>
    %c1_329 = arith.constant 1 : index
    %c0_330 = arith.constant 0 : index
    %c0_331 = arith.constant 0 : index
    %486 = vector.load %arg18[%c1_329, %c0_330, %c0_331] : memref<16x16x128xf32, #tpu.memory_space<vmem>>, vector<1x16x128xf32>
    %487 = vector.shape_cast %486 : vector<1x16x128xf32> to vector<16x128xf32>
    %488 = arith.mulf %487, %485 : vector<16x128xf32>
    %cst_332 = arith.constant dense<0.000000e+00> : vector<128xf32>
    %489 = vector.multi_reduction <add>, %488, %cst_332 [0] : vector<16x128xf32> to vector<128xf32>
    %490 = vector.shape_cast %489 : vector<128xf32> to vector<1x128xf32>
    %c1_333 = arith.constant 1 : index
    %c0_334 = arith.constant 0 : index
    %491 = vector.load %arg19[%c1_333, %c0_334] : memref<16x128xf32, #tpu.memory_space<vmem>>, vector<1x128xf32>
    tpu.vector_store %arg19[%c1_333, %c0_334], %490 {strides = array<i32>} : memref<16x128xf32, #tpu.memory_space<vmem>>, vector<1x128xf32>,
    %c2_335 = arith.constant 2 : index
    %c0_336 = arith.constant 0 : index
    %c0_337 = arith.constant 0 : index
    %492 = vector.load %arg16[%c2_335, %c0_336, %c0_337] : memref<16x16x128xf32, #tpu.memory_space<vmem>>, vector<1x16x128xf32>
    %493 = vector.shape_cast %492 : vector<1x16x128xf32> to vector<16x128xf32>
    %494 = arith.mulf %493, %485 : vector<16x128xf32>
    %c2_338 = arith.constant 2 : index
    %c0_339 = arith.constant 0 : index
    %c0_340 = arith.constant 0 : index
    %495 = vector.load %arg17[%c2_338, %c0_339, %c0_340] : memref<16x16x128xf32, #tpu.memory_space<vmem>>, vector<1x16x128xf32>
    %496 = vector.shape_cast %495 : vector<1x16x128xf32> to vector<16x128xf32>
    %497 = arith.addf %494, %496 : vector<16x128xf32>
    %c2_341 = arith.constant 2 : index
    %c0_342 = arith.constant 0 : index
    %c0_343 = arith.constant 0 : index
    %498 = vector.load %arg18[%c2_341, %c0_342, %c0_343] : memref<16x16x128xf32, #tpu.memory_space<vmem>>, vector<1x16x128xf32>
    %499 = vector.shape_cast %498 : vector<1x16x128xf32> to vector<16x128xf32>
    %500 = arith.mulf %499, %497 : vector<16x128xf32>
    %cst_344 = arith.constant dense<0.000000e+00> : vector<128xf32>
    %501 = vector.multi_reduction <add>, %500, %cst_344 [0] : vector<16x128xf32> to vector<128xf32>
    %502 = vector.shape_cast %501 : vector<128xf32> to vector<1x128xf32>
    %c2_345 = arith.constant 2 : index
    %c0_346 = arith.constant 0 : index
    %503 = vector.load %arg19[%c2_345, %c0_346] : memref<16x128xf32, #tpu.memory_space<vmem>>, vector<1x128xf32>
    tpu.vector_store %arg19[%c2_345, %c0_346], %502 {strides = array<i32>} : memref<16x128xf32, #tpu.memory_space<vmem>>, vector<1x128xf32>,
    %c3_347 = arith.constant 3 : index
    %c0_348 = arith.constant 0 : index
    %c0_349 = arith.constant 0 : index
    %504 = vector.load %arg16[%c3_347, %c0_348, %c0_349] : memref<16x16x128xf32, #tpu.memory_space<vmem>>, vector<1x16x128xf32>
    %505 = vector.shape_cast %504 : vector<1x16x128xf32> to vector<16x128xf32>
    %506 = arith.mulf %505, %497 : vector<16x128xf32>
    %c3_350 = arith.constant 3 : index
    %c0_351 = arith.constant 0 : index
    %c0_352 = arith.constant 0 : index
    %507 = vector.load %arg17[%c3_350, %c0_351, %c0_352] : memref<16x16x128xf32, #tpu.memory_space<vmem>>, vector<1x16x128xf32>
    %508 = vector.shape_cast %507 : vector<1x16x128xf32> to vector<16x128xf32>
    %509 = arith.addf %506, %508 : vector<16x128xf32>
    %c3_353 = arith.constant 3 : index
    %c0_354 = arith.constant 0 : index
    %c0_355 = arith.constant 0 : index
    %510 = vector.load %arg18[%c3_353, %c0_354, %c0_355] : memref<16x16x128xf32, #tpu.memory_space<vmem>>, vector<1x16x128xf32>
    %511 = vector.shape_cast %510 : vector<1x16x128xf32> to vector<16x128xf32>
    %512 = arith.mulf %511, %509 : vector<16x128xf32>
    %cst_356 = arith.constant dense<0.000000e+00> : vector<128xf32>
    %513 = vector.multi_reduction <add>, %512, %cst_356 [0] : vector<16x128xf32> to vector<128xf32>
    %514 = vector.shape_cast %513 : vector<128xf32> to vector<1x128xf32>
    %c3_357 = arith.constant 3 : index
    %c0_358 = arith.constant 0 : index
    %515 = vector.load %arg19[%c3_357, %c0_358] : memref<16x128xf32, #tpu.memory_space<vmem>>, vector<1x128xf32>
    tpu.vector_store %arg19[%c3_357, %c0_358], %514 {strides = array<i32>} : memref<16x128xf32, #tpu.memory_space<vmem>>, vector<1x128xf32>,
    %c4_359 = arith.constant 4 : index
    %c0_360 = arith.constant 0 : index
    %c0_361 = arith.constant 0 : index
    %516 = vector.load %arg16[%c4_359, %c0_360, %c0_361] : memref<16x16x128xf32, #tpu.memory_space<vmem>>, vector<1x16x128xf32>
    %517 = vector.shape_cast %516 : vector<1x16x128xf32> to vector<16x128xf32>
    %518 = arith.mulf %517, %509 : vector<16x128xf32>
    %c4_362 = arith.constant 4 : index
    %c0_363 = arith.constant 0 : index
    %c0_364 = arith.constant 0 : index
    %519 = vector.load %arg17[%c4_362, %c0_363, %c0_364] : memref<16x16x128xf32, #tpu.memory_space<vmem>>, vector<1x16x128xf32>
    %520 = vector.shape_cast %519 : vector<1x16x128xf32> to vector<16x128xf32>
    %521 = arith.addf %518, %520 : vector<16x128xf32>
    %c4_365 = arith.constant 4 : index
    %c0_366 = arith.constant 0 : index
    %c0_367 = arith.constant 0 : index
    %522 = vector.load %arg18[%c4_365, %c0_366, %c0_367] : memref<16x16x128xf32, #tpu.memory_space<vmem>>, vector<1x16x128xf32>
    %523 = vector.shape_cast %522 : vector<1x16x128xf32> to vector<16x128xf32>
    %524 = arith.mulf %523, %521 : vector<16x128xf32>
    %cst_368 = arith.constant dense<0.000000e+00> : vector<128xf32>
    %525 = vector.multi_reduction <add>, %524, %cst_368 [0] : vector<16x128xf32> to vector<128xf32>
    %526 = vector.shape_cast %525 : vector<128xf32> to vector<1x128xf32>
    %c4_369 = arith.constant 4 : index
    %c0_370 = arith.constant 0 : index
    %527 = vector.load %arg19[%c4_369, %c0_370] : memref<16x128xf32, #tpu.memory_space<vmem>>, vector<1x128xf32>
    tpu.vector_store %arg19[%c4_369, %c0_370], %526 {strides = array<i32>} : memref<16x128xf32, #tpu.memory_space<vmem>>, vector<1x128xf32>,
    %c5_371 = arith.constant 5 : index
    %c0_372 = arith.constant 0 : index
    %c0_373 = arith.constant 0 : index
    %528 = vector.load %arg16[%c5_371, %c0_372, %c0_373] : memref<16x16x128xf32, #tpu.memory_space<vmem>>, vector<1x16x128xf32>
    %529 = vector.shape_cast %528 : vector<1x16x128xf32> to vector<16x128xf32>
    %530 = arith.mulf %529, %521 : vector<16x128xf32>
    %c5_374 = arith.constant 5 : index
    %c0_375 = arith.constant 0 : index
    %c0_376 = arith.constant 0 : index
    %531 = vector.load %arg17[%c5_374, %c0_375, %c0_376] : memref<16x16x128xf32, #tpu.memory_space<vmem>>, vector<1x16x128xf32>
    %532 = vector.shape_cast %531 : vector<1x16x128xf32> to vector<16x128xf32>
    %533 = arith.addf %530, %532 : vector<16x128xf32>
    %c5_377 = arith.constant 5 : index
    %c0_378 = arith.constant 0 : index
    %c0_379 = arith.constant 0 : index
    %534 = vector.load %arg18[%c5_377, %c0_378, %c0_379] : memref<16x16x128xf32, #tpu.memory_space<vmem>>, vector<1x16x128xf32>
    %535 = vector.shape_cast %534 : vector<1x16x128xf32> to vector<16x128xf32>
    %536 = arith.mulf %535, %533 : vector<16x128xf32>
    %cst_380 = arith.constant dense<0.000000e+00> : vector<128xf32>
    %537 = vector.multi_reduction <add>, %536, %cst_380 [0] : vector<16x128xf32> to vector<128xf32>
    %538 = vector.shape_cast %537 : vector<128xf32> to vector<1x128xf32>
    %c5_381 = arith.constant 5 : index
    %c0_382 = arith.constant 0 : index
    %539 = vector.load %arg19[%c5_381, %c0_382] : memref<16x128xf32, #tpu.memory_space<vmem>>, vector<1x128xf32>
    tpu.vector_store %arg19[%c5_381, %c0_382], %538 {strides = array<i32>} : memref<16x128xf32, #tpu.memory_space<vmem>>, vector<1x128xf32>,
    %c6_383 = arith.constant 6 : index
    %c0_384 = arith.constant 0 : index
    %c0_385 = arith.constant 0 : index
    %540 = vector.load %arg16[%c6_383, %c0_384, %c0_385] : memref<16x16x128xf32, #tpu.memory_space<vmem>>, vector<1x16x128xf32>
    %541 = vector.shape_cast %540 : vector<1x16x128xf32> to vector<16x128xf32>
    %542 = arith.mulf %541, %533 : vector<16x128xf32>
    %c6_386 = arith.constant 6 : index
    %c0_387 = arith.constant 0 : index
    %c0_388 = arith.constant 0 : index
    %543 = vector.load %arg17[%c6_386, %c0_387, %c0_388] : memref<16x16x128xf32, #tpu.memory_space<vmem>>, vector<1x16x128xf32>
    %544 = vector.shape_cast %543 : vector<1x16x128xf32> to vector<16x128xf32>
    %545 = arith.addf %542, %544 : vector<16x128xf32>
    %c6_389 = arith.constant 6 : index
    %c0_390 = arith.constant 0 : index
    %c0_391 = arith.constant 0 : index
    %546 = vector.load %arg18[%c6_389, %c0_390, %c0_391] : memref<16x16x128xf32, #tpu.memory_space<vmem>>, vector<1x16x128xf32>
    %547 = vector.shape_cast %546 : vector<1x16x128xf32> to vector<16x128xf32>
    %548 = arith.mulf %547, %545 : vector<16x128xf32>
    %cst_392 = arith.constant dense<0.000000e+00> : vector<128xf32>
    %549 = vector.multi_reduction <add>, %548, %cst_392 [0] : vector<16x128xf32> to vector<128xf32>
    %550 = vector.shape_cast %549 : vector<128xf32> to vector<1x128xf32>
    %c6_393 = arith.constant 6 : index
    %c0_394 = arith.constant 0 : index
    %551 = vector.load %arg19[%c6_393, %c0_394] : memref<16x128xf32, #tpu.memory_space<vmem>>, vector<1x128xf32>
    tpu.vector_store %arg19[%c6_393, %c0_394], %550 {strides = array<i32>} : memref<16x128xf32, #tpu.memory_space<vmem>>, vector<1x128xf32>,
    %c7_395 = arith.constant 7 : index
    %c0_396 = arith.constant 0 : index
    %c0_397 = arith.constant 0 : index
    %552 = vector.load %arg16[%c7_395, %c0_396, %c0_397] : memref<16x16x128xf32, #tpu.memory_space<vmem>>, vector<1x16x128xf32>
    %553 = vector.shape_cast %552 : vector<1x16x128xf32> to vector<16x128xf32>
    %554 = arith.mulf %553, %545 : vector<16x128xf32>
    %c7_398 = arith.constant 7 : index
    %c0_399 = arith.constant 0 : index
    %c0_400 = arith.constant 0 : index
    %555 = vector.load %arg17[%c7_398, %c0_399, %c0_400] : memref<16x16x128xf32, #tpu.memory_space<vmem>>, vector<1x16x128xf32>
    %556 = vector.shape_cast %555 : vector<1x16x128xf32> to vector<16x128xf32>
    %557 = arith.addf %554, %556 : vector<16x128xf32>
    %c7_401 = arith.constant 7 : index
    %c0_402 = arith.constant 0 : index
    %c0_403 = arith.constant 0 : index
    %558 = vector.load %arg18[%c7_401, %c0_402, %c0_403] : memref<16x16x128xf32, #tpu.memory_space<vmem>>, vector<1x16x128xf32>
    %559 = vector.shape_cast %558 : vector<1x16x128xf32> to vector<16x128xf32>
    %560 = arith.mulf %559, %557 : vector<16x128xf32>
    %cst_404 = arith.constant dense<0.000000e+00> : vector<128xf32>
    %561 = vector.multi_reduction <add>, %560, %cst_404 [0] : vector<16x128xf32> to vector<128xf32>
    %562 = vector.shape_cast %561 : vector<128xf32> to vector<1x128xf32>
    %c7_405 = arith.constant 7 : index
    %c0_406 = arith.constant 0 : index
    %563 = vector.load %arg19[%c7_405, %c0_406] : memref<16x128xf32, #tpu.memory_space<vmem>>, vector<1x128xf32>
    tpu.vector_store %arg19[%c7_405, %c0_406], %562 {strides = array<i32>} : memref<16x128xf32, #tpu.memory_space<vmem>>, vector<1x128xf32>,
    %c8_407 = arith.constant 8 : index
    %c0_408 = arith.constant 0 : index
    %c0_409 = arith.constant 0 : index
    %564 = vector.load %arg16[%c8_407, %c0_408, %c0_409] : memref<16x16x128xf32, #tpu.memory_space<vmem>>, vector<1x16x128xf32>
    %565 = vector.shape_cast %564 : vector<1x16x128xf32> to vector<16x128xf32>
    %566 = arith.mulf %565, %557 : vector<16x128xf32>
    %c8_410 = arith.constant 8 : index
    %c0_411 = arith.constant 0 : index
    %c0_412 = arith.constant 0 : index
    %567 = vector.load %arg17[%c8_410, %c0_411, %c0_412] : memref<16x16x128xf32, #tpu.memory_space<vmem>>, vector<1x16x128xf32>
    %568 = vector.shape_cast %567 : vector<1x16x128xf32> to vector<16x128xf32>
    %569 = arith.addf %566, %568 : vector<16x128xf32>
    %c8_413 = arith.constant 8 : index
    %c0_414 = arith.constant 0 : index
    %c0_415 = arith.constant 0 : index
    %570 = vector.load %arg18[%c8_413, %c0_414, %c0_415] : memref<16x16x128xf32, #tpu.memory_space<vmem>>, vector<1x16x128xf32>
    %571 = vector.shape_cast %570 : vector<1x16x128xf32> to vector<16x128xf32>
    %572 = arith.mulf %571, %569 : vector<16x128xf32>
    %cst_416 = arith.constant dense<0.000000e+00> : vector<128xf32>
    %573 = vector.multi_reduction <add>, %572, %cst_416 [0] : vector<16x128xf32> to vector<128xf32>
    %574 = vector.shape_cast %573 : vector<128xf32> to vector<1x128xf32>
    %c8_417 = arith.constant 8 : index
    %c0_418 = arith.constant 0 : index
    %575 = vector.load %arg19[%c8_417, %c0_418] : memref<16x128xf32, #tpu.memory_space<vmem>>, vector<1x128xf32>
    tpu.vector_store %arg19[%c8_417, %c0_418], %574 {strides = array<i32>} : memref<16x128xf32, #tpu.memory_space<vmem>>, vector<1x128xf32>,
    %c9_419 = arith.constant 9 : index
    %c0_420 = arith.constant 0 : index
    %c0_421 = arith.constant 0 : index
    %576 = vector.load %arg16[%c9_419, %c0_420, %c0_421] : memref<16x16x128xf32, #tpu.memory_space<vmem>>, vector<1x16x128xf32>
    %577 = vector.shape_cast %576 : vector<1x16x128xf32> to vector<16x128xf32>
    %578 = arith.mulf %577, %569 : vector<16x128xf32>
    %c9_422 = arith.constant 9 : index
    %c0_423 = arith.constant 0 : index
    %c0_424 = arith.constant 0 : index
    %579 = vector.load %arg17[%c9_422, %c0_423, %c0_424] : memref<16x16x128xf32, #tpu.memory_space<vmem>>, vector<1x16x128xf32>
    %580 = vector.shape_cast %579 : vector<1x16x128xf32> to vector<16x128xf32>
    %581 = arith.addf %578, %580 : vector<16x128xf32>
    %c9_425 = arith.constant 9 : index
    %c0_426 = arith.constant 0 : index
    %c0_427 = arith.constant 0 : index
    %582 = vector.load %arg18[%c9_425, %c0_426, %c0_427] : memref<16x16x128xf32, #tpu.memory_space<vmem>>, vector<1x16x128xf32>
    %583 = vector.shape_cast %582 : vector<1x16x128xf32> to vector<16x128xf32>
    %584 = arith.mulf %583, %581 : vector<16x128xf32>
    %cst_428 = arith.constant dense<0.000000e+00> : vector<128xf32>
    %585 = vector.multi_reduction <add>, %584, %cst_428 [0] : vector<16x128xf32> to vector<128xf32>
    %586 = vector.shape_cast %585 : vector<128xf32> to vector<1x128xf32>
    %c9_429 = arith.constant 9 : index
    %c0_430 = arith.constant 0 : index
    %587 = vector.load %arg19[%c9_429, %c0_430] : memref<16x128xf32, #tpu.memory_space<vmem>>, vector<1x128xf32>
    tpu.vector_store %arg19[%c9_429, %c0_430], %586 {strides = array<i32>} : memref<16x128xf32, #tpu.memory_space<vmem>>, vector<1x128xf32>,
    %c10_431 = arith.constant 10 : index
    %c0_432 = arith.constant 0 : index
    %c0_433 = arith.constant 0 : index
    %588 = vector.load %arg16[%c10_431, %c0_432, %c0_433] : memref<16x16x128xf32, #tpu.memory_space<vmem>>, vector<1x16x128xf32>
    %589 = vector.shape_cast %588 : vector<1x16x128xf32> to vector<16x128xf32>
    %590 = arith.mulf %589, %581 : vector<16x128xf32>
    %c10_434 = arith.constant 10 : index
    %c0_435 = arith.constant 0 : index
    %c0_436 = arith.constant 0 : index
    %591 = vector.load %arg17[%c10_434, %c0_435, %c0_436] : memref<16x16x128xf32, #tpu.memory_space<vmem>>, vector<1x16x128xf32>
    %592 = vector.shape_cast %591 : vector<1x16x128xf32> to vector<16x128xf32>
    %593 = arith.addf %590, %592 : vector<16x128xf32>
    %c10_437 = arith.constant 10 : index
    %c0_438 = arith.constant 0 : index
    %c0_439 = arith.constant 0 : index
    %594 = vector.load %arg18[%c10_437, %c0_438, %c0_439] : memref<16x16x128xf32, #tpu.memory_space<vmem>>, vector<1x16x128xf32>
    %595 = vector.shape_cast %594 : vector<1x16x128xf32> to vector<16x128xf32>
    %596 = arith.mulf %595, %593 : vector<16x128xf32>
    %cst_440 = arith.constant dense<0.000000e+00> : vector<128xf32>
    %597 = vector.multi_reduction <add>, %596, %cst_440 [0] : vector<16x128xf32> to vector<128xf32>
    %598 = vector.shape_cast %597 : vector<128xf32> to vector<1x128xf32>
    %c10_441 = arith.constant 10 : index
    %c0_442 = arith.constant 0 : index
    %599 = vector.load %arg19[%c10_441, %c0_442] : memref<16x128xf32, #tpu.memory_space<vmem>>, vector<1x128xf32>
    tpu.vector_store %arg19[%c10_441, %c0_442], %598 {strides = array<i32>} : memref<16x128xf32, #tpu.memory_space<vmem>>, vector<1x128xf32>,
    %c11_443 = arith.constant 11 : index
    %c0_444 = arith.constant 0 : index
    %c0_445 = arith.constant 0 : index
    %600 = vector.load %arg16[%c11_443, %c0_444, %c0_445] : memref<16x16x128xf32, #tpu.memory_space<vmem>>, vector<1x16x128xf32>
    %601 = vector.shape_cast %600 : vector<1x16x128xf32> to vector<16x128xf32>
    %602 = arith.mulf %601, %593 : vector<16x128xf32>
    %c11_446 = arith.constant 11 : index
    %c0_447 = arith.constant 0 : index
    %c0_448 = arith.constant 0 : index
    %603 = vector.load %arg17[%c11_446, %c0_447, %c0_448] : memref<16x16x128xf32, #tpu.memory_space<vmem>>, vector<1x16x128xf32>
    %604 = vector.shape_cast %603 : vector<1x16x128xf32> to vector<16x128xf32>
    %605 = arith.addf %602, %604 : vector<16x128xf32>
    %c11_449 = arith.constant 11 : index
    %c0_450 = arith.constant 0 : index
    %c0_451 = arith.constant 0 : index
    %606 = vector.load %arg18[%c11_449, %c0_450, %c0_451] : memref<16x16x128xf32, #tpu.memory_space<vmem>>, vector<1x16x128xf32>
    %607 = vector.shape_cast %606 : vector<1x16x128xf32> to vector<16x128xf32>
    %608 = arith.mulf %607, %605 : vector<16x128xf32>
    %cst_452 = arith.constant dense<0.000000e+00> : vector<128xf32>
    %609 = vector.multi_reduction <add>, %608, %cst_452 [0] : vector<16x128xf32> to vector<128xf32>
    %610 = vector.shape_cast %609 : vector<128xf32> to vector<1x128xf32>
    %c11_453 = arith.constant 11 : index
    %c0_454 = arith.constant 0 : index
    %611 = vector.load %arg19[%c11_453, %c0_454] : memref<16x128xf32, #tpu.memory_space<vmem>>, vector<1x128xf32>
    tpu.vector_store %arg19[%c11_453, %c0_454], %610 {strides = array<i32>} : memref<16x128xf32, #tpu.memory_space<vmem>>, vector<1x128xf32>,
    %c12_455 = arith.constant 12 : index
    %c0_456 = arith.constant 0 : index
    %c0_457 = arith.constant 0 : index
    %612 = vector.load %arg16[%c12_455, %c0_456, %c0_457] : memref<16x16x128xf32, #tpu.memory_space<vmem>>, vector<1x16x128xf32>
    %613 = vector.shape_cast %612 : vector<1x16x128xf32> to vector<16x128xf32>
    %614 = arith.mulf %613, %605 : vector<16x128xf32>
    %c12_458 = arith.constant 12 : index
    %c0_459 = arith.constant 0 : index
    %c0_460 = arith.constant 0 : index
    %615 = vector.load %arg17[%c12_458, %c0_459, %c0_460] : memref<16x16x128xf32, #tpu.memory_space<vmem>>, vector<1x16x128xf32>
    %616 = vector.shape_cast %615 : vector<1x16x128xf32> to vector<16x128xf32>
    %617 = arith.addf %614, %616 : vector<16x128xf32>
    %c12_461 = arith.constant 12 : index
    %c0_462 = arith.constant 0 : index
    %c0_463 = arith.constant 0 : index
    %618 = vector.load %arg18[%c12_461, %c0_462, %c0_463] : memref<16x16x128xf32, #tpu.memory_space<vmem>>, vector<1x16x128xf32>
    %619 = vector.shape_cast %618 : vector<1x16x128xf32> to vector<16x128xf32>
    %620 = arith.mulf %619, %617 : vector<16x128xf32>
    %cst_464 = arith.constant dense<0.000000e+00> : vector<128xf32>
    %621 = vector.multi_reduction <add>, %620, %cst_464 [0] : vector<16x128xf32> to vector<128xf32>
    %622 = vector.shape_cast %621 : vector<128xf32> to vector<1x128xf32>
    %c12_465 = arith.constant 12 : index
    %c0_466 = arith.constant 0 : index
    %623 = vector.load %arg19[%c12_465, %c0_466] : memref<16x128xf32, #tpu.memory_space<vmem>>, vector<1x128xf32>
    tpu.vector_store %arg19[%c12_465, %c0_466], %622 {strides = array<i32>} : memref<16x128xf32, #tpu.memory_space<vmem>>, vector<1x128xf32>,
    %c13_467 = arith.constant 13 : index
    %c0_468 = arith.constant 0 : index
    %c0_469 = arith.constant 0 : index
    %624 = vector.load %arg16[%c13_467, %c0_468, %c0_469] : memref<16x16x128xf32, #tpu.memory_space<vmem>>, vector<1x16x128xf32>
    %625 = vector.shape_cast %624 : vector<1x16x128xf32> to vector<16x128xf32>
    %626 = arith.mulf %625, %617 : vector<16x128xf32>
    %c13_470 = arith.constant 13 : index
    %c0_471 = arith.constant 0 : index
    %c0_472 = arith.constant 0 : index
    %627 = vector.load %arg17[%c13_470, %c0_471, %c0_472] : memref<16x16x128xf32, #tpu.memory_space<vmem>>, vector<1x16x128xf32>
    %628 = vector.shape_cast %627 : vector<1x16x128xf32> to vector<16x128xf32>
    %629 = arith.addf %626, %628 : vector<16x128xf32>
    %c13_473 = arith.constant 13 : index
    %c0_474 = arith.constant 0 : index
    %c0_475 = arith.constant 0 : index
    %630 = vector.load %arg18[%c13_473, %c0_474, %c0_475] : memref<16x16x128xf32, #tpu.memory_space<vmem>>, vector<1x16x128xf32>
    %631 = vector.shape_cast %630 : vector<1x16x128xf32> to vector<16x128xf32>
    %632 = arith.mulf %631, %629 : vector<16x128xf32>
    %cst_476 = arith.constant dense<0.000000e+00> : vector<128xf32>
    %633 = vector.multi_reduction <add>, %632, %cst_476 [0] : vector<16x128xf32> to vector<128xf32>
    %634 = vector.shape_cast %633 : vector<128xf32> to vector<1x128xf32>
    %c13_477 = arith.constant 13 : index
    %c0_478 = arith.constant 0 : index
    %635 = vector.load %arg19[%c13_477, %c0_478] : memref<16x128xf32, #tpu.memory_space<vmem>>, vector<1x128xf32>
    tpu.vector_store %arg19[%c13_477, %c0_478], %634 {strides = array<i32>} : memref<16x128xf32, #tpu.memory_space<vmem>>, vector<1x128xf32>,
    %c14_479 = arith.constant 14 : index
    %c0_480 = arith.constant 0 : index
    %c0_481 = arith.constant 0 : index
    %636 = vector.load %arg16[%c14_479, %c0_480, %c0_481] : memref<16x16x128xf32, #tpu.memory_space<vmem>>, vector<1x16x128xf32>
    %637 = vector.shape_cast %636 : vector<1x16x128xf32> to vector<16x128xf32>
    %638 = arith.mulf %637, %629 : vector<16x128xf32>
    %c14_482 = arith.constant 14 : index
    %c0_483 = arith.constant 0 : index
    %c0_484 = arith.constant 0 : index
    %639 = vector.load %arg17[%c14_482, %c0_483, %c0_484] : memref<16x16x128xf32, #tpu.memory_space<vmem>>, vector<1x16x128xf32>
    %640 = vector.shape_cast %639 : vector<1x16x128xf32> to vector<16x128xf32>
    %641 = arith.addf %638, %640 : vector<16x128xf32>
    %c14_485 = arith.constant 14 : index
    %c0_486 = arith.constant 0 : index
    %c0_487 = arith.constant 0 : index
    %642 = vector.load %arg18[%c14_485, %c0_486, %c0_487] : memref<16x16x128xf32, #tpu.memory_space<vmem>>, vector<1x16x128xf32>
    %643 = vector.shape_cast %642 : vector<1x16x128xf32> to vector<16x128xf32>
    %644 = arith.mulf %643, %641 : vector<16x128xf32>
    %cst_488 = arith.constant dense<0.000000e+00> : vector<128xf32>
    %645 = vector.multi_reduction <add>, %644, %cst_488 [0] : vector<16x128xf32> to vector<128xf32>
    %646 = vector.shape_cast %645 : vector<128xf32> to vector<1x128xf32>
    %c14_489 = arith.constant 14 : index
    %c0_490 = arith.constant 0 : index
    %647 = vector.load %arg19[%c14_489, %c0_490] : memref<16x128xf32, #tpu.memory_space<vmem>>, vector<1x128xf32>
    tpu.vector_store %arg19[%c14_489, %c0_490], %646 {strides = array<i32>} : memref<16x128xf32, #tpu.memory_space<vmem>>, vector<1x128xf32>,
    %c15_491 = arith.constant 15 : index
    %c0_492 = arith.constant 0 : index
    %c0_493 = arith.constant 0 : index
    %648 = vector.load %arg16[%c15_491, %c0_492, %c0_493] : memref<16x16x128xf32, #tpu.memory_space<vmem>>, vector<1x16x128xf32>
    %649 = vector.shape_cast %648 : vector<1x16x128xf32> to vector<16x128xf32>
    %650 = arith.mulf %649, %641 : vector<16x128xf32>
    %c15_494 = arith.constant 15 : index
    %c0_495 = arith.constant 0 : index
    %c0_496 = arith.constant 0 : index
    %651 = vector.load %arg17[%c15_494, %c0_495, %c0_496] : memref<16x16x128xf32, #tpu.memory_space<vmem>>, vector<1x16x128xf32>
    %652 = vector.shape_cast %651 : vector<1x16x128xf32> to vector<16x128xf32>
    %653 = arith.addf %650, %652 : vector<16x128xf32>
    %c15_497 = arith.constant 15 : index
    %c0_498 = arith.constant 0 : index
    %c0_499 = arith.constant 0 : index
    %654 = vector.load %arg18[%c15_497, %c0_498, %c0_499] : memref<16x16x128xf32, #tpu.memory_space<vmem>>, vector<1x16x128xf32>
    %655 = vector.shape_cast %654 : vector<1x16x128xf32> to vector<16x128xf32>
    %656 = arith.mulf %655, %653 : vector<16x128xf32>
    %cst_500 = arith.constant dense<0.000000e+00> : vector<128xf32>
    %657 = vector.multi_reduction <add>, %656, %cst_500 [0] : vector<16x128xf32> to vector<128xf32>
    %658 = vector.shape_cast %657 : vector<128xf32> to vector<1x128xf32>
    %c15_501 = arith.constant 15 : index
    %c0_502 = arith.constant 0 : index
    %659 = vector.load %arg19[%c15_501, %c0_502] : memref<16x128xf32, #tpu.memory_space<vmem>>, vector<1x128xf32>
    tpu.vector_store %arg19[%c15_501, %c0_502], %658 {strides = array<i32>} : memref<16x128xf32, #tpu.memory_space<vmem>>, vector<1x128xf32>,
    %c0_503 = arith.constant 0 : index
    %c0_504 = arith.constant 0 : index
    %660 = vector.load %arg19[%c0_503, %c0_504] : memref<16x128xf32, #tpu.memory_space<vmem>>, vector<16x128xf32>
    %661 = vector.broadcast %357 : vector<1x128xf32> to vector<16x128xf32>
    %662 = arith.mulf %661, %408 : vector<16x128xf32>
    %663 = arith.addf %660, %662 : vector<16x128xf32>
    %664 = math.absf %375 : vector<16x128xf32>
    %cst_505 = arith.constant 0.000000e+00 : f32
    %665 = vector.broadcast %cst_505 : f32 to vector<16x128xf32>
    %666 = arith.subf %665, %664 : vector<16x128xf32>
    %667 = math.exp %666 : vector<16x128xf32>
    %cst_506 = arith.constant 0.000000e+00 : f32
    %668 = vector.broadcast %cst_506 : f32 to vector<16x128xf32>
    %669 = arith.cmpf oge, %375, %668 : vector<16x128xf32>
    %cst_507 = arith.constant 1.000000e+00 : f32
    %670 = vector.broadcast %cst_507 : f32 to vector<16x128xf32>
    %671 = arith.select %669, %670, %667 : vector<16x128xi1>, vector<16x128xf32>
    %cst_508 = arith.constant 1.000000e+00 : f32
    %672 = vector.broadcast %cst_508 : f32 to vector<16x128xf32>
    %673 = arith.addf %672, %667 : vector<16x128xf32>
    %674 = arith.divf %671, %673 : vector<16x128xf32>
    %675 = arith.mulf %375, %674 : vector<16x128xf32>
    %676 = arith.mulf %663, %675 : vector<16x128xf32>
    %cst_509 = arith.constant dense<0.000000e+00> : vector<16x64xf32>
    %677 = tpu.matmul %676, %359, %cst_509 {dimension_numbers = #tpu.dot_dimension_numbers<[1], [0], [0], [1], [0, 0, 1, 1], [], []>} : vector<16x128xf32>, vector<128x64xf32>, vector<16x64xf32> -> vector<16x64xf32>
    %678 = arith.addf %677, %360 : vector<16x64xf32>
    %c0_510 = arith.constant 0 : index
    %c0_511 = arith.constant 0 : index
    %679 = vector.load %arg13[%c0_510, %c0_511] : memref<1x64xf32, #tpu.memory_space<vmem>>, vector<1x64xf32>
    %c0_512 = arith.constant 0 : index
    %c0_513 = arith.constant 0 : index
    %680 = vector.load %arg14[%c0_512, %c0_513] : memref<1x64xf32, #tpu.memory_space<vmem>>, vector<1x64xf32>
    %cst_514 = arith.constant dense<0.000000e+00> : vector<16x64xf32>
    %681 = tpu.matmul %678, %0, %cst_514 {dimension_numbers = #tpu.dot_dimension_numbers<[1], [0], [0], [1], [0, 0, 1, 1], [], []>} : vector<16x64xf32>, vector<64x64xf32>, vector<16x64xf32> -> vector<16x64xf32>
    %682 = arith.subf %678, %681 : vector<16x64xf32>
    %683 = arith.mulf %682, %682 : vector<16x64xf32>
    %cst_515 = arith.constant dense<0.000000e+00> : vector<16x64xf32>
    %684 = tpu.matmul %683, %0, %cst_515 {dimension_numbers = #tpu.dot_dimension_numbers<[1], [0], [0], [1], [0, 0, 1, 1], [], []>} : vector<16x64xf32>, vector<64x64xf32>, vector<16x64xf32> -> vector<16x64xf32>
    %cst_516 = arith.constant 9.99999974E-6 : f32
    %685 = vector.broadcast %cst_516 : f32 to vector<16x64xf32>
    %686 = arith.addf %684, %685 : vector<16x64xf32>
    %687 = math.rsqrt %686 : vector<16x64xf32>
    %688 = arith.mulf %682, %687 : vector<16x64xf32>
    %689 = vector.broadcast %679 : vector<1x64xf32> to vector<16x64xf32>
    %690 = arith.mulf %688, %689 : vector<16x64xf32>
    %691 = vector.broadcast %680 : vector<1x64xf32> to vector<16x64xf32>
    %692 = arith.addf %690, %691 : vector<16x64xf32>
    %c0_517 = arith.constant 0 : index
    %c0_518 = arith.constant 0 : index
    %693 = vector.load %arg15[%c0_517, %c0_518] : memref<16x64xf32, #tpu.memory_space<vmem>>, vector<16x64xf32>
    tpu.vector_store %arg15[%c0_517, %c0_518], %692 {strides = array<i32>} : memref<16x64xf32, #tpu.memory_space<vmem>>, vector<16x64xf32>,
    return
  }
}

</mosaic_0001>

<llo_original>
// kernel: mamba_blocks_forward.1
$region0: #{mamba_blocks_forward.1}
  #allocation0 [shape = 'u32[]', space=smem, size = 0x4, offset = 0x4, fixed_abs, tag = 'smem constant byte address 0x4 - core index']
  #allocation1 [shape = 'u32[72,128]{1,0:T(1,128)}', space=vmem, size = 0x9000, scoped, tag = 'internal scratch']
  #allocation2 [shape = 'f32[16,16,128]{2,1,0:T(8,128)}', space=vmem, size = 0x20000, scoped, tag = 'scratch operand']
  #allocation3 [shape = 'f32[16,16,128]{2,1,0:T(8,128)}', space=vmem, size = 0x20000, scoped, tag = 'scratch operand']
  #allocation4 [shape = 'f32[16,16,128]{2,1,0:T(8,128)}', space=vmem, size = 0x20000, scoped, tag = 'scratch operand']
  #allocation5 [shape = 'f32[16,128]{1,0:T(8,128)}', space=vmem, size = 0x2000, scoped, tag = 'scratch operand']
  %s0 = inlined_call_operand.vmem [shape: f32[16,64], index: 0, kind: input, shape index: {}]
  %s1 = inlined_call_operand.vmem [shape: f32[64,64], index: 1, kind: input, shape index: {}]
  %s2 = inlined_call_operand.vmem [shape: f32[48,16], index: 2, kind: input, shape index: {}]
  %s3 = inlined_call_operand.vmem [shape: f32[2,1,64], index: 3, kind: input, shape index: {}]
  %s4 = inlined_call_operand.vmem [shape: f32[2,1,64], index: 4, kind: input, shape index: {}]
  %s5 = inlined_call_operand.vmem [shape: f32[2,64,256], index: 5, kind: input, shape index: {}]
  %s6 = inlined_call_operand.vmem [shape: f32[2,4,128], index: 6, kind: input, shape index: {}]
  %s7 = inlined_call_operand.vmem [shape: f32[2,1,128], index: 7, kind: input, shape index: {}]
  %s8 = inlined_call_operand.vmem [shape: f32[2,128,192], index: 8, kind: input, shape index: {}]
  %s9 = inlined_call_operand.vmem [shape: f32[2,1,128], index: 9, kind: input, shape index: {}]
  %s10 = inlined_call_operand.vmem [shape: f32[2,16,128], index: 10, kind: input, shape index: {}]
  %s11 = inlined_call_operand.vmem [shape: f32[2,1,128], index: 11, kind: input, shape index: {}]
  %s12 = inlined_call_operand.vmem [shape: f32[2,128,64], index: 12, kind: input, shape index: {}]
  %s13 = inlined_call_operand.vmem [shape: f32[1,64], index: 13, kind: input, shape index: {}]
  %s14 = inlined_call_operand.vmem [shape: f32[1,64], index: 14, kind: input, shape index: {}]
  %s15 = inlined_call_operand.vmem [shape: f32[16,64], index: 15, kind: output, shape index: {}]
  %s16 = sld [smem:[#allocation0]]
  $region70: #{mamba_blocks_forward.1} parent=0
    _
  %s18 = ssub.s32 1, %s16
  %s19 = scalar_select 0, %s18, %s16
  // Predicated region
  $region2: #{mamba_blocks_forward.1} parent=0 // pred_check
    _
  $region3: #{mamba_blocks_forward.1} parent=0 // pred_check_branch
    %21 = sbr.rel (0) target = $region5
  $region4: #{mamba_blocks_forward.1} parent=0 // pred_region
    _
  $region5: #{mamba_blocks_forward.1} parent=0 // pred_fallthru
    _
  // Predicated region
  $region6: #{mamba_blocks_forward.1} parent=0 // pred_check
    _
  $region7: #{mamba_blocks_forward.1} parent=0 // pred_check_branch
    %23 = sbr.rel (0) target = $region9
  $region8: #{mamba_blocks_forward.1} parent=0 // pred_region
    _
  $region9: #{mamba_blocks_forward.1} parent=0 // pred_fallthru
    _
  // Predicated region
  $region10: #{mamba_blocks_forward.1} parent=0 // pred_check
    _
  $region11: #{mamba_blocks_forward.1} parent=0 // pred_check_branch
    %25 = sbr.rel (0) target = $region13
  $region12: #{mamba_blocks_forward.1} parent=0 // pred_region
    _
  $region13: #{mamba_blocks_forward.1} parent=0 // pred_fallthru
    _
  // Predicated region
  $region14: #{mamba_blocks_forward.1} parent=0 // pred_check
    _
  $region15: #{mamba_blocks_forward.1} parent=0 // pred_check_branch
    %27 = sbr.rel (0) target = $region17
  $region16: #{mamba_blocks_forward.1} parent=0 // pred_region
    _
  $region17: #{mamba_blocks_forward.1} parent=0 // pred_fallthru
    _
  // Predicated region
  $region18: #{mamba_blocks_forward.1} parent=0 // pred_check
    _
  $region19: #{mamba_blocks_forward.1} parent=0 // pred_check_branch
    %29 = sbr.rel (0) target = $region21
  $region20: #{mamba_blocks_forward.1} parent=0 // pred_region
    _
  $region21: #{mamba_blocks_forward.1} parent=0 // pred_fallthru
    _
  // Predicated region
  $region22: #{mamba_blocks_forward.1} parent=0 // pred_check
    _
  $region23: #{mamba_blocks_forward.1} parent=0 // pred_check_branch
    %31 = sbr.rel (0) target = $region25
  $region24: #{mamba_blocks_forward.1} parent=0 // pred_region
    _
  $region25: #{mamba_blocks_forward.1} parent=0 // pred_fallthru
    _
  // Predicated region
  $region26: #{mamba_blocks_forward.1} parent=0 // pred_check
    _
  $region27: #{mamba_blocks_forward.1} parent=0 // pred_check_branch
    %33 = sbr.rel (0) target = $region29
  $region28: #{mamba_blocks_forward.1} parent=0 // pred_region
    _
  $region29: #{mamba_blocks_forward.1} parent=0 // pred_fallthru
    _
  // Predicated region
  $region30: #{mamba_blocks_forward.1} parent=0 // pred_check
    _
  $region31: #{mamba_blocks_forward.1} parent=0 // pred_check_branch
    %35 = sbr.rel (0) target = $region33
  $region32: #{mamba_blocks_forward.1} parent=0 // pred_region
    _
  $region33: #{mamba_blocks_forward.1} parent=0 // pred_fallthru
    _
  // Predicated region
  $region34: #{mamba_blocks_forward.1} parent=0 // pred_check
    _
  $region35: #{mamba_blocks_forward.1} parent=0 // pred_check_branch
    %37 = sbr.rel (0) target = $region37
  $region36: #{mamba_blocks_forward.1} parent=0 // pred_region
    _
  $region37: #{mamba_blocks_forward.1} parent=0 // pred_fallthru
    _
  // Predicated region
  $region38: #{mamba_blocks_forward.1} parent=0 // pred_check
    _
  $region39: #{mamba_blocks_forward.1} parent=0 // pred_check_branch
    %39 = sbr.rel (0) target = $region41
  $region40: #{mamba_blocks_forward.1} parent=0 // pred_region
    _
  $region41: #{mamba_blocks_forward.1} parent=0 // pred_fallthru
    _
  // Predicated region
  $region42: #{mamba_blocks_forward.1} parent=0 // pred_check
    _
  $region43: #{mamba_blocks_forward.1} parent=0 // pred_check_branch
    %41 = sbr.rel (0) target = $region45
  $region44: #{mamba_blocks_forward.1} parent=0 // pred_region
    _
  $region45: #{mamba_blocks_forward.1} parent=0 // pred_fallthru
    _
  // Predicated region
  $region46: #{mamba_blocks_forward.1} parent=0 // pred_check
    _
  $region47: #{mamba_blocks_forward.1} parent=0 // pred_check_branch
    %43 = sbr.rel (0) target = $region49
  $region48: #{mamba_blocks_forward.1} parent=0 // pred_region
    _
  $region49: #{mamba_blocks_forward.1} parent=0 // pred_fallthru
    _
  // Predicated region
  $region50: #{mamba_blocks_forward.1} parent=0 // pred_check
    _
  $region51: #{mamba_blocks_forward.1} parent=0 // pred_check_branch
    %45 = sbr.rel (0) target = $region53
  $region52: #{mamba_blocks_forward.1} parent=0 // pred_region
    _
  $region53: #{mamba_blocks_forward.1} parent=0 // pred_fallthru
    _
  // Predicated region
  $region54: #{mamba_blocks_forward.1} parent=0 // pred_check
    _
  $region55: #{mamba_blocks_forward.1} parent=0 // pred_check_branch
    %47 = sbr.rel (0) target = $region57
  $region56: #{mamba_blocks_forward.1} parent=0 // pred_region
    _
  $region57: #{mamba_blocks_forward.1} parent=0 // pred_fallthru
    _
  // Predicated region
  $region58: #{mamba_blocks_forward.1} parent=0 // pred_check
    _
  $region59: #{mamba_blocks_forward.1} parent=0 // pred_check_branch
    %49 = sbr.rel (0) target = $region61
  $region60: #{mamba_blocks_forward.1} parent=0 // pred_region
    _
  $region61: #{mamba_blocks_forward.1} parent=0 // pred_fallthru
    _
  %v50 = vld [vmem:[%s1] sm:$0xff]
  %v51 = vld [vmem:[%s1 + $0x8] sm:$0xff]
  %v52 = vld [vmem:[%s1 + $0x10] sm:$0xff]
  %v53 = vld [vmem:[%s1 + $0x18] sm:$0xff]
  %v54 = vld [vmem:[%s1 + $0x20] sm:$0xff]
  %v55 = vld [vmem:[%s1 + $0x28] sm:$0xff]
  %v56 = vld [vmem:[%s1 + $0x30] sm:$0xff]
  %v57 = vld [vmem:[%s1 + $0x38] sm:$0xff]
  %v58 = vld [vmem:[%s2] sm:$0xff]
  %v59 = vld [vmem:[%s2 + $0x8] sm:$0xff]
  %v60 = vld [vmem:[%s2 + $0x10] sm:$0xff]
  %v61 = vld [vmem:[%s2 + $0x18] sm:$0xff]
  %v62 = vld [vmem:[%s2 + $0x20] sm:$0xff]
  %v63 = vld [vmem:[%s2 + $0x28] sm:$0xff]
  %v64 = vld [vmem:[%s0] sm:$0xff]
  %v65 = vld [vmem:[%s0 + $0x8] sm:$0xff]
  %v66 = vld [vmem:[%s3] sm:$0x1]
  %v67 = vld [vmem:[%s4] sm:$0x1]
  %v68 = vld [vmem:[%s5] sm:$0xff]
  %v69 = vld [vmem:[%s5 + $0x8] sm:$0xff]
  %v70 = vld [vmem:[%s5 + $0x10] sm:$0xff]
  %v71 = vld [vmem:[%s5 + $0x18] sm:$0xff]
  %v72 = vld [vmem:[%s5 + $0x20] sm:$0xff]
  %v73 = vld [vmem:[%s5 + $0x28] sm:$0xff]
  %v74 = vld [vmem:[%s5 + $0x30] sm:$0xff]
  %v75 = vld [vmem:[%s5 + $0x38] sm:$0xff]
  %v76 = vld [vmem:[%s5 + $0x40] sm:$0xff]
  %v77 = vld [vmem:[%s5 + $0x48] sm:$0xff]
  %v78 = vld [vmem:[%s5 + $0x50] sm:$0xff]
  %v79 = vld [vmem:[%s5 + $0x58] sm:$0xff]
  %v80 = vld [vmem:[%s5 + $0x60] sm:$0xff]
  %v81 = vld [vmem:[%s5 + $0x68] sm:$0xff]
  %v82 = vld [vmem:[%s5 + $0x70] sm:$0xff]
  %v83 = vld [vmem:[%s5 + $0x78] sm:$0xff]
  %v84 = vld [vmem:[%s6] sm:$0xf]
  %v85 = vld [vmem:[%s7] sm:$0x1]
  %v86 = vld [vmem:[%s8] sm:$0xff]
  %v87 = vld [vmem:[%s8 + $0x8] sm:$0xff]
  %v88 = vld [vmem:[%s8 + $0x10] sm:$0xff]
  %v89 = vld [vmem:[%s8 + $0x18] sm:$0xff]
  %v90 = vld [vmem:[%s8 + $0x20] sm:$0xff]
  %v91 = vld [vmem:[%s8 + $0x28] sm:$0xff]
  %v92 = vld [vmem:[%s8 + $0x30] sm:$0xff]
  %v93 = vld [vmem:[%s8 + $0x38] sm:$0xff]
  %v94 = vld [vmem:[%s8 + $0x40] sm:$0xff]
  %v95 = vld [vmem:[%s8 + $0x48] sm:$0xff]
  %v96 = vld [vmem:[%s8 + $0x50] sm:$0xff]
  %v97 = vld [vmem:[%s8 + $0x58] sm:$0xff]
  %v98 = vld [vmem:[%s8 + $0x60] sm:$0xff]
  %v99 = vld [vmem:[%s8 + $0x68] sm:$0xff]
  %v100 = vld [vmem:[%s8 + $0x70] sm:$0xff]
  %v101 = vld [vmem:[%s8 + $0x78] sm:$0xff]
  %v102 = vld [vmem:[%s8 + $0x80] sm:$0xff]
  %v103 = vld [vmem:[%s8 + $0x88] sm:$0xff]
  %v104 = vld [vmem:[%s8 + $0x90] sm:$0xff]
  %v105 = vld [vmem:[%s8 + $0x98] sm:$0xff]
  %v106 = vld [vmem:[%s8 + $0xa0] sm:$0xff]
  %v107 = vld [vmem:[%s8 + $0xa8] sm:$0xff]
  %v108 = vld [vmem:[%s8 + $0xb0] sm:$0xff]
  %v109 = vld [vmem:[%s8 + $0xb8] sm:$0xff]
  %v110 = vld [vmem:[%s8 + $0xc0] sm:$0xff]
  %v111 = vld [vmem:[%s8 + $0xc8] sm:$0xff]
  %v112 = vld [vmem:[%s8 + $0xd0] sm:$0xff]
  %v113 = vld [vmem:[%s8 + $0xd8] sm:$0xff]
  %v114 = vld [vmem:[%s8 + $0xe0] sm:$0xff]
  %v115 = vld [vmem:[%s8 + $0xe8] sm:$0xff]
  %v116 = vld [vmem:[%s8 + $0xf0] sm:$0xff]
  %v117 = vld [vmem:[%s8 + $0xf8] sm:$0xff]
  %v118 = vld [vmem:[%s9] sm:$0x1]
  %v119 = vld [vmem:[%s10] sm:$0xff]
  %v120 = vld [vmem:[%s10 + $0x8] sm:$0xff]
  %v121 = vld [vmem:[%s11] sm:$0x1]
  %v122 = vld [vmem:[%s12] sm:$0xff]
  %v123 = vld [vmem:[%s12 + $0x8] sm:$0xff]
  %v124 = vld [vmem:[%s12 + $0x10] sm:$0xff]
  %v125 = vld [vmem:[%s12 + $0x18] sm:$0xff]
  %v126 = vld [vmem:[%s12 + $0x20] sm:$0xff]
  %v127 = vld [vmem:[%s12 + $0x28] sm:$0xff]
  %v128 = vld [vmem:[%s12 + $0x30] sm:$0xff]
  %v129 = vld [vmem:[%s12 + $0x38] sm:$0xff]
  %v130 = vld [vmem:[%s12 + $0x40] sm:$0xff]
  %v131 = vld [vmem:[%s12 + $0x48] sm:$0xff]
  %v132 = vld [vmem:[%s12 + $0x50] sm:$0xff]
  %v133 = vld [vmem:[%s12 + $0x58] sm:$0xff]
  %v134 = vld [vmem:[%s12 + $0x60] sm:$0xff]
  %v135 = vld [vmem:[%s12 + $0x68] sm:$0xff]
  %v136 = vld [vmem:[%s12 + $0x70] sm:$0xff]
  %v137 = vld [vmem:[%s12 + $0x78] sm:$0xff]
  %vm138 = vcmask 523264
  %v140 = vsel %vm138, %v64, 0
  %v143 = vsel %vm138, %v65, 0
  %145 = vmatpush.msra.mxu0 0.0
  %146 = vmatpush.msra.mxu0 0.0
  %147 = vmatpush.msra.mxu0 0.0
  %148 = vmatpush.msra.mxu0 0.0
  %149 = vmatpush.msra.mxu0 0.0
  %150 = vmatpush.msra.mxu0 0.0
  %151 = vmatpush.msra.mxu0 0.0
  %152 = vmatpush.msra.mxu0 0.0
  %153 = vmatpush.msra.mxu0 %v57
  %154 = vmatpush.msra.mxu0 %v56
  %155 = vmatpush.msra.mxu0 %v55
  %156 = vmatpush.msra.mxu0 %v54
  %157 = vmatpush.msra.mxu0 %v53
  %158 = vmatpush.msra.mxu0 %v52
  %159 = vmatpush.msra.mxu0 %v51
  %160 = vmatpush.msra.mxu0 %v50
  %161 = vmatmul.f32.gmra.mxu0 %v140
  %v162 = vpop.f32.mrf.mxu0
  %v163 = vadd.f32 0.0, %v162
  %164 = vmatmul.f32.gmra.mxu0 %v143
  %v165 = vpop.f32.mrf.mxu0
  %v166 = vadd.f32 0.0, %v165
  %167 = vdwg.mxu0
  %v168 = vsub.f32 %v64, %v163
  %v169 = vsub.f32 %v65, %v166
  %v170 = vmul.f32 %v168, %v168
  %v171 = vmul.f32 %v169, %v169
  %v173 = vsel %vm138, %v170, 0
  %v176 = vsel %vm138, %v171, 0
  %178 = vmatpush.msra.mxu0 0.0
  %179 = vmatpush.msra.mxu0 0.0
  %180 = vmatpush.msra.mxu0 0.0
  %181 = vmatpush.msra.mxu0 0.0
  %182 = vmatpush.msra.mxu0 0.0
  %183 = vmatpush.msra.mxu0 0.0
  %184 = vmatpush.msra.mxu0 0.0
  %185 = vmatpush.msra.mxu0 0.0
  %186 = vmatpush.msra.mxu0 %v57
  %187 = vmatpush.msra.mxu0 %v56
  %188 = vmatpush.msra.mxu0 %v55
  %189 = vmatpush.msra.mxu0 %v54
  %190 = vmatpush.msra.mxu0 %v53
  %191 = vmatpush.msra.mxu0 %v52
  %192 = vmatpush.msra.mxu0 %v51
  %193 = vmatpush.msra.mxu0 %v50
  %194 = vmatmul.f32.gmra.mxu0 %v173
  %v195 = vpop.f32.mrf.mxu0
  %v196 = vadd.f32 1e-05, %v195
  %197 = vmatmul.f32.gmra.mxu0 %v176
  %v198 = vpop.f32.mrf.mxu0
  %v199 = vadd.f32 1e-05, %v198
  %200 = vdwg.mxu0
  %v201 = vrsqrt.pop %v196
  %v202 = vmul.f32 %v201, %v196
  %v203 = vmul.f32 %v202, %v201
  %v204 = vmul.f32 0.5, %v203
  %v205 = vsub.f32 1.5, %v204
  %v206 = vmul.f32 %v201, %v205
  %vm207 = vweird.f32 %v196
  %vm208 = vweird.f32 %v201
  %vm209 = vmor %vm207, %vm208
  %v210 = vsel %vm209, %v201, %v206
  %v211 = vrsqrt.pop %v199
  %v212 = vmul.f32 %v211, %v199
  %v213 = vmul.f32 %v212, %v211
  %v214 = vmul.f32 0.5, %v213
  %v215 = vsub.f32 1.5, %v214
  %v216 = vmul.f32 %v211, %v215
  %vm217 = vweird.f32 %v199
  %vm218 = vweird.f32 %v211
  %vm219 = vmor %vm217, %vm218
  %v220 = vsel %vm219, %v211, %v216
  %v221 = vmul.f32 %v168, %v210
  %v222 = vmul.f32 %v169, %v220
  %v224 = vperm.slane %v66, 0
  %v226 = vmul.f32 %v221, %v224
  %v227 = vmul.f32 %v222, %v224
  %v229 = vperm.slane %v67, 0
  %v231 = vadd.f32 %v226, %v229
  %v232 = vadd.f32 %v227, %v229
  %v234 = vsel %vm138, %v231, 0
  %v237 = vsel %vm138, %v232, 0
  %239 = vmatpush.msra.mxu0 0.0
  %240 = vmatpush.msra.mxu0 0.0
  %241 = vmatpush.msra.mxu0 0.0
  %242 = vmatpush.msra.mxu0 0.0
  %243 = vmatpush.msra.mxu0 0.0
  %244 = vmatpush.msra.mxu0 0.0
  %245 = vmatpush.msra.mxu0 0.0
  %246 = vmatpush.msra.mxu0 0.0
  %247 = vmatpush.msra.mxu0 %v82
  %248 = vmatpush.msra.mxu0 %v80
  %249 = vmatpush.msra.mxu0 %v78
  %250 = vmatpush.msra.mxu0 %v76
  %251 = vmatpush.msra.mxu0 %v74
  %252 = vmatpush.msra.mxu0 %v72
  %253 = vmatpush.msra.mxu0 %v70
  %254 = vmatpush.msra.mxu0 %v68
  %255 = vmatmul.f32.gmra.mxu0 %v234
  %v256 = vpop.f32.mrf.mxu0
  %v257 = vadd.f32 0.0, %v256
  %258 = vmatmul.f32.gmra.mxu0 %v237
  %v259 = vpop.f32.mrf.mxu0
  %v260 = vadd.f32 0.0, %v259
  %261 = vdwg.mxu0
  %262 = vmatpush.msra.mxu0 0.0
  %263 = vmatpush.msra.mxu0 0.0
  %264 = vmatpush.msra.mxu0 0.0
  %265 = vmatpush.msra.mxu0 0.0
  %266 = vmatpush.msra.mxu0 0.0
  %267 = vmatpush.msra.mxu0 0.0
  %268 = vmatpush.msra.mxu0 0.0
  %269 = vmatpush.msra.mxu0 0.0
  %270 = vmatpush.msra.mxu0 %v83
  %271 = vmatpush.msra.mxu0 %v81
  %272 = vmatpush.msra.mxu0 %v79
  %273 = vmatpush.msra.mxu0 %v77
  %274 = vmatpush.msra.mxu0 %v75
  %275 = vmatpush.msra.mxu0 %v73
  %276 = vmatpush.msra.mxu0 %v71
  %277 = vmatpush.msra.mxu0 %v69
  %278 = vmatmul.f32.gmra.mxu0 %v234
  %v279 = vpop.f32.mrf.mxu0
  %v280 = vadd.f32 0.0, %v279
  %281 = vmatmul.f32.gmra.mxu0 %v237
  %v282 = vpop.f32.mrf.mxu0
  %v283 = vadd.f32 0.0, %v282
  %284 = vdwg.mxu0
  %vm285 = vcmask 130048
  %v287 = vsel %vm285, %v58, 0
  %v290 = vsel %vm285, %v59, 0
  %v293 = vsel %vm285, %v60, 0
  %v296 = vsel %vm285, %v61, 0
  %v299 = vsel %vm285, %v62, 0
  %v302 = vsel %vm285, %v63, 0
  %304 = vmatpush.msra.mxu0 0.0
  %305 = vmatpush.msra.mxu0 0.0
  %306 = vmatpush.msra.mxu0 0.0
  %307 = vmatpush.msra.mxu0 0.0
  %308 = vmatpush.msra.mxu0 0.0
  %309 = vmatpush.msra.mxu0 0.0
  %310 = vmatpush.msra.mxu0 0.0
  %311 = vmatpush.msra.mxu0 0.0
  %312 = vmatpush.msra.mxu0 0.0
  %313 = vmatpush.msra.mxu0 0.0
  %314 = vmatpush.msra.mxu0 0.0
  %315 = vmatpush.msra.mxu0 0.0
  %316 = vmatpush.msra.mxu0 0.0
  %317 = vmatpush.msra.mxu0 0.0
  %318 = vmatpush.msra.mxu0 %v260
  %319 = vmatpush.msra.mxu0 %v257
  %320 = vmatmul.f32.gmra.mxu0 %v287
  %v321 = vpop.f32.mrf.mxu0
  %v322 = vadd.f32 0.0, %v321
  %323 = vmatmul.f32.gmra.mxu0 %v290
  %v324 = vpop.f32.mrf.mxu0
  %v325 = vadd.f32 0.0, %v324
  %326 = vmatmul.f32.gmra.mxu0 %v293
  %v327 = vpop.f32.mrf.mxu0
  %v328 = vadd.f32 0.0, %v327
  %329 = vmatmul.f32.gmra.mxu0 %v296
  %v330 = vpop.f32.mrf.mxu0
  %v331 = vadd.f32 0.0, %v330
  %332 = vmatmul.f32.gmra.mxu0 %v299
  %v333 = vpop.f32.mrf.mxu0
  %v334 = vadd.f32 0.0, %v333
  %335 = vmatmul.f32.gmra.mxu0 %v302
  %v336 = vpop.f32.mrf.mxu0
  %v337 = vadd.f32 0.0, %v336
  %338 = vdwg.mxu0
  %v339 = vperm.slane %v84, 3
  %v340 = vmul.f32 %v257, %v339
  %v341 = vmul.f32 %v260, %v339
  %v343 = vperm.slane %v85, 0
  %v345 = vadd.f32 %v343, %v340
  %v346 = vadd.f32 %v343, %v341
  %v347 = vperm.slane %v84, 0
  %v348 = vmul.f32 %v334, %v347
  %v349 = vmul.f32 %v337, %v347
  %v350 = vadd.f32 %v345, %v348
  %v351 = vadd.f32 %v346, %v349
  %v352 = vperm.slane %v84, 1
  %v353 = vmul.f32 %v328, %v352
  %v354 = vmul.f32 %v331, %v352
  %v355 = vadd.f32 %v350, %v353
  %v356 = vadd.f32 %v351, %v354
  %v357 = vperm.slane %v84, 2
  %v358 = vmul.f32 %v322, %v357
  %v359 = vmul.f32 %v325, %v357
  %v360 = vadd.f32 %v355, %v358
  %v361 = vadd.f32 %v356, %v359
  %v362 = vand.u32 2147483647, %v360
  %v363 = vand.u32 2147483647, %v361
  %v364 = vsub.f32 0.0, %v362
  %v365 = vsub.f32 0.0, %v363
  %v366 = vmul.f32 %v364, 1.442695
  %v367 = vpow.pop %v366
  %v368 = vmul.f32 %v365, 1.442695
  %v369 = vpow.pop %v368
  %vm370 = vcmp.ge.f32.partialorder %v360, 0.0
  %vm371 = vcmp.ge.f32.partialorder %v361, 0.0
  %v372 = vsel %vm370, 1.0, %v367
  %v373 = vsel %vm371, 1.0, %v369
  %v374 = vadd.f32 %v367, 1.0
  %v375 = vadd.f32 %v369, 1.0
  %v376 = vrcp.pop %v374
  %v377 = vmul.f32 %v374, %v376
  %v378 = vsub.f32 1.0, %v377
  %v379 = vmul.f32 %v376, %v378
  %v380 = vadd.f32 %v376, %v379
  %vm381 = vweird.f32 %v374
  %vm382 = vweird.f32 %v376
  %vm383 = vmor %vm381, %vm382
  %v384 = vsel %vm383, %v376, %v380
  %v385 = vand.u32 2147483647, %v374
  %vm386 = vcmp.eq.f32.partialorder %v385, 8.507059e+37
  %v387 = vand.u32 %v374, 2147483648
  %v388 = vor.u32 1.1754944e-38, %v387
  %v389 = vsel %vm386, %v388, %v384
  %v390 = vmul.f32 %v372, %v389
  %v391 = vrcp.pop %v375
  %v392 = vmul.f32 %v375, %v391
  %v393 = vsub.f32 1.0, %v392
  %v394 = vmul.f32 %v391, %v393
  %v395 = vadd.f32 %v391, %v394
  %vm396 = vweird.f32 %v375
  %vm397 = vweird.f32 %v391
  %vm398 = vmor %vm396, %vm397
  %v399 = vsel %vm398, %v391, %v395
  %v400 = vand.u32 2147483647, %v375
  %vm401 = vcmp.eq.f32.partialorder %v400, 8.507059e+37
  %v402 = vand.u32 %v375, 2147483648
  %v403 = vor.u32 1.1754944e-38, %v402
  %v404 = vsel %vm401, %v403, %v399
  %v405 = vmul.f32 %v373, %v404
  %v406 = vmul.f32 %v360, %v390
  %v407 = vmul.f32 %v361, %v405
  %408 = vmatpush.msra.mxu0 %v116
  %409 = vmatpush.msra.mxu0 %v114
  %410 = vmatpush.msra.mxu0 %v112
  %411 = vmatpush.msra.mxu0 %v110
  %412 = vmatpush.msra.mxu0 %v108
  %413 = vmatpush.msra.mxu0 %v106
  %414 = vmatpush.msra.mxu0 %v104
  %415 = vmatpush.msra.mxu0 %v102
  %416 = vmatpush.msra.mxu0 %v100
  %417 = vmatpush.msra.mxu0 %v98
  %418 = vmatpush.msra.mxu0 %v96
  %419 = vmatpush.msra.mxu0 %v94
  %420 = vmatpush.msra.mxu0 %v92
  %421 = vmatpush.msra.mxu0 %v90
  %422 = vmatpush.msra.mxu0 %v88
  %423 = vmatpush.msra.mxu0 %v86
  %424 = vmatmul.f32.gmra.mxu0 %v406
  %v425 = vpop.f32.mrf.mxu0
  %v426 = vadd.f32 0.0, %v425
  %427 = vmatmul.f32.gmra.mxu0 %v407
  %v428 = vpop.f32.mrf.mxu0
  %v429 = vadd.f32 0.0, %v428
  %430 = vdwg.mxu0
  %431 = vmatpush.msra.mxu0 %v117
  %432 = vmatpush.msra.mxu0 %v115
  %433 = vmatpush.msra.mxu0 %v113
  %434 = vmatpush.msra.mxu0 %v111
  %435 = vmatpush.msra.mxu0 %v109
  %436 = vmatpush.msra.mxu0 %v107
  %437 = vmatpush.msra.mxu0 %v105
  %438 = vmatpush.msra.mxu0 %v103
  %439 = vmatpush.msra.mxu0 %v101
  %440 = vmatpush.msra.mxu0 %v99
  %441 = vmatpush.msra.mxu0 %v97
  %442 = vmatpush.msra.mxu0 %v95
  %443 = vmatpush.msra.mxu0 %v93
  %444 = vmatpush.msra.mxu0 %v91
  %445 = vmatpush.msra.mxu0 %v89
  %446 = vmatpush.msra.mxu0 %v87
  %447 = vmatmul.f32.gmra.mxu0 %v406
  %v448 = vpop.f32.mrf.mxu0
  %v449 = vadd.f32 0.0, %v448
  %450 = vmatmul.f32.gmra.mxu0 %v407
  %v451 = vpop.f32.mrf.mxu0
  %v452 = vadd.f32 0.0, %v451
  %453 = vdwg.mxu0
  %v455 = vperm.slane %v118, 0
  %v457 = vadd.f32 %v426, %v455
  %v458 = vadd.f32 %v429, %v455
  %v459 = vmax.f32 %v457, 0.0
  %v460 = vmax.f32 %v458, 0.0
  %v461 = vand.u32 2147483647, %v457
  %v462 = vand.u32 2147483647, %v458
  %v463 = vsub.f32 0.0, %v461
  %v464 = vsub.f32 0.0, %v462
  %v465 = vmul.f32 %v463, 1.442695
  %v466 = vpow.pop %v465
  %v467 = vmul.f32 %v464, 1.442695
  %v468 = vpow.pop %v467
  %v469 = vadd.f32 %v466, 1.0
  %v470 = vadd.f32 %v468, 1.0
  %v471 = vlog2.pop %v469
  %v472 = vmul.f32 %v471, 0.6931472
  %v473 = vlog2.pop %v470
  %v474 = vmul.f32 %v473, 0.6931472
  %v475 = vadd.f32 %v459, %v472
  %v476 = vadd.f32 %v460, %v474
  %v477 = vmul.f32 %v475, %v406
  %v478 = vmul.f32 %v476, %v407
  %v480 = vrot.slane %v475, 1
  %v481 = vrot.slane %v475, 2
  %v482 = vrot.slane %v475, 3
  %v483 = vrot.slane %v475, 4
  %v484 = vrot.slane %v475, 5
  %v485 = vrot.slane %v475, 6
  %v486 = vrot.slane %v475, 7
  %v487 = vperm.slane %v475, 0
  %v488 = vperm.slane %v480, 0
  %v489 = vperm.slane %v481, 0
  %v490 = vperm.slane %v482, 0
  %v491 = vperm.slane %v483, 0
  %v492 = vperm.slane %v484, 0
  %v493 = vperm.slane %v485, 0
  %v494 = vperm.slane %v486, 0
  %v503 = vmul.f32 %v487, %v119
  %v504 = vmul.f32 %v487, %v120
  %v505 = vmul.f32 %v488, %v119
  %v506 = vmul.f32 %v488, %v120
  %v507 = vmul.f32 %v489, %v119
  %v508 = vmul.f32 %v489, %v120
  %v509 = vmul.f32 %v490, %v119
  %v510 = vmul.f32 %v490, %v120
  %v511 = vmul.f32 %v491, %v119
  %v512 = vmul.f32 %v491, %v120
  %v513 = vmul.f32 %v492, %v119
  %v514 = vmul.f32 %v492, %v120
  %v515 = vmul.f32 %v493, %v119
  %v516 = vmul.f32 %v493, %v120
  %v517 = vmul.f32 %v494, %v119
  %v518 = vmul.f32 %v494, %v120
  %v519 = vmul.f32 %v503, 1.442695
  %v520 = vpow.pop %v519
  %v521 = vmul.f32 %v504, 1.442695
  %v522 = vpow.pop %v521
  %v523 = vmul.f32 %v505, 1.442695
  %v524 = vpow.pop %v523
  %v525 = vmul.f32 %v506, 1.442695
  %v526 = vpow.pop %v525
  %v527 = vmul.f32 %v507, 1.442695
  %v528 = vpow.pop %v527
  %v529 = vmul.f32 %v508, 1.442695
  %v530 = vpow.pop %v529
  %v531 = vmul.f32 %v509, 1.442695
  %v532 = vpow.pop %v531
  %v533 = vmul.f32 %v510, 1.442695
  %v534 = vpow.pop %v533
  %v535 = vmul.f32 %v511, 1.442695
  %v536 = vpow.pop %v535
  %v537 = vmul.f32 %v512, 1.442695
  %v538 = vpow.pop %v537
  %v539 = vmul.f32 %v513, 1.442695
  %v540 = vpow.pop %v539
  %v541 = vmul.f32 %v514, 1.442695
  %v542 = vpow.pop %v541
  %v543 = vmul.f32 %v515, 1.442695
  %v544 = vpow.pop %v543
  %v545 = vmul.f32 %v516, 1.442695
  %v546 = vpow.pop %v545
  %v547 = vmul.f32 %v517, 1.442695
  %v548 = vpow.pop %v547
  %v549 = vmul.f32 %v518, 1.442695
  %v550 = vpow.pop %v549
  %551 = vst [vmem:[#allocation2] sm:$0xff] %v520
  %552 = vst [vmem:[#allocation2 + $0x8] sm:$0xff] %v522
  %553 = vst [vmem:[#allocation2 + $0x10] sm:$0xff] %v524
  %554 = vst [vmem:[#allocation2 + $0x18] sm:$0xff] %v526
  %555 = vst [vmem:[#allocation2 + $0x20] sm:$0xff] %v528
  %556 = vst [vmem:[#allocation2 + $0x28] sm:$0xff] %v530
  %557 = vst [vmem:[#allocation2 + $0x30] sm:$0xff] %v532
  %558 = vst [vmem:[#allocation2 + $0x38] sm:$0xff] %v534
  %559 = vst [vmem:[#allocation2 + $0x40] sm:$0xff] %v536
  %560 = vst [vmem:[#allocation2 + $0x48] sm:$0xff] %v538
  %561 = vst [vmem:[#allocation2 + $0x50] sm:$0xff] %v540
  %562 = vst [vmem:[#allocation2 + $0x58] sm:$0xff] %v542
  %563 = vst [vmem:[#allocation2 + $0x60] sm:$0xff] %v544
  %564 = vst [vmem:[#allocation2 + $0x68] sm:$0xff] %v546
  %565 = vst [vmem:[#allocation2 + $0x70] sm:$0xff] %v548
  %566 = vst [vmem:[#allocation2 + $0x78] sm:$0xff] %v550
  %v568 = vrot.slane %v476, 1
  %v569 = vrot.slane %v476, 2
  %v570 = vrot.slane %v476, 3
  %v571 = vrot.slane %v476, 4
  %v572 = vrot.slane %v476, 5
  %v573 = vrot.slane %v476, 6
  %v574 = vrot.slane %v476, 7
  %v575 = vperm.slane %v476, 0
  %v576 = vperm.slane %v568, 0
  %v577 = vperm.slane %v569, 0
  %v578 = vperm.slane %v570, 0
  %v579 = vperm.slane %v571, 0
  %v580 = vperm.slane %v572, 0
  %v581 = vperm.slane %v573, 0
  %v582 = vperm.slane %v574, 0
  %v591 = vmul.f32 %v575, %v119
  %v592 = vmul.f32 %v575, %v120
  %v593 = vmul.f32 %v576, %v119
  %v594 = vmul.f32 %v576, %v120
  %v595 = vmul.f32 %v577, %v119
  %v596 = vmul.f32 %v577, %v120
  %v597 = vmul.f32 %v578, %v119
  %v598 = vmul.f32 %v578, %v120
  %v599 = vmul.f32 %v579, %v119
  %v600 = vmul.f32 %v579, %v120
  %v601 = vmul.f32 %v580, %v119
  %v602 = vmul.f32 %v580, %v120
  %v603 = vmul.f32 %v581, %v119
  %v604 = vmul.f32 %v581, %v120
  %v605 = vmul.f32 %v582, %v119
  %v606 = vmul.f32 %v582, %v120
  %v607 = vmul.f32 %v591, 1.442695
  %v608 = vpow.pop %v607
  %v609 = vmul.f32 %v592, 1.442695
  %v610 = vpow.pop %v609
  %v611 = vmul.f32 %v593, 1.442695
  %v612 = vpow.pop %v611
  %v613 = vmul.f32 %v594, 1.442695
  %v614 = vpow.pop %v613
  %v615 = vmul.f32 %v595, 1.442695
  %v616 = vpow.pop %v615
  %v617 = vmul.f32 %v596, 1.442695
  %v618 = vpow.pop %v617
  %v619 = vmul.f32 %v597, 1.442695
  %v620 = vpow.pop %v619
  %v621 = vmul.f32 %v598, 1.442695
  %v622 = vpow.pop %v621
  %v623 = vmul.f32 %v599, 1.442695
  %v624 = vpow.pop %v623
  %v625 = vmul.f32 %v600, 1.442695
  %v626 = vpow.pop %v625
  %v627 = vmul.f32 %v601, 1.442695
  %v628 = vpow.pop %v627
  %v629 = vmul.f32 %v602, 1.442695
  %v630 = vpow.pop %v629
  %v631 = vmul.f32 %v603, 1.442695
  %v632 = vpow.pop %v631
  %v633 = vmul.f32 %v604, 1.442695
  %v634 = vpow.pop %v633
  %v635 = vmul.f32 %v605, 1.442695
  %v636 = vpow.pop %v635
  %v637 = vmul.f32 %v606, 1.442695
  %v638 = vpow.pop %v637
  %s639 = scalar_lea.vmem [#allocation2], 128
  %640 = vst [vmem:[%s639] sm:$0xff] %v608
  %641 = vst [vmem:[%s639 + $0x8] sm:$0xff] %v610
  %642 = vst [vmem:[%s639 + $0x10] sm:$0xff] %v612
  %643 = vst [vmem:[%s639 + $0x18] sm:$0xff] %v614
  %644 = vst [vmem:[%s639 + $0x20] sm:$0xff] %v616
  %645 = vst [vmem:[%s639 + $0x28] sm:$0xff] %v618
  %646 = vst [vmem:[%s639 + $0x30] sm:$0xff] %v620
  %647 = vst [vmem:[%s639 + $0x38] sm:$0xff] %v622
  %648 = vst [vmem:[%s639 + $0x40] sm:$0xff] %v624
  %649 = vst [vmem:[%s639 + $0x48] sm:$0xff] %v626
  %650 = vst [vmem:[%s639 + $0x50] sm:$0xff] %v628
  %651 = vst [vmem:[%s639 + $0x58] sm:$0xff] %v630
  %652 = vst [vmem:[%s639 + $0x60] sm:$0xff] %v632
  %653 = vst [vmem:[%s639 + $0x68] sm:$0xff] %v634
  %654 = vst [vmem:[%s639 + $0x70] sm:$0xff] %v636
  %655 = vst [vmem:[%s639 + $0x78] sm:$0xff] %v638
  %v656 = vperm.slane %v449, 0
  %v657 = vlaneseq
  %v658 = vshrl.u32 %v657, 7
  %660 = vset.pattern.permute.xlu0 %v658
  %661 = vperm.xlu0 %660, %v656
  %v662 = vpop.permute.xlu0 %661
  %v663 = vlaneseq
  %v664 = vshrl.u32 %v663, 7
  %v665 = vadd.s32 %v664, 8
  %666 = vset.pattern.permute.xlu0 %v665
  %667 = vperm.xlu0 %666, %v656
  %v668 = vpop.permute.xlu0 %667
  %v669 = vperm.slane %v449, 1
  %v670 = vlaneseq
  %v671 = vshrl.u32 %v670, 7
  %673 = vset.pattern.permute.xlu0 %v671
  %674 = vperm.xlu0 %673, %v669
  %v675 = vpop.permute.xlu0 %674
  %v676 = vlaneseq
  %v677 = vshrl.u32 %v676, 7
  %v678 = vadd.s32 %v677, 8
  %679 = vset.pattern.permute.xlu0 %v678
  %680 = vperm.xlu0 %679, %v669
  %v681 = vpop.permute.xlu0 %680
  %v682 = vperm.slane %v449, 2
  %v683 = vlaneseq
  %v684 = vshrl.u32 %v683, 7
  %686 = vset.pattern.permute.xlu0 %v684
  %687 = vperm.xlu0 %686, %v682
  %v688 = vpop.permute.xlu0 %687
  %v689 = vlaneseq
  %v690 = vshrl.u32 %v689, 7
  %v691 = vadd.s32 %v690, 8
  %692 = vset.pattern.permute.xlu0 %v691
  %693 = vperm.xlu0 %692, %v682
  %v694 = vpop.permute.xlu0 %693
  %v695 = vperm.slane %v449, 3
  %v696 = vlaneseq
  %v697 = vshrl.u32 %v696, 7
  %699 = vset.pattern.permute.xlu0 %v697
  %700 = vperm.xlu0 %699, %v695
  %v701 = vpop.permute.xlu0 %700
  %v702 = vlaneseq
  %v703 = vshrl.u32 %v702, 7
  %v704 = vadd.s32 %v703, 8
  %705 = vset.pattern.permute.xlu0 %v704
  %706 = vperm.xlu0 %705, %v695
  %v707 = vpop.permute.xlu0 %706
  %v708 = vperm.slane %v449, 4
  %v709 = vlaneseq
  %v710 = vshrl.u32 %v709, 7
  %712 = vset.pattern.permute.xlu0 %v710
  %713 = vperm.xlu0 %712, %v708
  %v714 = vpop.permute.xlu0 %713
  %v715 = vlaneseq
  %v716 = vshrl.u32 %v715, 7
  %v717 = vadd.s32 %v716, 8
  %718 = vset.pattern.permute.xlu0 %v717
  %719 = vperm.xlu0 %718, %v708
  %v720 = vpop.permute.xlu0 %719
  %v721 = vperm.slane %v449, 5
  %v722 = vlaneseq
  %v723 = vshrl.u32 %v722, 7
  %725 = vset.pattern.permute.xlu0 %v723
  %726 = vperm.xlu0 %725, %v721
  %v727 = vpop.permute.xlu0 %726
  %v728 = vlaneseq
  %v729 = vshrl.u32 %v728, 7
  %v730 = vadd.s32 %v729, 8
  %731 = vset.pattern.permute.xlu0 %v730
  %732 = vperm.xlu0 %731, %v721
  %v733 = vpop.permute.xlu0 %732
  %v734 = vperm.slane %v449, 6
  %v735 = vlaneseq
  %v736 = vshrl.u32 %v735, 7
  %738 = vset.pattern.permute.xlu0 %v736
  %739 = vperm.xlu0 %738, %v734
  %v740 = vpop.permute.xlu0 %739
  %v741 = vlaneseq
  %v742 = vshrl.u32 %v741, 7
  %v743 = vadd.s32 %v742, 8
  %744 = vset.pattern.permute.xlu0 %v743
  %745 = vperm.xlu0 %744, %v734
  %v746 = vpop.permute.xlu0 %745
  %v747 = vperm.slane %v449, 7
  %v748 = vlaneseq
  %v749 = vshrl.u32 %v748, 7
  %751 = vset.pattern.permute.xlu0 %v749
  %752 = vperm.xlu0 %751, %v747
  %v753 = vpop.permute.xlu0 %752
  %v754 = vlaneseq
  %v755 = vshrl.u32 %v754, 7
  %v756 = vadd.s32 %v755, 8
  %757 = vset.pattern.permute.xlu0 %v756
  %758 = vperm.xlu0 %757, %v747
  %v759 = vpop.permute.xlu0 %758
  %v760 = vperm.slane %v452, 0
  %v761 = vlaneseq
  %v762 = vshrl.u32 %v761, 7
  %764 = vset.pattern.permute.xlu0 %v762
  %765 = vperm.xlu0 %764, %v760
  %v766 = vpop.permute.xlu0 %765
  %v767 = vlaneseq
  %v768 = vshrl.u32 %v767, 7
  %v769 = vadd.s32 %v768, 8
  %770 = vset.pattern.permute.xlu0 %v769
  %771 = vperm.xlu0 %770, %v760
  %v772 = vpop.permute.xlu0 %771
  %v773 = vperm.slane %v452, 1
  %v774 = vlaneseq
  %v775 = vshrl.u32 %v774, 7
  %777 = vset.pattern.permute.xlu0 %v775
  %778 = vperm.xlu0 %777, %v773
  %v779 = vpop.permute.xlu0 %778
  %v780 = vlaneseq
  %v781 = vshrl.u32 %v780, 7
  %v782 = vadd.s32 %v781, 8
  %783 = vset.pattern.permute.xlu0 %v782
  %784 = vperm.xlu0 %783, %v773
  %v785 = vpop.permute.xlu0 %784
  %v786 = vperm.slane %v452, 2
  %v787 = vlaneseq
  %v788 = vshrl.u32 %v787, 7
  %790 = vset.pattern.permute.xlu0 %v788
  %791 = vperm.xlu0 %790, %v786
  %v792 = vpop.permute.xlu0 %791
  %v793 = vlaneseq
  %v794 = vshrl.u32 %v793, 7
  %v795 = vadd.s32 %v794, 8
  %796 = vset.pattern.permute.xlu0 %v795
  %797 = vperm.xlu0 %796, %v786
  %v798 = vpop.permute.xlu0 %797
  %v799 = vperm.slane %v452, 3
  %v800 = vlaneseq
  %v801 = vshrl.u32 %v800, 7
  %803 = vset.pattern.permute.xlu0 %v801
  %804 = vperm.xlu0 %803, %v799
  %v805 = vpop.permute.xlu0 %804
  %v806 = vlaneseq
  %v807 = vshrl.u32 %v806, 7
  %v808 = vadd.s32 %v807, 8
  %809 = vset.pattern.permute.xlu0 %v808
  %810 = vperm.xlu0 %809, %v799
  %v811 = vpop.permute.xlu0 %810
  %v812 = vperm.slane %v452, 4
  %v813 = vlaneseq
  %v814 = vshrl.u32 %v813, 7
  %816 = vset.pattern.permute.xlu0 %v814
  %817 = vperm.xlu0 %816, %v812
  %v818 = vpop.permute.xlu0 %817
  %v819 = vlaneseq
  %v820 = vshrl.u32 %v819, 7
  %v821 = vadd.s32 %v820, 8
  %822 = vset.pattern.permute.xlu0 %v821
  %823 = vperm.xlu0 %822, %v812
  %v824 = vpop.permute.xlu0 %823
  %v825 = vperm.slane %v452, 5
  %v826 = vlaneseq
  %v827 = vshrl.u32 %v826, 7
  %829 = vset.pattern.permute.xlu0 %v827
  %830 = vperm.xlu0 %829, %v825
  %v831 = vpop.permute.xlu0 %830
  %v832 = vlaneseq
  %v833 = vshrl.u32 %v832, 7
  %v834 = vadd.s32 %v833, 8
  %835 = vset.pattern.permute.xlu0 %v834
  %836 = vperm.xlu0 %835, %v825
  %v837 = vpop.permute.xlu0 %836
  %v838 = vperm.slane %v452, 6
  %v839 = vlaneseq
  %v840 = vshrl.u32 %v839, 7
  %842 = vset.pattern.permute.xlu0 %v840
  %843 = vperm.xlu0 %842, %v838
  %v844 = vpop.permute.xlu0 %843
  %v845 = vlaneseq
  %v846 = vshrl.u32 %v845, 7
  %v847 = vadd.s32 %v846, 8
  %848 = vset.pattern.permute.xlu0 %v847
  %849 = vperm.xlu0 %848, %v838
  %v850 = vpop.permute.xlu0 %849
  %v851 = vperm.slane %v452, 7
  %v852 = vlaneseq
  %v853 = vshrl.u32 %v852, 7
  %855 = vset.pattern.permute.xlu0 %v853
  %856 = vperm.xlu0 %855, %v851
  %v857 = vpop.permute.xlu0 %856
  %v858 = vlaneseq
  %v859 = vshrl.u32 %v858, 7
  %v860 = vadd.s32 %v859, 8
  %861 = vset.pattern.permute.xlu0 %v860
  %862 = vperm.xlu0 %861, %v851
  %v863 = vpop.permute.xlu0 %862
  %v866 = vrot.slane %v477, 1
  %v867 = vrot.slane %v477, 2
  %v868 = vrot.slane %v477, 3
  %v869 = vrot.slane %v477, 4
  %v870 = vrot.slane %v477, 5
  %v871 = vrot.slane %v477, 6
  %v872 = vrot.slane %v477, 7
  %v873 = vrot.slane %v478, 1
  %v874 = vrot.slane %v478, 2
  %v875 = vrot.slane %v478, 3
  %v876 = vrot.slane %v478, 4
  %v877 = vrot.slane %v478, 5
  %v878 = vrot.slane %v478, 6
  %v879 = vrot.slane %v478, 7
  %v880 = vperm.slane %v477, 0
  %v881 = vperm.slane %v866, 0
  %v882 = vperm.slane %v867, 0
  %v883 = vperm.slane %v868, 0
  %v884 = vperm.slane %v869, 0
  %v885 = vperm.slane %v870, 0
  %v886 = vperm.slane %v871, 0
  %v887 = vperm.slane %v872, 0
  %v888 = vperm.slane %v478, 0
  %v889 = vperm.slane %v873, 0
  %v890 = vperm.slane %v874, 0
  %v891 = vperm.slane %v875, 0
  %v892 = vperm.slane %v876, 0
  %v893 = vperm.slane %v877, 0
  %v894 = vperm.slane %v878, 0
  %v895 = vperm.slane %v879, 0
  %v912 = vmul.f32 %v662, %v880
  %v913 = vmul.f32 %v668, %v880
  %v914 = vmul.f32 %v675, %v881
  %v915 = vmul.f32 %v681, %v881
  %v916 = vmul.f32 %v688, %v882
  %v917 = vmul.f32 %v694, %v882
  %v918 = vmul.f32 %v701, %v883
  %v919 = vmul.f32 %v707, %v883
  %v920 = vmul.f32 %v714, %v884
  %v921 = vmul.f32 %v720, %v884
  %v922 = vmul.f32 %v727, %v885
  %v923 = vmul.f32 %v733, %v885
  %v924 = vmul.f32 %v740, %v886
  %v925 = vmul.f32 %v746, %v886
  %v926 = vmul.f32 %v753, %v887
  %v927 = vmul.f32 %v759, %v887
  %v928 = vmul.f32 %v766, %v888
  %v929 = vmul.f32 %v772, %v888
  %v930 = vmul.f32 %v779, %v889
  %v931 = vmul.f32 %v785, %v889
  %v932 = vmul.f32 %v792, %v890
  %v933 = vmul.f32 %v798, %v890
  %v934 = vmul.f32 %v805, %v891
  %v935 = vmul.f32 %v811, %v891
  %v936 = vmul.f32 %v818, %v892
  %v937 = vmul.f32 %v824, %v892
  %v938 = vmul.f32 %v831, %v893
  %v939 = vmul.f32 %v837, %v893
  %v940 = vmul.f32 %v844, %v894
  %v941 = vmul.f32 %v850, %v894
  %v942 = vmul.f32 %v857, %v895
  %v943 = vmul.f32 %v863, %v895
  %944 = vst.msk [vmem:[#allocation3] sm:$0xff] %vm138, %v912
  %945 = vst.msk [vmem:[#allocation3 + $0x8] sm:$0xff] %vm138, %v913
  %946 = vst.msk [vmem:[#allocation3 + $0x10] sm:$0xff] %vm138, %v914
  %947 = vst.msk [vmem:[#allocation3 + $0x18] sm:$0xff] %vm138, %v915
  %948 = vst.msk [vmem:[#allocation3 + $0x20] sm:$0xff] %vm138, %v916
  %949 = vst.msk [vmem:[#allocation3 + $0x28] sm:$0xff] %vm138, %v917
  %950 = vst.msk [vmem:[#allocation3 + $0x30] sm:$0xff] %vm138, %v918
  %951 = vst.msk [vmem:[#allocation3 + $0x38] sm:$0xff] %vm138, %v919
  %952 = vst.msk [vmem:[#allocation3 + $0x40] sm:$0xff] %vm138, %v920
  %953 = vst.msk [vmem:[#allocation3 + $0x48] sm:$0xff] %vm138, %v921
  %954 = vst.msk [vmem:[#allocation3 + $0x50] sm:$0xff] %vm138, %v922
  %955 = vst.msk [vmem:[#allocation3 + $0x58] sm:$0xff] %vm138, %v923
  %956 = vst.msk [vmem:[#allocation3 + $0x60] sm:$0xff] %vm138, %v924
  %957 = vst.msk [vmem:[#allocation3 + $0x68] sm:$0xff] %vm138, %v925
  %958 = vst.msk [vmem:[#allocation3 + $0x70] sm:$0xff] %vm138, %v926
  %959 = vst.msk [vmem:[#allocation3 + $0x78] sm:$0xff] %vm138, %v927
  %960 = vst.msk [vmem:[#allocation3 + $0x80] sm:$0xff] %vm138, %v928
  %961 = vst.msk [vmem:[#allocation3 + $0x88] sm:$0xff] %vm138, %v929
  %962 = vst.msk [vmem:[#allocation3 + $0x90] sm:$0xff] %vm138, %v930
  %963 = vst.msk [vmem:[#allocation3 + $0x98] sm:$0xff] %vm138, %v931
  %964 = vst.msk [vmem:[#allocation3 + $0xa0] sm:$0xff] %vm138, %v932
  %965 = vst.msk [vmem:[#allocation3 + $0xa8] sm:$0xff] %vm138, %v933
  %966 = vst.msk [vmem:[#allocation3 + $0xb0] sm:$0xff] %vm138, %v934
  %967 = vst.msk [vmem:[#allocation3 + $0xb8] sm:$0xff] %vm138, %v935
  %968 = vst.msk [vmem:[#allocation3 + $0xc0] sm:$0xff] %vm138, %v936
  %969 = vst.msk [vmem:[#allocation3 + $0xc8] sm:$0xff] %vm138, %v937
  %970 = vst.msk [vmem:[#allocation3 + $0xd0] sm:$0xff] %vm138, %v938
  %971 = vst.msk [vmem:[#allocation3 + $0xd8] sm:$0xff] %vm138, %v939
  %972 = vst.msk [vmem:[#allocation3 + $0xe0] sm:$0xff] %vm138, %v940
  %973 = vst.msk [vmem:[#allocation3 + $0xe8] sm:$0xff] %vm138, %v941
  %974 = vst.msk [vmem:[#allocation3 + $0xf0] sm:$0xff] %vm138, %v942
  %975 = vst.msk [vmem:[#allocation3 + $0xf8] sm:$0xff] %vm138, %v943
  %v976 = vlaneseq
  %v977 = vshrl.u32 %v976, 7
  %v978 = vadd.s32 %v977, 16
  %979 = vset.pattern.permute.xlu0 %v978
  %980 = vperm.xlu0 %979, %v656
  %v981 = vpop.permute.xlu0 %980
  %v982 = vlaneseq
  %v983 = vshrl.u32 %v982, 7
  %v984 = vadd.s32 %v983, 24
  %985 = vset.pattern.permute.xlu0 %v984
  %986 = vperm.xlu0 %985, %v656
  %v987 = vpop.permute.xlu0 %986
  %v988 = vlaneseq
  %v989 = vshrl.u32 %v988, 7
  %v990 = vadd.s32 %v989, 16
  %991 = vset.pattern.permute.xlu0 %v990
  %992 = vperm.xlu0 %991, %v669
  %v993 = vpop.permute.xlu0 %992
  %v994 = vlaneseq
  %v995 = vshrl.u32 %v994, 7
  %v996 = vadd.s32 %v995, 24
  %997 = vset.pattern.permute.xlu0 %v996
  %998 = vperm.xlu0 %997, %v669
  %v999 = vpop.permute.xlu0 %998
  %v1000 = vlaneseq
  %v1001 = vshrl.u32 %v1000, 7
  %v1002 = vadd.s32 %v1001, 16
  %1003 = vset.pattern.permute.xlu0 %v1002
  %1004 = vperm.xlu0 %1003, %v682
  %v1005 = vpop.permute.xlu0 %1004
  %v1006 = vlaneseq
  %v1007 = vshrl.u32 %v1006, 7
  %v1008 = vadd.s32 %v1007, 24
  %1009 = vset.pattern.permute.xlu0 %v1008
  %1010 = vperm.xlu0 %1009, %v682
  %v1011 = vpop.permute.xlu0 %1010
  %v1012 = vlaneseq
  %v1013 = vshrl.u32 %v1012, 7
  %v1014 = vadd.s32 %v1013, 16
  %1015 = vset.pattern.permute.xlu0 %v1014
  %1016 = vperm.xlu0 %1015, %v695
  %v1017 = vpop.permute.xlu0 %1016
  %v1018 = vlaneseq
  %v1019 = vshrl.u32 %v1018, 7
  %v1020 = vadd.s32 %v1019, 24
  %1021 = vset.pattern.permute.xlu0 %v1020
  %1022 = vperm.xlu0 %1021, %v695
  %v1023 = vpop.permute.xlu0 %1022
  %v1024 = vlaneseq
  %v1025 = vshrl.u32 %v1024, 7
  %v1026 = vadd.s32 %v1025, 16
  %1027 = vset.pattern.permute.xlu0 %v1026
  %1028 = vperm.xlu0 %1027, %v708
  %v1029 = vpop.permute.xlu0 %1028
  %v1030 = vlaneseq
  %v1031 = vshrl.u32 %v1030, 7
  %v1032 = vadd.s32 %v1031, 24
  %1033 = vset.pattern.permute.xlu0 %v1032
  %1034 = vperm.xlu0 %1033, %v708
  %v1035 = vpop.permute.xlu0 %1034
  %v1036 = vlaneseq
  %v1037 = vshrl.u32 %v1036, 7
  %v1038 = vadd.s32 %v1037, 16
  %1039 = vset.pattern.permute.xlu0 %v1038
  %1040 = vperm.xlu0 %1039, %v721
  %v1041 = vpop.permute.xlu0 %1040
  %v1042 = vlaneseq
  %v1043 = vshrl.u32 %v1042, 7
  %v1044 = vadd.s32 %v1043, 24
  %1045 = vset.pattern.permute.xlu0 %v1044
  %1046 = vperm.xlu0 %1045, %v721
  %v1047 = vpop.permute.xlu0 %1046
  %v1048 = vlaneseq
  %v1049 = vshrl.u32 %v1048, 7
  %v1050 = vadd.s32 %v1049, 16
  %1051 = vset.pattern.permute.xlu0 %v1050
  %1052 = vperm.xlu0 %1051, %v734
  %v1053 = vpop.permute.xlu0 %1052
  %v1054 = vlaneseq
  %v1055 = vshrl.u32 %v1054, 7
  %v1056 = vadd.s32 %v1055, 24
  %1057 = vset.pattern.permute.xlu0 %v1056
  %1058 = vperm.xlu0 %1057, %v734
  %v1059 = vpop.permute.xlu0 %1058
  %v1060 = vlaneseq
  %v1061 = vshrl.u32 %v1060, 7
  %v1062 = vadd.s32 %v1061, 16
  %1063 = vset.pattern.permute.xlu0 %v1062
  %1064 = vperm.xlu0 %1063, %v747
  %v1065 = vpop.permute.xlu0 %1064
  %v1066 = vlaneseq
  %v1067 = vshrl.u32 %v1066, 7
  %v1068 = vadd.s32 %v1067, 24
  %1069 = vset.pattern.permute.xlu0 %v1068
  %1070 = vperm.xlu0 %1069, %v747
  %v1071 = vpop.permute.xlu0 %1070
  %v1072 = vlaneseq
  %v1073 = vshrl.u32 %v1072, 7
  %v1074 = vadd.s32 %v1073, 16
  %1075 = vset.pattern.permute.xlu0 %v1074
  %1076 = vperm.xlu0 %1075, %v760
  %v1077 = vpop.permute.xlu0 %1076
  %v1078 = vlaneseq
  %v1079 = vshrl.u32 %v1078, 7
  %v1080 = vadd.s32 %v1079, 24
  %1081 = vset.pattern.permute.xlu0 %v1080
  %1082 = vperm.xlu0 %1081, %v760
  %v1083 = vpop.permute.xlu0 %1082
  %v1084 = vlaneseq
  %v1085 = vshrl.u32 %v1084, 7
  %v1086 = vadd.s32 %v1085, 16
  %1087 = vset.pattern.permute.xlu0 %v1086
  %1088 = vperm.xlu0 %1087, %v773
  %v1089 = vpop.permute.xlu0 %1088
  %v1090 = vlaneseq
  %v1091 = vshrl.u32 %v1090, 7
  %v1092 = vadd.s32 %v1091, 24
  %1093 = vset.pattern.permute.xlu0 %v1092
  %1094 = vperm.xlu0 %1093, %v773
  %v1095 = vpop.permute.xlu0 %1094
  %v1096 = vlaneseq
  %v1097 = vshrl.u32 %v1096, 7
  %v1098 = vadd.s32 %v1097, 16
  %1099 = vset.pattern.permute.xlu0 %v1098
  %1100 = vperm.xlu0 %1099, %v786
  %v1101 = vpop.permute.xlu0 %1100
  %v1102 = vlaneseq
  %v1103 = vshrl.u32 %v1102, 7
  %v1104 = vadd.s32 %v1103, 24
  %1105 = vset.pattern.permute.xlu0 %v1104
  %1106 = vperm.xlu0 %1105, %v786
  %v1107 = vpop.permute.xlu0 %1106
  %v1108 = vlaneseq
  %v1109 = vshrl.u32 %v1108, 7
  %v1110 = vadd.s32 %v1109, 16
  %1111 = vset.pattern.permute.xlu0 %v1110
  %1112 = vperm.xlu0 %1111, %v799
  %v1113 = vpop.permute.xlu0 %1112
  %v1114 = vlaneseq
  %v1115 = vshrl.u32 %v1114, 7
  %v1116 = vadd.s32 %v1115, 24
  %1117 = vset.pattern.permute.xlu0 %v1116
  %1118 = vperm.xlu0 %1117, %v799
  %v1119 = vpop.permute.xlu0 %1118
  %v1120 = vlaneseq
  %v1121 = vshrl.u32 %v1120, 7
  %v1122 = vadd.s32 %v1121, 16
  %1123 = vset.pattern.permute.xlu0 %v1122
  %1124 = vperm.xlu0 %1123, %v812
  %v1125 = vpop.permute.xlu0 %1124
  %v1126 = vlaneseq
  %v1127 = vshrl.u32 %v1126, 7
  %v1128 = vadd.s32 %v1127, 24
  %1129 = vset.pattern.permute.xlu0 %v1128
  %1130 = vperm.xlu0 %1129, %v812
  %v1131 = vpop.permute.xlu0 %1130
  %v1132 = vlaneseq
  %v1133 = vshrl.u32 %v1132, 7
  %v1134 = vadd.s32 %v1133, 16
  %1135 = vset.pattern.permute.xlu0 %v1134
  %1136 = vperm.xlu0 %1135, %v825
  %v1137 = vpop.permute.xlu0 %1136
  %v1138 = vlaneseq
  %v1139 = vshrl.u32 %v1138, 7
  %v1140 = vadd.s32 %v1139, 24
  %1141 = vset.pattern.permute.xlu0 %v1140
  %1142 = vperm.xlu0 %1141, %v825
  %v1143 = vpop.permute.xlu0 %1142
  %v1144 = vlaneseq
  %v1145 = vshrl.u32 %v1144, 7
  %v1146 = vadd.s32 %v1145, 16
  %1147 = vset.pattern.permute.xlu0 %v1146
  %1148 = vperm.xlu0 %1147, %v838
  %v1149 = vpop.permute.xlu0 %1148
  %v1150 = vlaneseq
  %v1151 = vshrl.u32 %v1150, 7
  %v1152 = vadd.s32 %v1151, 24
  %1153 = vset.pattern.permute.xlu0 %v1152
  %1154 = vperm.xlu0 %1153, %v838
  %v1155 = vpop.permute.xlu0 %1154
  %v1156 = vlaneseq
  %v1157 = vshrl.u32 %v1156, 7
  %v1158 = vadd.s32 %v1157, 16
  %1159 = vset.pattern.permute.xlu0 %v1158
  %1160 = vperm.xlu0 %1159, %v851
  %v1161 = vpop.permute.xlu0 %1160
  %v1162 = vlaneseq
  %v1163 = vshrl.u32 %v1162, 7
  %v1164 = vadd.s32 %v1163, 24
  %1165 = vset.pattern.permute.xlu0 %v1164
  %1166 = vperm.xlu0 %1165, %v851
  %v1167 = vpop.permute.xlu0 %1166
  %1168 = vst.msk [vmem:[#allocation4] sm:$0xff] %vm138, %v981
  %1169 = vst.msk [vmem:[#allocation4 + $0x8] sm:$0xff] %vm138, %v987
  %1170 = vst.msk [vmem:[#allocation4 + $0x10] sm:$0xff] %vm138, %v993
  %1171 = vst.msk [vmem:[#allocation4 + $0x18] sm:$0xff] %vm138, %v999
  %1172 = vst.msk [vmem:[#allocation4 + $0x20] sm:$0xff] %vm138, %v1005
  %1173 = vst.msk [vmem:[#allocation4 + $0x28] sm:$0xff] %vm138, %v1011
  %1174 = vst.msk [vmem:[#allocation4 + $0x30] sm:$0xff] %vm138, %v1017
  %1175 = vst.msk [vmem:[#allocation4 + $0x38] sm:$0xff] %vm138, %v1023
  %1176 = vst.msk [vmem:[#allocation4 + $0x40] sm:$0xff] %vm138, %v1029
  %1177 = vst.msk [vmem:[#allocation4 + $0x48] sm:$0xff] %vm138, %v1035
  %1178 = vst.msk [vmem:[#allocation4 + $0x50] sm:$0xff] %vm138, %v1041
  %1179 = vst.msk [vmem:[#allocation4 + $0x58] sm:$0xff] %vm138, %v1047
  %1180 = vst.msk [vmem:[#allocation4 + $0x60] sm:$0xff] %vm138, %v1053
  %1181 = vst.msk [vmem:[#allocation4 + $0x68] sm:$0xff] %vm138, %v1059
  %1182 = vst.msk [vmem:[#allocation4 + $0x70] sm:$0xff] %vm138, %v1065
  %1183 = vst.msk [vmem:[#allocation4 + $0x78] sm:$0xff] %vm138, %v1071
  %1184 = vst.msk [vmem:[#allocation4 + $0x80] sm:$0xff] %vm138, %v1077
  %1185 = vst.msk [vmem:[#allocation4 + $0x88] sm:$0xff] %vm138, %v1083
  %1186 = vst.msk [vmem:[#allocation4 + $0x90] sm:$0xff] %vm138, %v1089
  %1187 = vst.msk [vmem:[#allocation4 + $0x98] sm:$0xff] %vm138, %v1095
  %1188 = vst.msk [vmem:[#allocation4 + $0xa0] sm:$0xff] %vm138, %v1101
  %1189 = vst.msk [vmem:[#allocation4 + $0xa8] sm:$0xff] %vm138, %v1107
  %1190 = vst.msk [vmem:[#allocation4 + $0xb0] sm:$0xff] %vm138, %v1113
  %1191 = vst.msk [vmem:[#allocation4 + $0xb8] sm:$0xff] %vm138, %v1119
  %1192 = vst.msk [vmem:[#allocation4 + $0xc0] sm:$0xff] %vm138, %v1125
  %1193 = vst.msk [vmem:[#allocation4 + $0xc8] sm:$0xff] %vm138, %v1131
  %1194 = vst.msk [vmem:[#allocation4 + $0xd0] sm:$0xff] %vm138, %v1137
  %1195 = vst.msk [vmem:[#allocation4 + $0xd8] sm:$0xff] %vm138, %v1143
  %1196 = vst.msk [vmem:[#allocation4 + $0xe0] sm:$0xff] %vm138, %v1149
  %1197 = vst.msk [vmem:[#allocation4 + $0xe8] sm:$0xff] %vm138, %v1155
  %1198 = vst.msk [vmem:[#allocation4 + $0xf0] sm:$0xff] %vm138, %v1161
  %1199 = vst.msk [vmem:[#allocation4 + $0xf8] sm:$0xff] %vm138, %v1167
  %v1200 = vlaneseq
  %v1201 = vshrl.u32 %v1200, 7
  %v1202 = vadd.s32 %v1201, 32
  %1203 = vset.pattern.permute.xlu0 %v1202
  %1204 = vperm.xlu0 %1203, %v656
  %v1205 = vpop.permute.xlu0 %1204
  %v1206 = vlaneseq
  %v1207 = vshrl.u32 %v1206, 7
  %v1208 = vadd.s32 %v1207, 40
  %1209 = vset.pattern.permute.xlu0 %v1208
  %1210 = vperm.xlu0 %1209, %v656
  %v1211 = vpop.permute.xlu0 %1210
  %v1212 = vlaneseq
  %v1213 = vshrl.u32 %v1212, 7
  %v1214 = vadd.s32 %v1213, 32
  %1215 = vset.pattern.permute.xlu0 %v1214
  %1216 = vperm.xlu0 %1215, %v669
  %v1217 = vpop.permute.xlu0 %1216
  %v1218 = vlaneseq
  %v1219 = vshrl.u32 %v1218, 7
  %v1220 = vadd.s32 %v1219, 40
  %1221 = vset.pattern.permute.xlu0 %v1220
  %1222 = vperm.xlu0 %1221, %v669
  %v1223 = vpop.permute.xlu0 %1222
  %v1224 = vlaneseq
  %v1225 = vshrl.u32 %v1224, 7
  %v1226 = vadd.s32 %v1225, 32
  %1227 = vset.pattern.permute.xlu0 %v1226
  %1228 = vperm.xlu0 %1227, %v682
  %v1229 = vpop.permute.xlu0 %1228
  %v1230 = vlaneseq
  %v1231 = vshrl.u32 %v1230, 7
  %v1232 = vadd.s32 %v1231, 40
  %1233 = vset.pattern.permute.xlu0 %v1232
  %1234 = vperm.xlu0 %1233, %v682
  %v1235 = vpop.permute.xlu0 %1234
  %v1236 = vlaneseq
  %v1237 = vshrl.u32 %v1236, 7
  %v1238 = vadd.s32 %v1237, 32
  %1239 = vset.pattern.permute.xlu0 %v1238
  %1240 = vperm.xlu0 %1239, %v695
  %v1241 = vpop.permute.xlu0 %1240
  %v1242 = vlaneseq
  %v1243 = vshrl.u32 %v1242, 7
  %v1244 = vadd.s32 %v1243, 40
  %1245 = vset.pattern.permute.xlu0 %v1244
  %1246 = vperm.xlu0 %1245, %v695
  %v1247 = vpop.permute.xlu0 %1246
  %v1248 = vlaneseq
  %v1249 = vshrl.u32 %v1248, 7
  %v1250 = vadd.s32 %v1249, 32
  %1251 = vset.pattern.permute.xlu0 %v1250
  %1252 = vperm.xlu0 %1251, %v708
  %v1253 = vpop.permute.xlu0 %1252
  %v1254 = vlaneseq
  %v1255 = vshrl.u32 %v1254, 7
  %v1256 = vadd.s32 %v1255, 40
  %1257 = vset.pattern.permute.xlu0 %v1256
  %1258 = vperm.xlu0 %1257, %v708
  %v1259 = vpop.permute.xlu0 %1258
  %v1260 = vlaneseq
  %v1261 = vshrl.u32 %v1260, 7
  %v1262 = vadd.s32 %v1261, 32
  %1263 = vset.pattern.permute.xlu0 %v1262
  %1264 = vperm.xlu0 %1263, %v721
  %v1265 = vpop.permute.xlu0 %1264
  %v1266 = vlaneseq
  %v1267 = vshrl.u32 %v1266, 7
  %v1268 = vadd.s32 %v1267, 40
  %1269 = vset.pattern.permute.xlu0 %v1268
  %1270 = vperm.xlu0 %1269, %v721
  %v1271 = vpop.permute.xlu0 %1270
  %v1272 = vlaneseq
  %v1273 = vshrl.u32 %v1272, 7
  %v1274 = vadd.s32 %v1273, 32
  %1275 = vset.pattern.permute.xlu0 %v1274
  %1276 = vperm.xlu0 %1275, %v734
  %v1277 = vpop.permute.xlu0 %1276
  %v1278 = vlaneseq
  %v1279 = vshrl.u32 %v1278, 7
  %v1280 = vadd.s32 %v1279, 40
  %1281 = vset.pattern.permute.xlu0 %v1280
  %1282 = vperm.xlu0 %1281, %v734
  %v1283 = vpop.permute.xlu0 %1282
  %v1284 = vlaneseq
  %v1285 = vshrl.u32 %v1284, 7
  %v1286 = vadd.s32 %v1285, 32
  %1287 = vset.pattern.permute.xlu0 %v1286
  %1288 = vperm.xlu0 %1287, %v747
  %v1289 = vpop.permute.xlu0 %1288
  %v1290 = vlaneseq
  %v1291 = vshrl.u32 %v1290, 7
  %v1292 = vadd.s32 %v1291, 40
  %1293 = vset.pattern.permute.xlu0 %v1292
  %1294 = vperm.xlu0 %1293, %v747
  %v1295 = vpop.permute.xlu0 %1294
  %v1296 = vlaneseq
  %v1297 = vshrl.u32 %v1296, 7
  %v1298 = vadd.s32 %v1297, 32
  %1299 = vset.pattern.permute.xlu0 %v1298
  %1300 = vperm.xlu0 %1299, %v760
  %v1301 = vpop.permute.xlu0 %1300
  %v1302 = vlaneseq
  %v1303 = vshrl.u32 %v1302, 7
  %v1304 = vadd.s32 %v1303, 40
  %1305 = vset.pattern.permute.xlu0 %v1304
  %1306 = vperm.xlu0 %1305, %v760
  %v1307 = vpop.permute.xlu0 %1306
  %v1308 = vlaneseq
  %v1309 = vshrl.u32 %v1308, 7
  %v1310 = vadd.s32 %v1309, 32
  %1311 = vset.pattern.permute.xlu0 %v1310
  %1312 = vperm.xlu0 %1311, %v773
  %v1313 = vpop.permute.xlu0 %1312
  %v1314 = vlaneseq
  %v1315 = vshrl.u32 %v1314, 7
  %v1316 = vadd.s32 %v1315, 40
  %1317 = vset.pattern.permute.xlu0 %v1316
  %1318 = vperm.xlu0 %1317, %v773
  %v1319 = vpop.permute.xlu0 %1318
  %v1320 = vlaneseq
  %v1321 = vshrl.u32 %v1320, 7
  %v1322 = vadd.s32 %v1321, 32
  %1323 = vset.pattern.permute.xlu0 %v1322
  %1324 = vperm.xlu0 %1323, %v786
  %v1325 = vpop.permute.xlu0 %1324
  %v1326 = vlaneseq
  %v1327 = vshrl.u32 %v1326, 7
  %v1328 = vadd.s32 %v1327, 40
  %1329 = vset.pattern.permute.xlu0 %v1328
  %1330 = vperm.xlu0 %1329, %v786
  %v1331 = vpop.permute.xlu0 %1330
  %v1332 = vlaneseq
  %v1333 = vshrl.u32 %v1332, 7
  %v1334 = vadd.s32 %v1333, 32
  %1335 = vset.pattern.permute.xlu0 %v1334
  %1336 = vperm.xlu0 %1335, %v799
  %v1337 = vpop.permute.xlu0 %1336
  %v1338 = vlaneseq
  %v1339 = vshrl.u32 %v1338, 7
  %v1340 = vadd.s32 %v1339, 40
  %1341 = vset.pattern.permute.xlu0 %v1340
  %1342 = vperm.xlu0 %1341, %v799
  %v1343 = vpop.permute.xlu0 %1342
  %v1344 = vlaneseq
  %v1345 = vshrl.u32 %v1344, 7
  %v1346 = vadd.s32 %v1345, 32
  %1347 = vset.pattern.permute.xlu0 %v1346
  %1348 = vperm.xlu0 %1347, %v812
  %v1349 = vpop.permute.xlu0 %1348
  %v1350 = vlaneseq
  %v1351 = vshrl.u32 %v1350, 7
  %v1352 = vadd.s32 %v1351, 40
  %1353 = vset.pattern.permute.xlu0 %v1352
  %1354 = vperm.xlu0 %1353, %v812
  %v1355 = vpop.permute.xlu0 %1354
  %v1356 = vlaneseq
  %v1357 = vshrl.u32 %v1356, 7
  %v1358 = vadd.s32 %v1357, 32
  %1359 = vset.pattern.permute.xlu0 %v1358
  %1360 = vperm.xlu0 %1359, %v825
  %v1361 = vpop.permute.xlu0 %1360
  %v1362 = vlaneseq
  %v1363 = vshrl.u32 %v1362, 7
  %v1364 = vadd.s32 %v1363, 40
  %1365 = vset.pattern.permute.xlu0 %v1364
  %1366 = vperm.xlu0 %1365, %v825
  %v1367 = vpop.permute.xlu0 %1366
  %v1368 = vlaneseq
  %v1369 = vshrl.u32 %v1368, 7
  %v1370 = vadd.s32 %v1369, 32
  %1371 = vset.pattern.permute.xlu0 %v1370
  %1372 = vperm.xlu0 %1371, %v838
  %v1373 = vpop.permute.xlu0 %1372
  %v1374 = vlaneseq
  %v1375 = vshrl.u32 %v1374, 7
  %v1376 = vadd.s32 %v1375, 40
  %1377 = vset.pattern.permute.xlu0 %v1376
  %1378 = vperm.xlu0 %1377, %v838
  %v1379 = vpop.permute.xlu0 %1378
  %v1380 = vlaneseq
  %v1381 = vshrl.u32 %v1380, 7
  %v1382 = vadd.s32 %v1381, 32
  %1383 = vset.pattern.permute.xlu0 %v1382
  %1384 = vperm.xlu0 %1383, %v851
  %v1385 = vpop.permute.xlu0 %1384
  %v1386 = vlaneseq
  %v1387 = vshrl.u32 %v1386, 7
  %v1388 = vadd.s32 %v1387, 40
  %1389 = vset.pattern.permute.xlu0 %v1388
  %1390 = vperm.xlu0 %1389, %v851
  %v1391 = vpop.permute.xlu0 %1390
  %v1392 = vmul.f32 %v1205, %v880
  %v1393 = vmul.f32 %v1211, %v880
  %v1394 = vmul.f32 %v1217, %v881
  %v1395 = vmul.f32 %v1223, %v881
  %v1396 = vmul.f32 %v1229, %v882
  %v1397 = vmul.f32 %v1235, %v882
  %v1398 = vmul.f32 %v1241, %v883
  %v1399 = vmul.f32 %v1247, %v883
  %v1400 = vmul.f32 %v1253, %v884
  %v1401 = vmul.f32 %v1259, %v884
  %v1402 = vmul.f32 %v1265, %v885
  %v1403 = vmul.f32 %v1271, %v885
  %v1404 = vmul.f32 %v1277, %v886
  %v1405 = vmul.f32 %v1283, %v886
  %v1406 = vmul.f32 %v1289, %v887
  %v1407 = vmul.f32 %v1295, %v887
  %v1408 = vmul.f32 %v1301, %v888
  %v1409 = vmul.f32 %v1307, %v888
  %v1410 = vmul.f32 %v1313, %v889
  %v1411 = vmul.f32 %v1319, %v889
  %v1412 = vmul.f32 %v1325, %v890
  %v1413 = vmul.f32 %v1331, %v890
  %v1414 = vmul.f32 %v1337, %v891
  %v1415 = vmul.f32 %v1343, %v891
  %v1416 = vmul.f32 %v1349, %v892
  %v1417 = vmul.f32 %v1355, %v892
  %v1418 = vmul.f32 %v1361, %v893
  %v1419 = vmul.f32 %v1367, %v893
  %v1420 = vmul.f32 %v1373, %v894
  %v1421 = vmul.f32 %v1379, %v894
  %v1422 = vmul.f32 %v1385, %v895
  %v1423 = vmul.f32 %v1391, %v895
  %vm1424 = vcmask 1048064
  %1425 = vst.msk [vmem:[#allocation3] sm:$0xff] %vm1424, %v1392
  %1426 = vst.msk [vmem:[#allocation3 + $0x8] sm:$0xff] %vm1424, %v1393
  %1427 = vst.msk [vmem:[#allocation3 + $0x10] sm:$0xff] %vm1424, %v1394
  %1428 = vst.msk [vmem:[#allocation3 + $0x18] sm:$0xff] %vm1424, %v1395
  %1429 = vst.msk [vmem:[#allocation3 + $0x20] sm:$0xff] %vm1424, %v1396
  %1430 = vst.msk [vmem:[#allocation3 + $0x28] sm:$0xff] %vm1424, %v1397
  %1431 = vst.msk [vmem:[#allocation3 + $0x30] sm:$0xff] %vm1424, %v1398
  %1432 = vst.msk [vmem:[#allocation3 + $0x38] sm:$0xff] %vm1424, %v1399
  %1433 = vst.msk [vmem:[#allocation3 + $0x40] sm:$0xff] %vm1424, %v1400
  %1434 = vst.msk [vmem:[#allocation3 + $0x48] sm:$0xff] %vm1424, %v1401
  %1435 = vst.msk [vmem:[#allocation3 + $0x50] sm:$0xff] %vm1424, %v1402
  %1436 = vst.msk [vmem:[#allocation3 + $0x58] sm:$0xff] %vm1424, %v1403
  %1437 = vst.msk [vmem:[#allocation3 + $0x60] sm:$0xff] %vm1424, %v1404
  %1438 = vst.msk [vmem:[#allocation3 + $0x68] sm:$0xff] %vm1424, %v1405
  %1439 = vst.msk [vmem:[#allocation3 + $0x70] sm:$0xff] %vm1424, %v1406
  %1440 = vst.msk [vmem:[#allocation3 + $0x78] sm:$0xff] %vm1424, %v1407
  %1441 = vst.msk [vmem:[#allocation3 + $0x80] sm:$0xff] %vm1424, %v1408
  %1442 = vst.msk [vmem:[#allocation3 + $0x88] sm:$0xff] %vm1424, %v1409
  %1443 = vst.msk [vmem:[#allocation3 + $0x90] sm:$0xff] %vm1424, %v1410
  %1444 = vst.msk [vmem:[#allocation3 + $0x98] sm:$0xff] %vm1424, %v1411
  %1445 = vst.msk [vmem:[#allocation3 + $0xa0] sm:$0xff] %vm1424, %v1412
  %1446 = vst.msk [vmem:[#allocation3 + $0xa8] sm:$0xff] %vm1424, %v1413
  %1447 = vst.msk [vmem:[#allocation3 + $0xb0] sm:$0xff] %vm1424, %v1414
  %1448 = vst.msk [vmem:[#allocation3 + $0xb8] sm:$0xff] %vm1424, %v1415
  %1449 = vst.msk [vmem:[#allocation3 + $0xc0] sm:$0xff] %vm1424, %v1416
  %1450 = vst.msk [vmem:[#allocation3 + $0xc8] sm:$0xff] %vm1424, %v1417
  %1451 = vst.msk [vmem:[#allocation3 + $0xd0] sm:$0xff] %vm1424, %v1418
  %1452 = vst.msk [vmem:[#allocation3 + $0xd8] sm:$0xff] %vm1424, %v1419
  %1453 = vst.msk [vmem:[#allocation3 + $0xe0] sm:$0xff] %vm1424, %v1420
  %1454 = vst.msk [vmem:[#allocation3 + $0xe8] sm:$0xff] %vm1424, %v1421
  %1455 = vst.msk [vmem:[#allocation3 + $0xf0] sm:$0xff] %vm1424, %v1422
  %1456 = vst.msk [vmem:[#allocation3 + $0xf8] sm:$0xff] %vm1424, %v1423
  %v1457 = vlaneseq
  %v1458 = vshrl.u32 %v1457, 7
  %v1459 = vadd.s32 %v1458, 48
  %1460 = vset.pattern.permute.xlu0 %v1459
  %1461 = vperm.xlu0 %1460, %v656
  %v1462 = vpop.permute.xlu0 %1461
  %v1463 = vlaneseq
  %v1464 = vshrl.u32 %v1463, 7
  %v1465 = vadd.s32 %v1464, 56
  %1466 = vset.pattern.permute.xlu0 %v1465
  %1467 = vperm.xlu0 %1466, %v656
  %v1468 = vpop.permute.xlu0 %1467
  %v1469 = vlaneseq
  %v1470 = vshrl.u32 %v1469, 7
  %v1471 = vadd.s32 %v1470, 48
  %1472 = vset.pattern.permute.xlu0 %v1471
  %1473 = vperm.xlu0 %1472, %v669
  %v1474 = vpop.permute.xlu0 %1473
  %v1475 = vlaneseq
  %v1476 = vshrl.u32 %v1475, 7
  %v1477 = vadd.s32 %v1476, 56
  %1478 = vset.pattern.permute.xlu0 %v1477
  %1479 = vperm.xlu0 %1478, %v669
  %v1480 = vpop.permute.xlu0 %1479
  %v1481 = vlaneseq
  %v1482 = vshrl.u32 %v1481, 7
  %v1483 = vadd.s32 %v1482, 48
  %1484 = vset.pattern.permute.xlu0 %v1483
  %1485 = vperm.xlu0 %1484, %v682
  %v1486 = vpop.permute.xlu0 %1485
  %v1487 = vlaneseq
  %v1488 = vshrl.u32 %v1487, 7
  %v1489 = vadd.s32 %v1488, 56
  %1490 = vset.pattern.permute.xlu0 %v1489
  %1491 = vperm.xlu0 %1490, %v682
  %v1492 = vpop.permute.xlu0 %1491
  %v1493 = vlaneseq
  %v1494 = vshrl.u32 %v1493, 7
  %v1495 = vadd.s32 %v1494, 48
  %1496 = vset.pattern.permute.xlu0 %v1495
  %1497 = vperm.xlu0 %1496, %v695
  %v1498 = vpop.permute.xlu0 %1497
  %v1499 = vlaneseq
  %v1500 = vshrl.u32 %v1499, 7
  %v1501 = vadd.s32 %v1500, 56
  %1502 = vset.pattern.permute.xlu0 %v1501
  %1503 = vperm.xlu0 %1502, %v695
  %v1504 = vpop.permute.xlu0 %1503
  %v1505 = vlaneseq
  %v1506 = vshrl.u32 %v1505, 7
  %v1507 = vadd.s32 %v1506, 48
  %1508 = vset.pattern.permute.xlu0 %v1507
  %1509 = vperm.xlu0 %1508, %v708
  %v1510 = vpop.permute.xlu0 %1509
  %v1511 = vlaneseq
  %v1512 = vshrl.u32 %v1511, 7
  %v1513 = vadd.s32 %v1512, 56
  %1514 = vset.pattern.permute.xlu0 %v1513
  %1515 = vperm.xlu0 %1514, %v708
  %v1516 = vpop.permute.xlu0 %1515
  %v1517 = vlaneseq
  %v1518 = vshrl.u32 %v1517, 7
  %v1519 = vadd.s32 %v1518, 48
  %1520 = vset.pattern.permute.xlu0 %v1519
  %1521 = vperm.xlu0 %1520, %v721
  %v1522 = vpop.permute.xlu0 %1521
  %v1523 = vlaneseq
  %v1524 = vshrl.u32 %v1523, 7
  %v1525 = vadd.s32 %v1524, 56
  %1526 = vset.pattern.permute.xlu0 %v1525
  %1527 = vperm.xlu0 %1526, %v721
  %v1528 = vpop.permute.xlu0 %1527
  %v1529 = vlaneseq
  %v1530 = vshrl.u32 %v1529, 7
  %v1531 = vadd.s32 %v1530, 48
  %1532 = vset.pattern.permute.xlu0 %v1531
  %1533 = vperm.xlu0 %1532, %v734
  %v1534 = vpop.permute.xlu0 %1533
  %v1535 = vlaneseq
  %v1536 = vshrl.u32 %v1535, 7
  %v1537 = vadd.s32 %v1536, 56
  %1538 = vset.pattern.permute.xlu0 %v1537
  %1539 = vperm.xlu0 %1538, %v734
  %v1540 = vpop.permute.xlu0 %1539
  %v1541 = vlaneseq
  %v1542 = vshrl.u32 %v1541, 7
  %v1543 = vadd.s32 %v1542, 48
  %1544 = vset.pattern.permute.xlu0 %v1543
  %1545 = vperm.xlu0 %1544, %v747
  %v1546 = vpop.permute.xlu0 %1545
  %v1547 = vlaneseq
  %v1548 = vshrl.u32 %v1547, 7
  %v1549 = vadd.s32 %v1548, 56
  %1550 = vset.pattern.permute.xlu0 %v1549
  %1551 = vperm.xlu0 %1550, %v747
  %v1552 = vpop.permute.xlu0 %1551
  %v1553 = vlaneseq
  %v1554 = vshrl.u32 %v1553, 7
  %v1555 = vadd.s32 %v1554, 48
  %1556 = vset.pattern.permute.xlu0 %v1555
  %1557 = vperm.xlu0 %1556, %v760
  %v1558 = vpop.permute.xlu0 %1557
  %v1559 = vlaneseq
  %v1560 = vshrl.u32 %v1559, 7
  %v1561 = vadd.s32 %v1560, 56
  %1562 = vset.pattern.permute.xlu0 %v1561
  %1563 = vperm.xlu0 %1562, %v760
  %v1564 = vpop.permute.xlu0 %1563
  %v1565 = vlaneseq
  %v1566 = vshrl.u32 %v1565, 7
  %v1567 = vadd.s32 %v1566, 48
  %1568 = vset.pattern.permute.xlu0 %v1567
  %1569 = vperm.xlu0 %1568, %v773
  %v1570 = vpop.permute.xlu0 %1569
  %v1571 = vlaneseq
  %v1572 = vshrl.u32 %v1571, 7
  %v1573 = vadd.s32 %v1572, 56
  %1574 = vset.pattern.permute.xlu0 %v1573
  %1575 = vperm.xlu0 %1574, %v773
  %v1576 = vpop.permute.xlu0 %1575
  %v1577 = vlaneseq
  %v1578 = vshrl.u32 %v1577, 7
  %v1579 = vadd.s32 %v1578, 48
  %1580 = vset.pattern.permute.xlu0 %v1579
  %1581 = vperm.xlu0 %1580, %v786
  %v1582 = vpop.permute.xlu0 %1581
  %v1583 = vlaneseq
  %v1584 = vshrl.u32 %v1583, 7
  %v1585 = vadd.s32 %v1584, 56
  %1586 = vset.pattern.permute.xlu0 %v1585
  %1587 = vperm.xlu0 %1586, %v786
  %v1588 = vpop.permute.xlu0 %1587
  %v1589 = vlaneseq
  %v1590 = vshrl.u32 %v1589, 7
  %v1591 = vadd.s32 %v1590, 48
  %1592 = vset.pattern.permute.xlu0 %v1591
  %1593 = vperm.xlu0 %1592, %v799
  %v1594 = vpop.permute.xlu0 %1593
  %v1595 = vlaneseq
  %v1596 = vshrl.u32 %v1595, 7
  %v1597 = vadd.s32 %v1596, 56
  %1598 = vset.pattern.permute.xlu0 %v1597
  %1599 = vperm.xlu0 %1598, %v799
  %v1600 = vpop.permute.xlu0 %1599
  %v1601 = vlaneseq
  %v1602 = vshrl.u32 %v1601, 7
  %v1603 = vadd.s32 %v1602, 48
  %1604 = vset.pattern.permute.xlu0 %v1603
  %1605 = vperm.xlu0 %1604, %v812
  %v1606 = vpop.permute.xlu0 %1605
  %v1607 = vlaneseq
  %v1608 = vshrl.u32 %v1607, 7
  %v1609 = vadd.s32 %v1608, 56
  %1610 = vset.pattern.permute.xlu0 %v1609
  %1611 = vperm.xlu0 %1610, %v812
  %v1612 = vpop.permute.xlu0 %1611
  %v1613 = vlaneseq
  %v1614 = vshrl.u32 %v1613, 7
  %v1615 = vadd.s32 %v1614, 48
  %1616 = vset.pattern.permute.xlu0 %v1615
  %1617 = vperm.xlu0 %1616, %v825
  %v1618 = vpop.permute.xlu0 %1617
  %v1619 = vlaneseq
  %v1620 = vshrl.u32 %v1619, 7
  %v1621 = vadd.s32 %v1620, 56
  %1622 = vset.pattern.permute.xlu0 %v1621
  %1623 = vperm.xlu0 %1622, %v825
  %v1624 = vpop.permute.xlu0 %1623
  %v1625 = vlaneseq
  %v1626 = vshrl.u32 %v1625, 7
  %v1627 = vadd.s32 %v1626, 48
  %1628 = vset.pattern.permute.xlu0 %v1627
  %1629 = vperm.xlu0 %1628, %v838
  %v1630 = vpop.permute.xlu0 %1629
  %v1631 = vlaneseq
  %v1632 = vshrl.u32 %v1631, 7
  %v1633 = vadd.s32 %v1632, 56
  %1634 = vset.pattern.permute.xlu0 %v1633
  %1635 = vperm.xlu0 %1634, %v838
  %v1636 = vpop.permute.xlu0 %1635
  %v1637 = vlaneseq
  %v1638 = vshrl.u32 %v1637, 7
  %v1639 = vadd.s32 %v1638, 48
  %1640 = vset.pattern.permute.xlu0 %v1639
  %1641 = vperm.xlu0 %1640, %v851
  %v1642 = vpop.permute.xlu0 %1641
  %v1643 = vlaneseq
  %v1644 = vshrl.u32 %v1643, 7
  %v1645 = vadd.s32 %v1644, 56
  %1646 = vset.pattern.permute.xlu0 %v1645
  %1647 = vperm.xlu0 %1646, %v851
  %v1648 = vpop.permute.xlu0 %1647
  %1649 = vst.msk [vmem:[#allocation4] sm:$0xff] %vm1424, %v1462
  %1650 = vst.msk [vmem:[#allocation4 + $0x8] sm:$0xff] %vm1424, %v1468
  %1651 = vst.msk [vmem:[#allocation4 + $0x10] sm:$0xff] %vm1424, %v1474
  %1652 = vst.msk [vmem:[#allocation4 + $0x18] sm:$0xff] %vm1424, %v1480
  %1653 = vst.msk [vmem:[#allocation4 + $0x20] sm:$0xff] %vm1424, %v1486
  %1654 = vst.msk [vmem:[#allocation4 + $0x28] sm:$0xff] %vm1424, %v1492
  %1655 = vst.msk [vmem:[#allocation4 + $0x30] sm:$0xff] %vm1424, %v1498
  %1656 = vst.msk [vmem:[#allocation4 + $0x38] sm:$0xff] %vm1424, %v1504
  %1657 = vst.msk [vmem:[#allocation4 + $0x40] sm:$0xff] %vm1424, %v1510
  %1658 = vst.msk [vmem:[#allocation4 + $0x48] sm:$0xff] %vm1424, %v1516
  %1659 = vst.msk [vmem:[#allocation4 + $0x50] sm:$0xff] %vm1424, %v1522
  %1660 = vst.msk [vmem:[#allocation4 + $0x58] sm:$0xff] %vm1424, %v1528
  %1661 = vst.msk [vmem:[#allocation4 + $0x60] sm:$0xff] %vm1424, %v1534
  %1662 = vst.msk [vmem:[#allocation4 + $0x68] sm:$0xff] %vm1424, %v1540
  %1663 = vst.msk [vmem:[#allocation4 + $0x70] sm:$0xff] %vm1424, %v1546
  %1664 = vst.msk [vmem:[#allocation4 + $0x78] sm:$0xff] %vm1424, %v1552
  %1665 = vst.msk [vmem:[#allocation4 + $0x80] sm:$0xff] %vm1424, %v1558
  %1666 = vst.msk [vmem:[#allocation4 + $0x88] sm:$0xff] %vm1424, %v1564
  %1667 = vst.msk [vmem:[#allocation4 + $0x90] sm:$0xff] %vm1424, %v1570
  %1668 = vst.msk [vmem:[#allocation4 + $0x98] sm:$0xff] %vm1424, %v1576
  %1669 = vst.msk [vmem:[#allocation4 + $0xa0] sm:$0xff] %vm1424, %v1582
  %1670 = vst.msk [vmem:[#allocation4 + $0xa8] sm:$0xff] %vm1424, %v1588
  %1671 = vst.msk [vmem:[#allocation4 + $0xb0] sm:$0xff] %vm1424, %v1594
  %1672 = vst.msk [vmem:[#allocation4 + $0xb8] sm:$0xff] %vm1424, %v1600
  %1673 = vst.msk [vmem:[#allocation4 + $0xc0] sm:$0xff] %vm1424, %v1606
  %1674 = vst.msk [vmem:[#allocation4 + $0xc8] sm:$0xff] %vm1424, %v1612
  %1675 = vst.msk [vmem:[#allocation4 + $0xd0] sm:$0xff] %vm1424, %v1618
  %1676 = vst.msk [vmem:[#allocation4 + $0xd8] sm:$0xff] %vm1424, %v1624
  %1677 = vst.msk [vmem:[#allocation4 + $0xe0] sm:$0xff] %vm1424, %v1630
  %1678 = vst.msk [vmem:[#allocation4 + $0xe8] sm:$0xff] %vm1424, %v1636
  %1679 = vst.msk [vmem:[#allocation4 + $0xf0] sm:$0xff] %vm1424, %v1642
  %1680 = vst.msk [vmem:[#allocation4 + $0xf8] sm:$0xff] %vm1424, %v1648
  %v1681 = vld [vmem:[#allocation2] sm:$0xff]
  %v1682 = vld [vmem:[#allocation2 + $0x8] sm:$0xff]
  %v1683 = vmul.f32 %v1681, 0.0
  %v1684 = vmul.f32 %v1682, 0.0
  %v1685 = vld [vmem:[#allocation3] sm:$0xff]
  %v1686 = vld [vmem:[#allocation3 + $0x8] sm:$0xff]
  %v1687 = vadd.f32 %v1683, %v1685
  %v1688 = vadd.f32 %v1684, %v1686
  %v1689 = vld [vmem:[#allocation4] sm:$0xff]
  %v1690 = vld [vmem:[#allocation4 + $0x8] sm:$0xff]
  %v1691 = vmul.f32 %v1689, %v1687
  %v1692 = vmul.f32 %v1690, %v1688
  %v1693 = vadd.f32 %v1691, %v1692
  %v1694 = vrot.slane %v1693, 4
  %v1695 = vadd.f32 %v1693, %v1694
  %v1696 = vrot.slane %v1695, 2
  %v1697 = vadd.f32 %v1695, %v1696
  %v1698 = vrot.slane %v1697, 1
  %v1699 = vadd.f32 %v1697, %v1698
  %1700 = vst [vmem:[#allocation5] sm:$0x1] %v1699
  %s1701 = scalar_lea.vmem [#allocation2], 16
  %v1702 = vld [vmem:[%s1701] sm:$0xff]
  %v1703 = vld [vmem:[%s1701 + $0x8] sm:$0xff]
  %v1704 = vmul.f32 %v1702, %v1687
  %v1705 = vmul.f32 %v1703, %v1688
  %s1706 = scalar_lea.vmem [#allocation3], 16
  %v1707 = vld [vmem:[%s1706] sm:$0xff]
  %v1708 = vld [vmem:[%s1706 + $0x8] sm:$0xff]
  %v1709 = vadd.f32 %v1704, %v1707
  %v1710 = vadd.f32 %v1705, %v1708
  %s1711 = scalar_lea.vmem [#allocation4], 16
  %v1712 = vld [vmem:[%s1711] sm:$0xff]
  %v1713 = vld [vmem:[%s1711 + $0x8] sm:$0xff]
  %v1714 = vmul.f32 %v1712, %v1709
  %v1715 = vmul.f32 %v1713, %v1710
  %v1716 = vadd.f32 %v1714, %v1715
  %v1717 = vrot.slane %v1716, 4
  %v1718 = vadd.f32 %v1716, %v1717
  %v1719 = vrot.slane %v1718, 2
  %v1720 = vadd.f32 %v1718, %v1719
  %v1721 = vrot.slane %v1720, 1
  %v1722 = vadd.f32 %v1720, %v1721
  %1723 = vst [vmem:[#allocation5 + $0x1] sm:$0x1] %v1722
  %s1724 = scalar_lea.vmem [#allocation2], 32
  %v1725 = vld [vmem:[%s1724] sm:$0xff]
  %v1726 = vld [vmem:[%s1724 + $0x8] sm:$0xff]
  %v1727 = vmul.f32 %v1725, %v1709
  %v1728 = vmul.f32 %v1726, %v1710
  %s1729 = scalar_lea.vmem [#allocation3], 32
  %v1730 = vld [vmem:[%s1729] sm:$0xff]
  %v1731 = vld [vmem:[%s1729 + $0x8] sm:$0xff]
  %v1732 = vadd.f32 %v1727, %v1730
  %v1733 = vadd.f32 %v1728, %v1731
  %s1734 = scalar_lea.vmem [#allocation4], 32
  %v1735 = vld [vmem:[%s1734] sm:$0xff]
  %v1736 = vld [vmem:[%s1734 + $0x8] sm:$0xff]
  %v1737 = vmul.f32 %v1735, %v1732
  %v1738 = vmul.f32 %v1736, %v1733
  %v1739 = vadd.f32 %v1737, %v1738
  %v1740 = vrot.slane %v1739, 4
  %v1741 = vadd.f32 %v1739, %v1740
  %v1742 = vrot.slane %v1741, 2
  %v1743 = vadd.f32 %v1741, %v1742
  %v1744 = vrot.slane %v1743, 1
  %v1745 = vadd.f32 %v1743, %v1744
  %1746 = vst [vmem:[#allocation5 + $0x2] sm:$0x1] %v1745
  %s1747 = scalar_lea.vmem [#allocation2], 48
  %v1748 = vld [vmem:[%s1747] sm:$0xff]
  %v1749 = vld [vmem:[%s1747 + $0x8] sm:$0xff]
  %v1750 = vmul.f32 %v1748, %v1732
  %v1751 = vmul.f32 %v1749, %v1733
  %s1752 = scalar_lea.vmem [#allocation3], 48
  %v1753 = vld [vmem:[%s1752] sm:$0xff]
  %v1754 = vld [vmem:[%s1752 + $0x8] sm:$0xff]
  %v1755 = vadd.f32 %v1750, %v1753
  %v1756 = vadd.f32 %v1751, %v1754
  %s1757 = scalar_lea.vmem [#allocation4], 48
  %v1758 = vld [vmem:[%s1757] sm:$0xff]
  %v1759 = vld [vmem:[%s1757 + $0x8] sm:$0xff]
  %v1760 = vmul.f32 %v1758, %v1755
  %v1761 = vmul.f32 %v1759, %v1756
  %v1762 = vadd.f32 %v1760, %v1761
  %v1763 = vrot.slane %v1762, 4
  %v1764 = vadd.f32 %v1762, %v1763
  %v1765 = vrot.slane %v1764, 2
  %v1766 = vadd.f32 %v1764, %v1765
  %v1767 = vrot.slane %v1766, 1
  %v1768 = vadd.f32 %v1766, %v1767
  %1769 = vst [vmem:[#allocation5 + $0x3] sm:$0x1] %v1768
  %s1770 = scalar_lea.vmem [#allocation2], 64
  %v1771 = vld [vmem:[%s1770] sm:$0xff]
  %v1772 = vld [vmem:[%s1770 + $0x8] sm:$0xff]
  %v1773 = vmul.f32 %v1771, %v1755
  %v1774 = vmul.f32 %v1772, %v1756
  %s1775 = scalar_lea.vmem [#allocation3], 64
  %v1776 = vld [vmem:[%s1775] sm:$0xff]
  %v1777 = vld [vmem:[%s1775 + $0x8] sm:$0xff]
  %v1778 = vadd.f32 %v1773, %v1776
  %v1779 = vadd.f32 %v1774, %v1777
  %s1780 = scalar_lea.vmem [#allocation4], 64
  %v1781 = vld [vmem:[%s1780] sm:$0xff]
  %v1782 = vld [vmem:[%s1780 + $0x8] sm:$0xff]
  %v1783 = vmul.f32 %v1781, %v1778
  %v1784 = vmul.f32 %v1782, %v1779
  %v1785 = vadd.f32 %v1783, %v1784
  %v1786 = vrot.slane %v1785, 4
  %v1787 = vadd.f32 %v1785, %v1786
  %v1788 = vrot.slane %v1787, 2
  %v1789 = vadd.f32 %v1787, %v1788
  %v1790 = vrot.slane %v1789, 1
  %v1791 = vadd.f32 %v1789, %v1790
  %1792 = vst [vmem:[#allocation5 + $0x4] sm:$0x1] %v1791
  %s1793 = scalar_lea.vmem [#allocation2], 80
  %v1794 = vld [vmem:[%s1793] sm:$0xff]
  %v1795 = vld [vmem:[%s1793 + $0x8] sm:$0xff]
  %v1796 = vmul.f32 %v1794, %v1778
  %v1797 = vmul.f32 %v1795, %v1779
  %s1798 = scalar_lea.vmem [#allocation3], 80
  %v1799 = vld [vmem:[%s1798] sm:$0xff]
  %v1800 = vld [vmem:[%s1798 + $0x8] sm:$0xff]
  %v1801 = vadd.f32 %v1796, %v1799
  %v1802 = vadd.f32 %v1797, %v1800
  %s1803 = scalar_lea.vmem [#allocation4], 80
  %v1804 = vld [vmem:[%s1803] sm:$0xff]
  %v1805 = vld [vmem:[%s1803 + $0x8] sm:$0xff]
  %v1806 = vmul.f32 %v1804, %v1801
  %v1807 = vmul.f32 %v1805, %v1802
  %v1808 = vadd.f32 %v1806, %v1807
  %v1809 = vrot.slane %v1808, 4
  %v1810 = vadd.f32 %v1808, %v1809
  %v1811 = vrot.slane %v1810, 2
  %v1812 = vadd.f32 %v1810, %v1811
  %v1813 = vrot.slane %v1812, 1
  %v1814 = vadd.f32 %v1812, %v1813
  %1815 = vst [vmem:[#allocation5 + $0x5] sm:$0x1] %v1814
  %s1816 = scalar_lea.vmem [#allocation2], 96
  %v1817 = vld [vmem:[%s1816] sm:$0xff]
  %v1818 = vld [vmem:[%s1816 + $0x8] sm:$0xff]
  %v1819 = vmul.f32 %v1817, %v1801
  %v1820 = vmul.f32 %v1818, %v1802
  %s1821 = scalar_lea.vmem [#allocation3], 96
  %v1822 = vld [vmem:[%s1821] sm:$0xff]
  %v1823 = vld [vmem:[%s1821 + $0x8] sm:$0xff]
  %v1824 = vadd.f32 %v1819, %v1822
  %v1825 = vadd.f32 %v1820, %v1823
  %s1826 = scalar_lea.vmem [#allocation4], 96
  %v1827 = vld [vmem:[%s1826] sm:$0xff]
  %v1828 = vld [vmem:[%s1826 + $0x8] sm:$0xff]
  %v1829 = vmul.f32 %v1827, %v1824
  %v1830 = vmul.f32 %v1828, %v1825
  %v1831 = vadd.f32 %v1829, %v1830
  %v1832 = vrot.slane %v1831, 4
  %v1833 = vadd.f32 %v1831, %v1832
  %v1834 = vrot.slane %v1833, 2
  %v1835 = vadd.f32 %v1833, %v1834
  %v1836 = vrot.slane %v1835, 1
  %v1837 = vadd.f32 %v1835, %v1836
  %1838 = vst [vmem:[#allocation5 + $0x6] sm:$0x1] %v1837
  %s1839 = scalar_lea.vmem [#allocation2], 112
  %v1840 = vld [vmem:[%s1839] sm:$0xff]
  %v1841 = vld [vmem:[%s1839 + $0x8] sm:$0xff]
  %v1842 = vmul.f32 %v1840, %v1824
  %v1843 = vmul.f32 %v1841, %v1825
  %s1844 = scalar_lea.vmem [#allocation3], 112
  %v1845 = vld [vmem:[%s1844] sm:$0xff]
  %v1846 = vld [vmem:[%s1844 + $0x8] sm:$0xff]
  %v1847 = vadd.f32 %v1842, %v1845
  %v1848 = vadd.f32 %v1843, %v1846
  %s1849 = scalar_lea.vmem [#allocation4], 112
  %v1850 = vld [vmem:[%s1849] sm:$0xff]
  %v1851 = vld [vmem:[%s1849 + $0x8] sm:$0xff]
  %v1852 = vmul.f32 %v1850, %v1847
  %v1853 = vmul.f32 %v1851, %v1848
  %v1854 = vadd.f32 %v1852, %v1853
  %v1855 = vrot.slane %v1854, 4
  %v1856 = vadd.f32 %v1854, %v1855
  %v1857 = vrot.slane %v1856, 2
  %v1858 = vadd.f32 %v1856, %v1857
  %v1859 = vrot.slane %v1858, 1
  %v1860 = vadd.f32 %v1858, %v1859
  %1861 = vst [vmem:[#allocation5 + $0x7] sm:$0x1] %v1860
  %v1862 = vld [vmem:[%s639] sm:$0xff]
  %v1863 = vld [vmem:[%s639 + $0x8] sm:$0xff]
  %v1864 = vmul.f32 %v1862, %v1847
  %v1865 = vmul.f32 %v1863, %v1848
  %s1866 = scalar_lea.vmem [#allocation3], 128
  %v1867 = vld [vmem:[%s1866] sm:$0xff]
  %v1868 = vld [vmem:[%s1866 + $0x8] sm:$0xff]
  %v1869 = vadd.f32 %v1864, %v1867
  %v1870 = vadd.f32 %v1865, %v1868
  %s1871 = scalar_lea.vmem [#allocation4], 128
  %v1872 = vld [vmem:[%s1871] sm:$0xff]
  %v1873 = vld [vmem:[%s1871 + $0x8] sm:$0xff]
  %v1874 = vmul.f32 %v1872, %v1869
  %v1875 = vmul.f32 %v1873, %v1870
  %v1876 = vadd.f32 %v1874, %v1875
  %v1877 = vrot.slane %v1876, 4
  %v1878 = vadd.f32 %v1876, %v1877
  %v1879 = vrot.slane %v1878, 2
  %v1880 = vadd.f32 %v1878, %v1879
  %v1881 = vrot.slane %v1880, 1
  %v1882 = vadd.f32 %v1880, %v1881
  %1883 = vst [vmem:[#allocation5 + $0x8] sm:$0x1] %v1882
  %s1884 = scalar_lea.vmem [#allocation2], 144
  %v1885 = vld [vmem:[%s1884] sm:$0xff]
  %v1886 = vld [vmem:[%s1884 + $0x8] sm:$0xff]
  %v1887 = vmul.f32 %v1885, %v1869
  %v1888 = vmul.f32 %v1886, %v1870
  %s1889 = scalar_lea.vmem [#allocation3], 144
  %v1890 = vld [vmem:[%s1889] sm:$0xff]
  %v1891 = vld [vmem:[%s1889 + $0x8] sm:$0xff]
  %v1892 = vadd.f32 %v1887, %v1890
  %v1893 = vadd.f32 %v1888, %v1891
  %s1894 = scalar_lea.vmem [#allocation4], 144
  %v1895 = vld [vmem:[%s1894] sm:$0xff]
  %v1896 = vld [vmem:[%s1894 + $0x8] sm:$0xff]
  %v1897 = vmul.f32 %v1895, %v1892
  %v1898 = vmul.f32 %v1896, %v1893
  %v1899 = vadd.f32 %v1897, %v1898
  %v1900 = vrot.slane %v1899, 4
  %v1901 = vadd.f32 %v1899, %v1900
  %v1902 = vrot.slane %v1901, 2
  %v1903 = vadd.f32 %v1901, %v1902
  %v1904 = vrot.slane %v1903, 1
  %v1905 = vadd.f32 %v1903, %v1904
  %1906 = vst [vmem:[#allocation5 + $0x9] sm:$0x1] %v1905
  %s1907 = scalar_lea.vmem [#allocation2], 160
  %v1908 = vld [vmem:[%s1907] sm:$0xff]
  %v1909 = vld [vmem:[%s1907 + $0x8] sm:$0xff]
  %v1910 = vmul.f32 %v1908, %v1892
  %v1911 = vmul.f32 %v1909, %v1893
  %s1912 = scalar_lea.vmem [#allocation3], 160
  %v1913 = vld [vmem:[%s1912] sm:$0xff]
  %v1914 = vld [vmem:[%s1912 + $0x8] sm:$0xff]
  %v1915 = vadd.f32 %v1910, %v1913
  %v1916 = vadd.f32 %v1911, %v1914
  %s1917 = scalar_lea.vmem [#allocation4], 160
  %v1918 = vld [vmem:[%s1917] sm:$0xff]
  %v1919 = vld [vmem:[%s1917 + $0x8] sm:$0xff]
  %v1920 = vmul.f32 %v1918, %v1915
  %v1921 = vmul.f32 %v1919, %v1916
  %v1922 = vadd.f32 %v1920, %v1921
  %v1923 = vrot.slane %v1922, 4
  %v1924 = vadd.f32 %v1922, %v1923
  %v1925 = vrot.slane %v1924, 2
  %v1926 = vadd.f32 %v1924, %v1925
  %v1927 = vrot.slane %v1926, 1
  %v1928 = vadd.f32 %v1926, %v1927
  %1929 = vst [vmem:[#allocation5 + $0xa] sm:$0x1] %v1928
  %s1930 = scalar_lea.vmem [#allocation2], 176
  %v1931 = vld [vmem:[%s1930] sm:$0xff]
  %v1932 = vld [vmem:[%s1930 + $0x8] sm:$0xff]
  %v1933 = vmul.f32 %v1931, %v1915
  %v1934 = vmul.f32 %v1932, %v1916
  %s1935 = scalar_lea.vmem [#allocation3], 176
  %v1936 = vld [vmem:[%s1935] sm:$0xff]
  %v1937 = vld [vmem:[%s1935 + $0x8] sm:$0xff]
  %v1938 = vadd.f32 %v1933, %v1936
  %v1939 = vadd.f32 %v1934, %v1937
  %s1940 = scalar_lea.vmem [#allocation4], 176
  %v1941 = vld [vmem:[%s1940] sm:$0xff]
  %v1942 = vld [vmem:[%s1940 + $0x8] sm:$0xff]
  %v1943 = vmul.f32 %v1941, %v1938
  %v1944 = vmul.f32 %v1942, %v1939
  %v1945 = vadd.f32 %v1943, %v1944
  %v1946 = vrot.slane %v1945, 4
  %v1947 = vadd.f32 %v1945, %v1946
  %v1948 = vrot.slane %v1947, 2
  %v1949 = vadd.f32 %v1947, %v1948
  %v1950 = vrot.slane %v1949, 1
  %v1951 = vadd.f32 %v1949, %v1950
  %1952 = vst [vmem:[#allocation5 + $0xb] sm:$0x1] %v1951
  %s1953 = scalar_lea.vmem [#allocation2], 192
  %v1954 = vld [vmem:[%s1953] sm:$0xff]
  %v1955 = vld [vmem:[%s1953 + $0x8] sm:$0xff]
  %v1956 = vmul.f32 %v1954, %v1938
  %v1957 = vmul.f32 %v1955, %v1939
  %s1958 = scalar_lea.vmem [#allocation3], 192
  %v1959 = vld [vmem:[%s1958] sm:$0xff]
  %v1960 = vld [vmem:[%s1958 + $0x8] sm:$0xff]
  %v1961 = vadd.f32 %v1956, %v1959
  %v1962 = vadd.f32 %v1957, %v1960
  %s1963 = scalar_lea.vmem [#allocation4], 192
  %v1964 = vld [vmem:[%s1963] sm:$0xff]
  %v1965 = vld [vmem:[%s1963 + $0x8] sm:$0xff]
  %v1966 = vmul.f32 %v1964, %v1961
  %v1967 = vmul.f32 %v1965, %v1962
  %v1968 = vadd.f32 %v1966, %v1967
  %v1969 = vrot.slane %v1968, 4
  %v1970 = vadd.f32 %v1968, %v1969
  %v1971 = vrot.slane %v1970, 2
  %v1972 = vadd.f32 %v1970, %v1971
  %v1973 = vrot.slane %v1972, 1
  %v1974 = vadd.f32 %v1972, %v1973
  %1975 = vst [vmem:[#allocation5 + $0xc] sm:$0x1] %v1974
  %s1976 = scalar_lea.vmem [#allocation2], 208
  %v1977 = vld [vmem:[%s1976] sm:$0xff]
  %v1978 = vld [vmem:[%s1976 + $0x8] sm:$0xff]
  %v1979 = vmul.f32 %v1977, %v1961
  %v1980 = vmul.f32 %v1978, %v1962
  %s1981 = scalar_lea.vmem [#allocation3], 208
  %v1982 = vld [vmem:[%s1981] sm:$0xff]
  %v1983 = vld [vmem:[%s1981 + $0x8] sm:$0xff]
  %v1984 = vadd.f32 %v1979, %v1982
  %v1985 = vadd.f32 %v1980, %v1983
  %s1986 = scalar_lea.vmem [#allocation4], 208
  %v1987 = vld [vmem:[%s1986] sm:$0xff]
  %v1988 = vld [vmem:[%s1986 + $0x8] sm:$0xff]
  %v1989 = vmul.f32 %v1987, %v1984
  %v1990 = vmul.f32 %v1988, %v1985
  %v1991 = vadd.f32 %v1989, %v1990
  %v1992 = vrot.slane %v1991, 4
  %v1993 = vadd.f32 %v1991, %v1992
  %v1994 = vrot.slane %v1993, 2
  %v1995 = vadd.f32 %v1993, %v1994
  %v1996 = vrot.slane %v1995, 1
  %v1997 = vadd.f32 %v1995, %v1996
  %1998 = vst [vmem:[#allocation5 + $0xd] sm:$0x1] %v1997
  %s1999 = scalar_lea.vmem [#allocation2], 224
  %v2000 = vld [vmem:[%s1999] sm:$0xff]
  %v2001 = vld [vmem:[%s1999 + $0x8] sm:$0xff]
  %v2002 = vmul.f32 %v2000, %v1984
  %v2003 = vmul.f32 %v2001, %v1985
  %s2004 = scalar_lea.vmem [#allocation3], 224
  %v2005 = vld [vmem:[%s2004] sm:$0xff]
  %v2006 = vld [vmem:[%s2004 + $0x8] sm:$0xff]
  %v2007 = vadd.f32 %v2002, %v2005
  %v2008 = vadd.f32 %v2003, %v2006
  %s2009 = scalar_lea.vmem [#allocation4], 224
  %v2010 = vld [vmem:[%s2009] sm:$0xff]
  %v2011 = vld [vmem:[%s2009 + $0x8] sm:$0xff]
  %v2012 = vmul.f32 %v2010, %v2007
  %v2013 = vmul.f32 %v2011, %v2008
  %v2014 = vadd.f32 %v2012, %v2013
  %v2015 = vrot.slane %v2014, 4
  %v2016 = vadd.f32 %v2014, %v2015
  %v2017 = vrot.slane %v2016, 2
  %v2018 = vadd.f32 %v2016, %v2017
  %v2019 = vrot.slane %v2018, 1
  %v2020 = vadd.f32 %v2018, %v2019
  %2021 = vst [vmem:[#allocation5 + $0xe] sm:$0x1] %v2020
  %s2022 = scalar_lea.vmem [#allocation2], 240
  %v2023 = vld [vmem:[%s2022] sm:$0xff]
  %v2024 = vld [vmem:[%s2022 + $0x8] sm:$0xff]
  %v2025 = vmul.f32 %v2023, %v2007
  %v2026 = vmul.f32 %v2024, %v2008
  %s2027 = scalar_lea.vmem [#allocation3], 240
  %v2028 = vld [vmem:[%s2027] sm:$0xff]
  %v2029 = vld [vmem:[%s2027 + $0x8] sm:$0xff]
  %v2030 = vadd.f32 %v2025, %v2028
  %v2031 = vadd.f32 %v2026, %v2029
  %s2032 = scalar_lea.vmem [#allocation4], 240
  %v2033 = vld [vmem:[%s2032] sm:$0xff]
  %v2034 = vld [vmem:[%s2032 + $0x8] sm:$0xff]
  %v2035 = vmul.f32 %v2033, %v2030
  %v2036 = vmul.f32 %v2034, %v2031
  %v2037 = vadd.f32 %v2035, %v2036
  %v2038 = vrot.slane %v2037, 4
  %v2039 = vadd.f32 %v2037, %v2038
  %v2040 = vrot.slane %v2039, 2
  %v2041 = vadd.f32 %v2039, %v2040
  %v2042 = vrot.slane %v2041, 1
  %v2043 = vadd.f32 %v2041, %v2042
  %2044 = vst [vmem:[#allocation5 + $0xf] sm:$0x1] %v2043
  %v2045 = vld [vmem:[#allocation5] sm:$0xff]
  %v2046 = vld [vmem:[#allocation5 + $0x8] sm:$0xff]
  %v2048 = vperm.slane %v121, 0
  %v2050 = vmul.f32 %v2048, %v406
  %v2051 = vmul.f32 %v2048, %v407
  %v2052 = vadd.f32 %v2045, %v2050
  %v2053 = vadd.f32 %v2046, %v2051
  %v2054 = vand.u32 2147483647, %v280
  %v2055 = vand.u32 2147483647, %v283
  %v2056 = vsub.f32 0.0, %v2054
  %v2057 = vsub.f32 0.0, %v2055
  %v2058 = vmul.f32 %v2056, 1.442695
  %v2059 = vpow.pop %v2058
  %v2060 = vmul.f32 %v2057, 1.442695
  %v2061 = vpow.pop %v2060
  %vm2062 = vcmp.ge.f32.partialorder %v280, 0.0
  %vm2063 = vcmp.ge.f32.partialorder %v283, 0.0
  %v2064 = vsel %vm2062, 1.0, %v2059
  %v2065 = vsel %vm2063, 1.0, %v2061
  %v2066 = vadd.f32 %v2059, 1.0
  %v2067 = vadd.f32 %v2061, 1.0
  %v2068 = vrcp.pop %v2066
  %v2069 = vmul.f32 %v2066, %v2068
  %v2070 = vsub.f32 1.0, %v2069
  %v2071 = vmul.f32 %v2068, %v2070
  %v2072 = vadd.f32 %v2068, %v2071
  %vm2073 = vweird.f32 %v2066
  %vm2074 = vweird.f32 %v2068
  %vm2075 = vmor %vm2073, %vm2074
  %v2076 = vsel %vm2075, %v2068, %v2072
  %v2077 = vand.u32 2147483647, %v2066
  %vm2078 = vcmp.eq.f32.partialorder %v2077, 8.507059e+37
  %v2079 = vand.u32 %v2066, 2147483648
  %v2080 = vor.u32 1.1754944e-38, %v2079
  %v2081 = vsel %vm2078, %v2080, %v2076
  %v2082 = vmul.f32 %v2064, %v2081
  %v2083 = vrcp.pop %v2067
  %v2084 = vmul.f32 %v2067, %v2083
  %v2085 = vsub.f32 1.0, %v2084
  %v2086 = vmul.f32 %v2083, %v2085
  %v2087 = vadd.f32 %v2083, %v2086
  %vm2088 = vweird.f32 %v2067
  %vm2089 = vweird.f32 %v2083
  %vm2090 = vmor %vm2088, %vm2089
  %v2091 = vsel %vm2090, %v2083, %v2087
  %v2092 = vand.u32 2147483647, %v2067
  %vm2093 = vcmp.eq.f32.partialorder %v2092, 8.507059e+37
  %v2094 = vand.u32 %v2067, 2147483648
  %v2095 = vor.u32 1.1754944e-38, %v2094
  %v2096 = vsel %vm2093, %v2095, %v2091
  %v2097 = vmul.f32 %v2065, %v2096
  %v2098 = vmul.f32 %v280, %v2082
  %v2099 = vmul.f32 %v283, %v2097
  %v2100 = vmul.f32 %v2052, %v2098
  %v2101 = vmul.f32 %v2053, %v2099
  %s2102 = scalar_lea.vmem %s3, 1
  %v2103 = vld [vmem:[%s2102] sm:$0x1]
  %s2104 = scalar_lea.vmem %s4, 1
  %v2105 = vld [vmem:[%s2104] sm:$0x1]
  %s2106 = scalar_lea.vmem %s5, 128
  %v2107 = vld [vmem:[%s2106] sm:$0xff]
  %v2108 = vld [vmem:[%s2106 + $0x8] sm:$0xff]
  %v2109 = vld [vmem:[%s2106 + $0x10] sm:$0xff]
  %v2110 = vld [vmem:[%s2106 + $0x18] sm:$0xff]
  %v2111 = vld [vmem:[%s2106 + $0x20] sm:$0xff]
  %v2112 = vld [vmem:[%s2106 + $0x28] sm:$0xff]
  %v2113 = vld [vmem:[%s2106 + $0x30] sm:$0xff]
  %v2114 = vld [vmem:[%s2106 + $0x38] sm:$0xff]
  %v2115 = vld [vmem:[%s2106 + $0x40] sm:$0xff]
  %v2116 = vld [vmem:[%s2106 + $0x48] sm:$0xff]
  %v2117 = vld [vmem:[%s2106 + $0x50] sm:$0xff]
  %v2118 = vld [vmem:[%s2106 + $0x58] sm:$0xff]
  %v2119 = vld [vmem:[%s2106 + $0x60] sm:$0xff]
  %v2120 = vld [vmem:[%s2106 + $0x68] sm:$0xff]
  %v2121 = vld [vmem:[%s2106 + $0x70] sm:$0xff]
  %v2122 = vld [vmem:[%s2106 + $0x78] sm:$0xff]
  %s2123 = scalar_lea.vmem %s6, 4
  %v2124 = vld [vmem:[%s2123] sm:$0xf]
  %s2125 = scalar_lea.vmem %s7, 1
  %v2126 = vld [vmem:[%s2125] sm:$0x1]
  %s2127 = scalar_lea.vmem %s8, 256
  %v2128 = vld [vmem:[%s2127] sm:$0xff]
  %v2129 = vld [vmem:[%s2127 + $0x8] sm:$0xff]
  %v2130 = vld [vmem:[%s2127 + $0x10] sm:$0xff]
  %v2131 = vld [vmem:[%s2127 + $0x18] sm:$0xff]
  %v2132 = vld [vmem:[%s2127 + $0x20] sm:$0xff]
  %v2133 = vld [vmem:[%s2127 + $0x28] sm:$0xff]
  %v2134 = vld [vmem:[%s2127 + $0x30] sm:$0xff]
  %v2135 = vld [vmem:[%s2127 + $0x38] sm:$0xff]
  %v2136 = vld [vmem:[%s2127 + $0x40] sm:$0xff]
  %v2137 = vld [vmem:[%s2127 + $0x48] sm:$0xff]
  %v2138 = vld [vmem:[%s2127 + $0x50] sm:$0xff]
  %v2139 = vld [vmem:[%s2127 + $0x58] sm:$0xff]
  %v2140 = vld [vmem:[%s2127 + $0x60] sm:$0xff]
  %v2141 = vld [vmem:[%s2127 + $0x68] sm:$0xff]
  %v2142 = vld [vmem:[%s2127 + $0x70] sm:$0xff]
  %v2143 = vld [vmem:[%s2127 + $0x78] sm:$0xff]
  %v2144 = vld [vmem:[%s2127 + $0x80] sm:$0xff]
  %v2145 = vld [vmem:[%s2127 + $0x88] sm:$0xff]
  %v2146 = vld [vmem:[%s2127 + $0x90] sm:$0xff]
  %v2147 = vld [vmem:[%s2127 + $0x98] sm:$0xff]
  %v2148 = vld [vmem:[%s2127 + $0xa0] sm:$0xff]
  %v2149 = vld [vmem:[%s2127 + $0xa8] sm:$0xff]
  %v2150 = vld [vmem:[%s2127 + $0xb0] sm:$0xff]
  %v2151 = vld [vmem:[%s2127 + $0xb8] sm:$0xff]
  %v2152 = vld [vmem:[%s2127 + $0xc0] sm:$0xff]
  %v2153 = vld [vmem:[%s2127 + $0xc8] sm:$0xff]
  %v2154 = vld [vmem:[%s2127 + $0xd0] sm:$0xff]
  %v2155 = vld [vmem:[%s2127 + $0xd8] sm:$0xff]
  %v2156 = vld [vmem:[%s2127 + $0xe0] sm:$0xff]
  %v2157 = vld [vmem:[%s2127 + $0xe8] sm:$0xff]
  %v2158 = vld [vmem:[%s2127 + $0xf0] sm:$0xff]
  %v2159 = vld [vmem:[%s2127 + $0xf8] sm:$0xff]
  %s2160 = scalar_lea.vmem %s9, 1
  %v2161 = vld [vmem:[%s2160] sm:$0x1]
  %s2162 = scalar_lea.vmem %s10, 16
  %v2163 = vld [vmem:[%s2162] sm:$0xff]
  %v2164 = vld [vmem:[%s2162 + $0x8] sm:$0xff]
  %s2165 = scalar_lea.vmem %s11, 1
  %v2166 = vld [vmem:[%s2165] sm:$0x1]
  %s2167 = scalar_lea.vmem %s12, 128
  %v2168 = vld [vmem:[%s2167] sm:$0xff]
  %v2169 = vld [vmem:[%s2167 + $0x8] sm:$0xff]
  %v2170 = vld [vmem:[%s2167 + $0x10] sm:$0xff]
  %v2171 = vld [vmem:[%s2167 + $0x18] sm:$0xff]
  %v2172 = vld [vmem:[%s2167 + $0x20] sm:$0xff]
  %v2173 = vld [vmem:[%s2167 + $0x28] sm:$0xff]
  %v2174 = vld [vmem:[%s2167 + $0x30] sm:$0xff]
  %v2175 = vld [vmem:[%s2167 + $0x38] sm:$0xff]
  %v2176 = vld [vmem:[%s2167 + $0x40] sm:$0xff]
  %v2177 = vld [vmem:[%s2167 + $0x48] sm:$0xff]
  %v2178 = vld [vmem:[%s2167 + $0x50] sm:$0xff]
  %v2179 = vld [vmem:[%s2167 + $0x58] sm:$0xff]
  %v2180 = vld [vmem:[%s2167 + $0x60] sm:$0xff]
  %v2181 = vld [vmem:[%s2167 + $0x68] sm:$0xff]
  %v2182 = vld [vmem:[%s2167 + $0x70] sm:$0xff]
  %v2183 = vld [vmem:[%s2167 + $0x78] sm:$0xff]
  %2184 = vmatpush.msra.mxu0 %v137
  %2185 = vmatpush.msra.mxu0 %v136
  %2186 = vmatpush.msra.mxu0 %v135
  %2187 = vmatpush.msra.mxu0 %v134
  %2188 = vmatpush.msra.mxu0 %v133
  %2189 = vmatpush.msra.mxu0 %v132
  %2190 = vmatpush.msra.mxu0 %v131
  %2191 = vmatpush.msra.mxu0 %v130
  %2192 = vmatpush.msra.mxu0 %v129
  %2193 = vmatpush.msra.mxu0 %v128
  %2194 = vmatpush.msra.mxu0 %v127
  %2195 = vmatpush.msra.mxu0 %v126
  %2196 = vmatpush.msra.mxu0 %v125
  %2197 = vmatpush.msra.mxu0 %v124
  %2198 = vmatpush.msra.mxu0 %v123
  %2199 = vmatpush.msra.mxu0 %v122
  %2200 = vmatmul.f32.gmra.mxu0 %v2100
  %v2201 = vpop.f32.mrf.mxu0
  %v2202 = vadd.f32 %v64, %v2201
  %2203 = vmatmul.f32.gmra.mxu0 %v2101
  %v2204 = vpop.f32.mrf.mxu0
  %v2205 = vadd.f32 %v65, %v2204
  %2206 = vdwg.mxu0
  %v2208 = vsel %vm138, %v2202, 0
  %v2211 = vsel %vm138, %v2205, 0
  %2213 = vmatpush.msra.mxu0 0.0
  %2214 = vmatpush.msra.mxu0 0.0
  %2215 = vmatpush.msra.mxu0 0.0
  %2216 = vmatpush.msra.mxu0 0.0
  %2217 = vmatpush.msra.mxu0 0.0
  %2218 = vmatpush.msra.mxu0 0.0
  %2219 = vmatpush.msra.mxu0 0.0
  %2220 = vmatpush.msra.mxu0 0.0
  %2221 = vmatpush.msra.mxu0 %v57
  %2222 = vmatpush.msra.mxu0 %v56
  %2223 = vmatpush.msra.mxu0 %v55
  %2224 = vmatpush.msra.mxu0 %v54
  %2225 = vmatpush.msra.mxu0 %v53
  %2226 = vmatpush.msra.mxu0 %v52
  %2227 = vmatpush.msra.mxu0 %v51
  %2228 = vmatpush.msra.mxu0 %v50
  %2229 = vmatmul.f32.gmra.mxu0 %v2208
  %v2230 = vpop.f32.mrf.mxu0
  %v2231 = vadd.f32 0.0, %v2230
  %2232 = vmatmul.f32.gmra.mxu0 %v2211
  %v2233 = vpop.f32.mrf.mxu0
  %v2234 = vadd.f32 0.0, %v2233
  %2235 = vdwg.mxu0
  %v2236 = vsub.f32 %v2202, %v2231
  %v2237 = vsub.f32 %v2205, %v2234
  %v2238 = vmul.f32 %v2236, %v2236
  %v2239 = vmul.f32 %v2237, %v2237
  %v2241 = vsel %vm138, %v2238, 0
  %v2244 = vsel %vm138, %v2239, 0
  %2246 = vmatpush.msra.mxu0 0.0
  %2247 = vmatpush.msra.mxu0 0.0
  %2248 = vmatpush.msra.mxu0 0.0
  %2249 = vmatpush.msra.mxu0 0.0
  %2250 = vmatpush.msra.mxu0 0.0
  %2251 = vmatpush.msra.mxu0 0.0
  %2252 = vmatpush.msra.mxu0 0.0
  %2253 = vmatpush.msra.mxu0 0.0
  %2254 = vmatpush.msra.mxu0 %v57
  %2255 = vmatpush.msra.mxu0 %v56
  %2256 = vmatpush.msra.mxu0 %v55
  %2257 = vmatpush.msra.mxu0 %v54
  %2258 = vmatpush.msra.mxu0 %v53
  %2259 = vmatpush.msra.mxu0 %v52
  %2260 = vmatpush.msra.mxu0 %v51
  %2261 = vmatpush.msra.mxu0 %v50
  %2262 = vmatmul.f32.gmra.mxu0 %v2241
  %v2263 = vpop.f32.mrf.mxu0
  %v2264 = vadd.f32 1e-05, %v2263
  %2265 = vmatmul.f32.gmra.mxu0 %v2244
  %v2266 = vpop.f32.mrf.mxu0
  %v2267 = vadd.f32 1e-05, %v2266
  %2268 = vdwg.mxu0
  %v2269 = vrsqrt.pop %v2264
  %v2270 = vmul.f32 %v2269, %v2264
  %v2271 = vmul.f32 %v2270, %v2269
  %v2272 = vmul.f32 0.5, %v2271
  %v2273 = vsub.f32 1.5, %v2272
  %v2274 = vmul.f32 %v2269, %v2273
  %vm2275 = vweird.f32 %v2264
  %vm2276 = vweird.f32 %v2269
  %vm2277 = vmor %vm2275, %vm2276
  %v2278 = vsel %vm2277, %v2269, %v2274
  %v2279 = vrsqrt.pop %v2267
  %v2280 = vmul.f32 %v2279, %v2267
  %v2281 = vmul.f32 %v2280, %v2279
  %v2282 = vmul.f32 0.5, %v2281
  %v2283 = vsub.f32 1.5, %v2282
  %v2284 = vmul.f32 %v2279, %v2283
  %vm2285 = vweird.f32 %v2267
  %vm2286 = vweird.f32 %v2279
  %vm2287 = vmor %vm2285, %vm2286
  %v2288 = vsel %vm2287, %v2279, %v2284
  %v2289 = vmul.f32 %v2236, %v2278
  %v2290 = vmul.f32 %v2237, %v2288
  %v2292 = vperm.slane %v2103, 0
  %v2294 = vmul.f32 %v2289, %v2292
  %v2295 = vmul.f32 %v2290, %v2292
  %v2297 = vperm.slane %v2105, 0
  %v2299 = vadd.f32 %v2294, %v2297
  %v2300 = vadd.f32 %v2295, %v2297
  %v2302 = vsel %vm138, %v2299, 0
  %v2305 = vsel %vm138, %v2300, 0
  %2307 = vmatpush.msra.mxu0 0.0
  %2308 = vmatpush.msra.mxu0 0.0
  %2309 = vmatpush.msra.mxu0 0.0
  %2310 = vmatpush.msra.mxu0 0.0
  %2311 = vmatpush.msra.mxu0 0.0
  %2312 = vmatpush.msra.mxu0 0.0
  %2313 = vmatpush.msra.mxu0 0.0
  %2314 = vmatpush.msra.mxu0 0.0
  %2315 = vmatpush.msra.mxu0 %v2121
  %2316 = vmatpush.msra.mxu0 %v2119
  %2317 = vmatpush.msra.mxu0 %v2117
  %2318 = vmatpush.msra.mxu0 %v2115
  %2319 = vmatpush.msra.mxu0 %v2113
  %2320 = vmatpush.msra.mxu0 %v2111
  %2321 = vmatpush.msra.mxu0 %v2109
  %2322 = vmatpush.msra.mxu0 %v2107
  %2323 = vmatmul.f32.gmra.mxu0 %v2302
  %v2324 = vpop.f32.mrf.mxu0
  %v2325 = vadd.f32 0.0, %v2324
  %2326 = vmatmul.f32.gmra.mxu0 %v2305
  %v2327 = vpop.f32.mrf.mxu0
  %v2328 = vadd.f32 0.0, %v2327
  %2329 = vdwg.mxu0
  %2330 = vmatpush.msra.mxu0 0.0
  %2331 = vmatpush.msra.mxu0 0.0
  %2332 = vmatpush.msra.mxu0 0.0
  %2333 = vmatpush.msra.mxu0 0.0
  %2334 = vmatpush.msra.mxu0 0.0
  %2335 = vmatpush.msra.mxu0 0.0
  %2336 = vmatpush.msra.mxu0 0.0
  %2337 = vmatpush.msra.mxu0 0.0
  %2338 = vmatpush.msra.mxu0 %v2122
  %2339 = vmatpush.msra.mxu0 %v2120
  %2340 = vmatpush.msra.mxu0 %v2118
  %2341 = vmatpush.msra.mxu0 %v2116
  %2342 = vmatpush.msra.mxu0 %v2114
  %2343 = vmatpush.msra.mxu0 %v2112
  %2344 = vmatpush.msra.mxu0 %v2110
  %2345 = vmatpush.msra.mxu0 %v2108
  %2346 = vmatmul.f32.gmra.mxu0 %v2302
  %v2347 = vpop.f32.mrf.mxu0
  %v2348 = vadd.f32 0.0, %v2347
  %2349 = vmatmul.f32.gmra.mxu0 %v2305
  %v2350 = vpop.f32.mrf.mxu0
  %v2351 = vadd.f32 0.0, %v2350
  %2352 = vdwg.mxu0
  %2353 = vmatpush.msra.mxu0 0.0
  %2354 = vmatpush.msra.mxu0 0.0
  %2355 = vmatpush.msra.mxu0 0.0
  %2356 = vmatpush.msra.mxu0 0.0
  %2357 = vmatpush.msra.mxu0 0.0
  %2358 = vmatpush.msra.mxu0 0.0
  %2359 = vmatpush.msra.mxu0 0.0
  %2360 = vmatpush.msra.mxu0 0.0
  %2361 = vmatpush.msra.mxu0 0.0
  %2362 = vmatpush.msra.mxu0 0.0
  %2363 = vmatpush.msra.mxu0 0.0
  %2364 = vmatpush.msra.mxu0 0.0
  %2365 = vmatpush.msra.mxu0 0.0
  %2366 = vmatpush.msra.mxu0 0.0
  %2367 = vmatpush.msra.mxu0 %v2328
  %2368 = vmatpush.msra.mxu0 %v2325
  %2369 = vmatmul.f32.gmra.mxu0 %v287
  %v2370 = vpop.f32.mrf.mxu0
  %v2371 = vadd.f32 0.0, %v2370
  %2372 = vmatmul.f32.gmra.mxu0 %v290
  %v2373 = vpop.f32.mrf.mxu0
  %v2374 = vadd.f32 0.0, %v2373
  %2375 = vmatmul.f32.gmra.mxu0 %v293
  %v2376 = vpop.f32.mrf.mxu0
  %v2377 = vadd.f32 0.0, %v2376
  %2378 = vmatmul.f32.gmra.mxu0 %v296
  %v2379 = vpop.f32.mrf.mxu0
  %v2380 = vadd.f32 0.0, %v2379
  %2381 = vmatmul.f32.gmra.mxu0 %v299
  %v2382 = vpop.f32.mrf.mxu0
  %v2383 = vadd.f32 0.0, %v2382
  %2384 = vmatmul.f32.gmra.mxu0 %v302
  %v2385 = vpop.f32.mrf.mxu0
  %v2386 = vadd.f32 0.0, %v2385
  %2387 = vdwg.mxu0
  %v2388 = vperm.slane %v2124, 3
  %v2389 = vmul.f32 %v2325, %v2388
  %v2390 = vmul.f32 %v2328, %v2388
  %v2392 = vperm.slane %v2126, 0
  %v2394 = vadd.f32 %v2392, %v2389
  %v2395 = vadd.f32 %v2392, %v2390
  %v2396 = vperm.slane %v2124, 0
  %v2397 = vmul.f32 %v2383, %v2396
  %v2398 = vmul.f32 %v2386, %v2396
  %v2399 = vadd.f32 %v2394, %v2397
  %v2400 = vadd.f32 %v2395, %v2398
  %v2401 = vperm.slane %v2124, 1
  %v2402 = vmul.f32 %v2377, %v2401
  %v2403 = vmul.f32 %v2380, %v2401
  %v2404 = vadd.f32 %v2399, %v2402
  %v2405 = vadd.f32 %v2400, %v2403
  %v2406 = vperm.slane %v2124, 2
  %v2407 = vmul.f32 %v2371, %v2406
  %v2408 = vmul.f32 %v2374, %v2406
  %v2409 = vadd.f32 %v2404, %v2407
  %v2410 = vadd.f32 %v2405, %v2408
  %v2411 = vand.u32 2147483647, %v2409
  %v2412 = vand.u32 2147483647, %v2410
  %v2413 = vsub.f32 0.0, %v2411
  %v2414 = vsub.f32 0.0, %v2412
  %v2415 = vmul.f32 %v2413, 1.442695
  %v2416 = vpow.pop %v2415
  %v2417 = vmul.f32 %v2414, 1.442695
  %v2418 = vpow.pop %v2417
  %vm2419 = vcmp.ge.f32.partialorder %v2409, 0.0
  %vm2420 = vcmp.ge.f32.partialorder %v2410, 0.0
  %v2421 = vsel %vm2419, 1.0, %v2416
  %v2422 = vsel %vm2420, 1.0, %v2418
  %v2423 = vadd.f32 %v2416, 1.0
  %v2424 = vadd.f32 %v2418, 1.0
  %v2425 = vrcp.pop %v2423
  %v2426 = vmul.f32 %v2423, %v2425
  %v2427 = vsub.f32 1.0, %v2426
  %v2428 = vmul.f32 %v2425, %v2427
  %v2429 = vadd.f32 %v2425, %v2428
  %vm2430 = vweird.f32 %v2423
  %vm2431 = vweird.f32 %v2425
  %vm2432 = vmor %vm2430, %vm2431
  %v2433 = vsel %vm2432, %v2425, %v2429
  %v2434 = vand.u32 2147483647, %v2423
  %vm2435 = vcmp.eq.f32.partialorder %v2434, 8.507059e+37
  %v2436 = vand.u32 %v2423, 2147483648
  %v2437 = vor.u32 1.1754944e-38, %v2436
  %v2438 = vsel %vm2435, %v2437, %v2433
  %v2439 = vmul.f32 %v2421, %v2438
  %v2440 = vrcp.pop %v2424
  %v2441 = vmul.f32 %v2424, %v2440
  %v2442 = vsub.f32 1.0, %v2441
  %v2443 = vmul.f32 %v2440, %v2442
  %v2444 = vadd.f32 %v2440, %v2443
  %vm2445 = vweird.f32 %v2424
  %vm2446 = vweird.f32 %v2440
  %vm2447 = vmor %vm2445, %vm2446
  %v2448 = vsel %vm2447, %v2440, %v2444
  %v2449 = vand.u32 2147483647, %v2424
  %vm2450 = vcmp.eq.f32.partialorder %v2449, 8.507059e+37
  %v2451 = vand.u32 %v2424, 2147483648
  %v2452 = vor.u32 1.1754944e-38, %v2451
  %v2453 = vsel %vm2450, %v2452, %v2448
  %v2454 = vmul.f32 %v2422, %v2453
  %v2455 = vmul.f32 %v2409, %v2439
  %v2456 = vmul.f32 %v2410, %v2454
  %2457 = vmatpush.msra.mxu0 %v2158
  %2458 = vmatpush.msra.mxu0 %v2156
  %2459 = vmatpush.msra.mxu0 %v2154
  %2460 = vmatpush.msra.mxu0 %v2152
  %2461 = vmatpush.msra.mxu0 %v2150
  %2462 = vmatpush.msra.mxu0 %v2148
  %2463 = vmatpush.msra.mxu0 %v2146
  %2464 = vmatpush.msra.mxu0 %v2144
  %2465 = vmatpush.msra.mxu0 %v2142
  %2466 = vmatpush.msra.mxu0 %v2140
  %2467 = vmatpush.msra.mxu0 %v2138
  %2468 = vmatpush.msra.mxu0 %v2136
  %2469 = vmatpush.msra.mxu0 %v2134
  %2470 = vmatpush.msra.mxu0 %v2132
  %2471 = vmatpush.msra.mxu0 %v2130
  %2472 = vmatpush.msra.mxu0 %v2128
  %2473 = vmatmul.f32.gmra.mxu0 %v2455
  %v2474 = vpop.f32.mrf.mxu0
  %v2475 = vadd.f32 0.0, %v2474
  %2476 = vmatmul.f32.gmra.mxu0 %v2456
  %v2477 = vpop.f32.mrf.mxu0
  %v2478 = vadd.f32 0.0, %v2477
  %2479 = vdwg.mxu0
  %2480 = vmatpush.msra.mxu0 %v2159
  %2481 = vmatpush.msra.mxu0 %v2157
  %2482 = vmatpush.msra.mxu0 %v2155
  %2483 = vmatpush.msra.mxu0 %v2153
  %2484 = vmatpush.msra.mxu0 %v2151
  %2485 = vmatpush.msra.mxu0 %v2149
  %2486 = vmatpush.msra.mxu0 %v2147
  %2487 = vmatpush.msra.mxu0 %v2145
  %2488 = vmatpush.msra.mxu0 %v2143
  %2489 = vmatpush.msra.mxu0 %v2141
  %2490 = vmatpush.msra.mxu0 %v2139
  %2491 = vmatpush.msra.mxu0 %v2137
  %2492 = vmatpush.msra.mxu0 %v2135
  %2493 = vmatpush.msra.mxu0 %v2133
  %2494 = vmatpush.msra.mxu0 %v2131
  %2495 = vmatpush.msra.mxu0 %v2129
  %2496 = vmatmul.f32.gmra.mxu0 %v2455
  %v2497 = vpop.f32.mrf.mxu0
  %v2498 = vadd.f32 0.0, %v2497
  %2499 = vmatmul.f32.gmra.mxu0 %v2456
  %v2500 = vpop.f32.mrf.mxu0
  %v2501 = vadd.f32 0.0, %v2500
  %2502 = vdwg.mxu0
  %v2504 = vperm.slane %v2161, 0
  %v2506 = vadd.f32 %v2475, %v2504
  %v2507 = vadd.f32 %v2478, %v2504
  %v2508 = vmax.f32 %v2506, 0.0
  %v2509 = vmax.f32 %v2507, 0.0
  %v2510 = vand.u32 2147483647, %v2506
  %v2511 = vand.u32 2147483647, %v2507
  %v2512 = vsub.f32 0.0, %v2510
  %v2513 = vsub.f32 0.0, %v2511
  %v2514 = vmul.f32 %v2512, 1.442695
  %v2515 = vpow.pop %v2514
  %v2516 = vmul.f32 %v2513, 1.442695
  %v2517 = vpow.pop %v2516
  %v2518 = vadd.f32 %v2515, 1.0
  %v2519 = vadd.f32 %v2517, 1.0
  %v2520 = vlog2.pop %v2518
  %v2521 = vmul.f32 %v2520, 0.6931472
  %v2522 = vlog2.pop %v2519
  %v2523 = vmul.f32 %v2522, 0.6931472
  %v2524 = vadd.f32 %v2508, %v2521
  %v2525 = vadd.f32 %v2509, %v2523
  %v2526 = vmul.f32 %v2524, %v2455
  %v2527 = vmul.f32 %v2525, %v2456
  %v2529 = vrot.slane %v2524, 1
  %v2530 = vrot.slane %v2524, 2
  %v2531 = vrot.slane %v2524, 3
  %v2532 = vrot.slane %v2524, 4
  %v2533 = vrot.slane %v2524, 5
  %v2534 = vrot.slane %v2524, 6
  %v2535 = vrot.slane %v2524, 7
  %v2536 = vperm.slane %v2524, 0
  %v2537 = vperm.slane %v2529, 0
  %v2538 = vperm.slane %v2530, 0
  %v2539 = vperm.slane %v2531, 0
  %v2540 = vperm.slane %v2532, 0
  %v2541 = vperm.slane %v2533, 0
  %v2542 = vperm.slane %v2534, 0
  %v2543 = vperm.slane %v2535, 0
  %v2552 = vmul.f32 %v2536, %v2163
  %v2553 = vmul.f32 %v2536, %v2164
  %v2554 = vmul.f32 %v2537, %v2163
  %v2555 = vmul.f32 %v2537, %v2164
  %v2556 = vmul.f32 %v2538, %v2163
  %v2557 = vmul.f32 %v2538, %v2164
  %v2558 = vmul.f32 %v2539, %v2163
  %v2559 = vmul.f32 %v2539, %v2164
  %v2560 = vmul.f32 %v2540, %v2163
  %v2561 = vmul.f32 %v2540, %v2164
  %v2562 = vmul.f32 %v2541, %v2163
  %v2563 = vmul.f32 %v2541, %v2164
  %v2564 = vmul.f32 %v2542, %v2163
  %v2565 = vmul.f32 %v2542, %v2164
  %v2566 = vmul.f32 %v2543, %v2163
  %v2567 = vmul.f32 %v2543, %v2164
  %v2568 = vmul.f32 %v2552, 1.442695
  %v2569 = vpow.pop %v2568
  %v2570 = vmul.f32 %v2553, 1.442695
  %v2571 = vpow.pop %v2570
  %v2572 = vmul.f32 %v2554, 1.442695
  %v2573 = vpow.pop %v2572
  %v2574 = vmul.f32 %v2555, 1.442695
  %v2575 = vpow.pop %v2574
  %v2576 = vmul.f32 %v2556, 1.442695
  %v2577 = vpow.pop %v2576
  %v2578 = vmul.f32 %v2557, 1.442695
  %v2579 = vpow.pop %v2578
  %v2580 = vmul.f32 %v2558, 1.442695
  %v2581 = vpow.pop %v2580
  %v2582 = vmul.f32 %v2559, 1.442695
  %v2583 = vpow.pop %v2582
  %v2584 = vmul.f32 %v2560, 1.442695
  %v2585 = vpow.pop %v2584
  %v2586 = vmul.f32 %v2561, 1.442695
  %v2587 = vpow.pop %v2586
  %v2588 = vmul.f32 %v2562, 1.442695
  %v2589 = vpow.pop %v2588
  %v2590 = vmul.f32 %v2563, 1.442695
  %v2591 = vpow.pop %v2590
  %v2592 = vmul.f32 %v2564, 1.442695
  %v2593 = vpow.pop %v2592
  %v2594 = vmul.f32 %v2565, 1.442695
  %v2595 = vpow.pop %v2594
  %v2596 = vmul.f32 %v2566, 1.442695
  %v2597 = vpow.pop %v2596
  %v2598 = vmul.f32 %v2567, 1.442695
  %v2599 = vpow.pop %v2598
  %2600 = vst [vmem:[#allocation2] sm:$0xff] %v2569
  %2601 = vst [vmem:[#allocation2 + $0x8] sm:$0xff] %v2571
  %2602 = vst [vmem:[#allocation2 + $0x10] sm:$0xff] %v2573
  %2603 = vst [vmem:[#allocation2 + $0x18] sm:$0xff] %v2575
  %2604 = vst [vmem:[#allocation2 + $0x20] sm:$0xff] %v2577
  %2605 = vst [vmem:[#allocation2 + $0x28] sm:$0xff] %v2579
  %2606 = vst [vmem:[#allocation2 + $0x30] sm:$0xff] %v2581
  %2607 = vst [vmem:[#allocation2 + $0x38] sm:$0xff] %v2583
  %2608 = vst [vmem:[#allocation2 + $0x40] sm:$0xff] %v2585
  %2609 = vst [vmem:[#allocation2 + $0x48] sm:$0xff] %v2587
  %2610 = vst [vmem:[#allocation2 + $0x50] sm:$0xff] %v2589
  %2611 = vst [vmem:[#allocation2 + $0x58] sm:$0xff] %v2591
  %2612 = vst [vmem:[#allocation2 + $0x60] sm:$0xff] %v2593
  %2613 = vst [vmem:[#allocation2 + $0x68] sm:$0xff] %v2595
  %2614 = vst [vmem:[#allocation2 + $0x70] sm:$0xff] %v2597
  %2615 = vst [vmem:[#allocation2 + $0x78] sm:$0xff] %v2599
  %v2617 = vrot.slane %v2525, 1
  %v2618 = vrot.slane %v2525, 2
  %v2619 = vrot.slane %v2525, 3
  %v2620 = vrot.slane %v2525, 4
  %v2621 = vrot.slane %v2525, 5
  %v2622 = vrot.slane %v2525, 6
  %v2623 = vrot.slane %v2525, 7
  %v2624 = vperm.slane %v2525, 0
  %v2625 = vperm.slane %v2617, 0
  %v2626 = vperm.slane %v2618, 0
  %v2627 = vperm.slane %v2619, 0
  %v2628 = vperm.slane %v2620, 0
  %v2629 = vperm.slane %v2621, 0
  %v2630 = vperm.slane %v2622, 0
  %v2631 = vperm.slane %v2623, 0
  %v2640 = vmul.f32 %v2624, %v2163
  %v2641 = vmul.f32 %v2624, %v2164
  %v2642 = vmul.f32 %v2625, %v2163
  %v2643 = vmul.f32 %v2625, %v2164
  %v2644 = vmul.f32 %v2626, %v2163
  %v2645 = vmul.f32 %v2626, %v2164
  %v2646 = vmul.f32 %v2627, %v2163
  %v2647 = vmul.f32 %v2627, %v2164
  %v2648 = vmul.f32 %v2628, %v2163
  %v2649 = vmul.f32 %v2628, %v2164
  %v2650 = vmul.f32 %v2629, %v2163
  %v2651 = vmul.f32 %v2629, %v2164
  %v2652 = vmul.f32 %v2630, %v2163
  %v2653 = vmul.f32 %v2630, %v2164
  %v2654 = vmul.f32 %v2631, %v2163
  %v2655 = vmul.f32 %v2631, %v2164
  %v2656 = vmul.f32 %v2640, 1.442695
  %v2657 = vpow.pop %v2656
  %v2658 = vmul.f32 %v2641, 1.442695
  %v2659 = vpow.pop %v2658
  %v2660 = vmul.f32 %v2642, 1.442695
  %v2661 = vpow.pop %v2660
  %v2662 = vmul.f32 %v2643, 1.442695
  %v2663 = vpow.pop %v2662
  %v2664 = vmul.f32 %v2644, 1.442695
  %v2665 = vpow.pop %v2664
  %v2666 = vmul.f32 %v2645, 1.442695
  %v2667 = vpow.pop %v2666
  %v2668 = vmul.f32 %v2646, 1.442695
  %v2669 = vpow.pop %v2668
  %v2670 = vmul.f32 %v2647, 1.442695
  %v2671 = vpow.pop %v2670
  %v2672 = vmul.f32 %v2648, 1.442695
  %v2673 = vpow.pop %v2672
  %v2674 = vmul.f32 %v2649, 1.442695
  %v2675 = vpow.pop %v2674
  %v2676 = vmul.f32 %v2650, 1.442695
  %v2677 = vpow.pop %v2676
  %v2678 = vmul.f32 %v2651, 1.442695
  %v2679 = vpow.pop %v2678
  %v2680 = vmul.f32 %v2652, 1.442695
  %v2681 = vpow.pop %v2680
  %v2682 = vmul.f32 %v2653, 1.442695
  %v2683 = vpow.pop %v2682
  %v2684 = vmul.f32 %v2654, 1.442695
  %v2685 = vpow.pop %v2684
  %v2686 = vmul.f32 %v2655, 1.442695
  %v2687 = vpow.pop %v2686
  %2688 = vst [vmem:[%s639] sm:$0xff] %v2657
  %2689 = vst [vmem:[%s639 + $0x8] sm:$0xff] %v2659
  %2690 = vst [vmem:[%s639 + $0x10] sm:$0xff] %v2661
  %2691 = vst [vmem:[%s639 + $0x18] sm:$0xff] %v2663
  %2692 = vst [vmem:[%s639 + $0x20] sm:$0xff] %v2665
  %2693 = vst [vmem:[%s639 + $0x28] sm:$0xff] %v2667
  %2694 = vst [vmem:[%s639 + $0x30] sm:$0xff] %v2669
  %2695 = vst [vmem:[%s639 + $0x38] sm:$0xff] %v2671
  %2696 = vst [vmem:[%s639 + $0x40] sm:$0xff] %v2673
  %2697 = vst [vmem:[%s639 + $0x48] sm:$0xff] %v2675
  %2698 = vst [vmem:[%s639 + $0x50] sm:$0xff] %v2677
  %2699 = vst [vmem:[%s639 + $0x58] sm:$0xff] %v2679
  %2700 = vst [vmem:[%s639 + $0x60] sm:$0xff] %v2681
  %2701 = vst [vmem:[%s639 + $0x68] sm:$0xff] %v2683
  %2702 = vst [vmem:[%s639 + $0x70] sm:$0xff] %v2685
  %2703 = vst [vmem:[%s639 + $0x78] sm:$0xff] %v2687
  %v2704 = vperm.slane %v2498, 0
  %v2705 = vlaneseq
  %v2706 = vshrl.u32 %v2705, 7
  %2708 = vset.pattern.permute.xlu0 %v2706
  %2709 = vperm.xlu0 %2708, %v2704
  %v2710 = vpop.permute.xlu0 %2709
  %v2711 = vlaneseq
  %v2712 = vshrl.u32 %v2711, 7
  %v2713 = vadd.s32 %v2712, 8
  %2714 = vset.pattern.permute.xlu0 %v2713
  %2715 = vperm.xlu0 %2714, %v2704
  %v2716 = vpop.permute.xlu0 %2715
  %v2717 = vperm.slane %v2498, 1
  %v2718 = vlaneseq
  %v2719 = vshrl.u32 %v2718, 7
  %2721 = vset.pattern.permute.xlu0 %v2719
  %2722 = vperm.xlu0 %2721, %v2717
  %v2723 = vpop.permute.xlu0 %2722
  %v2724 = vlaneseq
  %v2725 = vshrl.u32 %v2724, 7
  %v2726 = vadd.s32 %v2725, 8
  %2727 = vset.pattern.permute.xlu0 %v2726
  %2728 = vperm.xlu0 %2727, %v2717
  %v2729 = vpop.permute.xlu0 %2728
  %v2730 = vperm.slane %v2498, 2
  %v2731 = vlaneseq
  %v2732 = vshrl.u32 %v2731, 7
  %2734 = vset.pattern.permute.xlu0 %v2732
  %2735 = vperm.xlu0 %2734, %v2730
  %v2736 = vpop.permute.xlu0 %2735
  %v2737 = vlaneseq
  %v2738 = vshrl.u32 %v2737, 7
  %v2739 = vadd.s32 %v2738, 8
  %2740 = vset.pattern.permute.xlu0 %v2739
  %2741 = vperm.xlu0 %2740, %v2730
  %v2742 = vpop.permute.xlu0 %2741
  %v2743 = vperm.slane %v2498, 3
  %v2744 = vlaneseq
  %v2745 = vshrl.u32 %v2744, 7
  %2747 = vset.pattern.permute.xlu0 %v2745
  %2748 = vperm.xlu0 %2747, %v2743
  %v2749 = vpop.permute.xlu0 %2748
  %v2750 = vlaneseq
  %v2751 = vshrl.u32 %v2750, 7
  %v2752 = vadd.s32 %v2751, 8
  %2753 = vset.pattern.permute.xlu0 %v2752
  %2754 = vperm.xlu0 %2753, %v2743
  %v2755 = vpop.permute.xlu0 %2754
  %v2756 = vperm.slane %v2498, 4
  %v2757 = vlaneseq
  %v2758 = vshrl.u32 %v2757, 7
  %2760 = vset.pattern.permute.xlu0 %v2758
  %2761 = vperm.xlu0 %2760, %v2756
  %v2762 = vpop.permute.xlu0 %2761
  %v2763 = vlaneseq
  %v2764 = vshrl.u32 %v2763, 7
  %v2765 = vadd.s32 %v2764, 8
  %2766 = vset.pattern.permute.xlu0 %v2765
  %2767 = vperm.xlu0 %2766, %v2756
  %v2768 = vpop.permute.xlu0 %2767
  %v2769 = vperm.slane %v2498, 5
  %v2770 = vlaneseq
  %v2771 = vshrl.u32 %v2770, 7
  %2773 = vset.pattern.permute.xlu0 %v2771
  %2774 = vperm.xlu0 %2773, %v2769
  %v2775 = vpop.permute.xlu0 %2774
  %v2776 = vlaneseq
  %v2777 = vshrl.u32 %v2776, 7
  %v2778 = vadd.s32 %v2777, 8
  %2779 = vset.pattern.permute.xlu0 %v2778
  %2780 = vperm.xlu0 %2779, %v2769
  %v2781 = vpop.permute.xlu0 %2780
  %v2782 = vperm.slane %v2498, 6
  %v2783 = vlaneseq
  %v2784 = vshrl.u32 %v2783, 7
  %2786 = vset.pattern.permute.xlu0 %v2784
  %2787 = vperm.xlu0 %2786, %v2782
  %v2788 = vpop.permute.xlu0 %2787
  %v2789 = vlaneseq
  %v2790 = vshrl.u32 %v2789, 7
  %v2791 = vadd.s32 %v2790, 8
  %2792 = vset.pattern.permute.xlu0 %v2791
  %2793 = vperm.xlu0 %2792, %v2782
  %v2794 = vpop.permute.xlu0 %2793
  %v2795 = vperm.slane %v2498, 7
  %v2796 = vlaneseq
  %v2797 = vshrl.u32 %v2796, 7
  %2799 = vset.pattern.permute.xlu0 %v2797
  %2800 = vperm.xlu0 %2799, %v2795
  %v2801 = vpop.permute.xlu0 %2800
  %v2802 = vlaneseq
  %v2803 = vshrl.u32 %v2802, 7
  %v2804 = vadd.s32 %v2803, 8
  %2805 = vset.pattern.permute.xlu0 %v2804
  %2806 = vperm.xlu0 %2805, %v2795
  %v2807 = vpop.permute.xlu0 %2806
  %v2808 = vperm.slane %v2501, 0
  %v2809 = vlaneseq
  %v2810 = vshrl.u32 %v2809, 7
  %2812 = vset.pattern.permute.xlu0 %v2810
  %2813 = vperm.xlu0 %2812, %v2808
  %v2814 = vpop.permute.xlu0 %2813
  %v2815 = vlaneseq
  %v2816 = vshrl.u32 %v2815, 7
  %v2817 = vadd.s32 %v2816, 8
  %2818 = vset.pattern.permute.xlu0 %v2817
  %2819 = vperm.xlu0 %2818, %v2808
  %v2820 = vpop.permute.xlu0 %2819
  %v2821 = vperm.slane %v2501, 1
  %v2822 = vlaneseq
  %v2823 = vshrl.u32 %v2822, 7
  %2825 = vset.pattern.permute.xlu0 %v2823
  %2826 = vperm.xlu0 %2825, %v2821
  %v2827 = vpop.permute.xlu0 %2826
  %v2828 = vlaneseq
  %v2829 = vshrl.u32 %v2828, 7
  %v2830 = vadd.s32 %v2829, 8
  %2831 = vset.pattern.permute.xlu0 %v2830
  %2832 = vperm.xlu0 %2831, %v2821
  %v2833 = vpop.permute.xlu0 %2832
  %v2834 = vperm.slane %v2501, 2
  %v2835 = vlaneseq
  %v2836 = vshrl.u32 %v2835, 7
  %2838 = vset.pattern.permute.xlu0 %v2836
  %2839 = vperm.xlu0 %2838, %v2834
  %v2840 = vpop.permute.xlu0 %2839
  %v2841 = vlaneseq
  %v2842 = vshrl.u32 %v2841, 7
  %v2843 = vadd.s32 %v2842, 8
  %2844 = vset.pattern.permute.xlu0 %v2843
  %2845 = vperm.xlu0 %2844, %v2834
  %v2846 = vpop.permute.xlu0 %2845
  %v2847 = vperm.slane %v2501, 3
  %v2848 = vlaneseq
  %v2849 = vshrl.u32 %v2848, 7
  %2851 = vset.pattern.permute.xlu0 %v2849
  %2852 = vperm.xlu0 %2851, %v2847
  %v2853 = vpop.permute.xlu0 %2852
  %v2854 = vlaneseq
  %v2855 = vshrl.u32 %v2854, 7
  %v2856 = vadd.s32 %v2855, 8
  %2857 = vset.pattern.permute.xlu0 %v2856
  %2858 = vperm.xlu0 %2857, %v2847
  %v2859 = vpop.permute.xlu0 %2858
  %v2860 = vperm.slane %v2501, 4
  %v2861 = vlaneseq
  %v2862 = vshrl.u32 %v2861, 7
  %2864 = vset.pattern.permute.xlu0 %v2862
  %2865 = vperm.xlu0 %2864, %v2860
  %v2866 = vpop.permute.xlu0 %2865
  %v2867 = vlaneseq
  %v2868 = vshrl.u32 %v2867, 7
  %v2869 = vadd.s32 %v2868, 8
  %2870 = vset.pattern.permute.xlu0 %v2869
  %2871 = vperm.xlu0 %2870, %v2860
  %v2872 = vpop.permute.xlu0 %2871
  %v2873 = vperm.slane %v2501, 5
  %v2874 = vlaneseq
  %v2875 = vshrl.u32 %v2874, 7
  %2877 = vset.pattern.permute.xlu0 %v2875
  %2878 = vperm.xlu0 %2877, %v2873
  %v2879 = vpop.permute.xlu0 %2878
  %v2880 = vlaneseq
  %v2881 = vshrl.u32 %v2880, 7
  %v2882 = vadd.s32 %v2881, 8
  %2883 = vset.pattern.permute.xlu0 %v2882
  %2884 = vperm.xlu0 %2883, %v2873
  %v2885 = vpop.permute.xlu0 %2884
  %v2886 = vperm.slane %v2501, 6
  %v2887 = vlaneseq
  %v2888 = vshrl.u32 %v2887, 7
  %2890 = vset.pattern.permute.xlu0 %v2888
  %2891 = vperm.xlu0 %2890, %v2886
  %v2892 = vpop.permute.xlu0 %2891
  %v2893 = vlaneseq
  %v2894 = vshrl.u32 %v2893, 7
  %v2895 = vadd.s32 %v2894, 8
  %2896 = vset.pattern.permute.xlu0 %v2895
  %2897 = vperm.xlu0 %2896, %v2886
  %v2898 = vpop.permute.xlu0 %2897
  %v2899 = vperm.slane %v2501, 7
  %v2900 = vlaneseq
  %v2901 = vshrl.u32 %v2900, 7
  %2903 = vset.pattern.permute.xlu0 %v2901
  %2904 = vperm.xlu0 %2903, %v2899
  %v2905 = vpop.permute.xlu0 %2904
  %v2906 = vlaneseq
  %v2907 = vshrl.u32 %v2906, 7
  %v2908 = vadd.s32 %v2907, 8
  %2909 = vset.pattern.permute.xlu0 %v2908
  %2910 = vperm.xlu0 %2909, %v2899
  %v2911 = vpop.permute.xlu0 %2910
  %v2914 = vrot.slane %v2526, 1
  %v2915 = vrot.slane %v2526, 2
  %v2916 = vrot.slane %v2526, 3
  %v2917 = vrot.slane %v2526, 4
  %v2918 = vrot.slane %v2526, 5
  %v2919 = vrot.slane %v2526, 6
  %v2920 = vrot.slane %v2526, 7
  %v2921 = vrot.slane %v2527, 1
  %v2922 = vrot.slane %v2527, 2
  %v2923 = vrot.slane %v2527, 3
  %v2924 = vrot.slane %v2527, 4
  %v2925 = vrot.slane %v2527, 5
  %v2926 = vrot.slane %v2527, 6
  %v2927 = vrot.slane %v2527, 7
  %v2928 = vperm.slane %v2526, 0
  %v2929 = vperm.slane %v2914, 0
  %v2930 = vperm.slane %v2915, 0
  %v2931 = vperm.slane %v2916, 0
  %v2932 = vperm.slane %v2917, 0
  %v2933 = vperm.slane %v2918, 0
  %v2934 = vperm.slane %v2919, 0
  %v2935 = vperm.slane %v2920, 0
  %v2936 = vperm.slane %v2527, 0
  %v2937 = vperm.slane %v2921, 0
  %v2938 = vperm.slane %v2922, 0
  %v2939 = vperm.slane %v2923, 0
  %v2940 = vperm.slane %v2924, 0
  %v2941 = vperm.slane %v2925, 0
  %v2942 = vperm.slane %v2926, 0
  %v2943 = vperm.slane %v2927, 0
  %v2960 = vmul.f32 %v2710, %v2928
  %v2961 = vmul.f32 %v2716, %v2928
  %v2962 = vmul.f32 %v2723, %v2929
  %v2963 = vmul.f32 %v2729, %v2929
  %v2964 = vmul.f32 %v2736, %v2930
  %v2965 = vmul.f32 %v2742, %v2930
  %v2966 = vmul.f32 %v2749, %v2931
  %v2967 = vmul.f32 %v2755, %v2931
  %v2968 = vmul.f32 %v2762, %v2932
  %v2969 = vmul.f32 %v2768, %v2932
  %v2970 = vmul.f32 %v2775, %v2933
  %v2971 = vmul.f32 %v2781, %v2933
  %v2972 = vmul.f32 %v2788, %v2934
  %v2973 = vmul.f32 %v2794, %v2934
  %v2974 = vmul.f32 %v2801, %v2935
  %v2975 = vmul.f32 %v2807, %v2935
  %v2976 = vmul.f32 %v2814, %v2936
  %v2977 = vmul.f32 %v2820, %v2936
  %v2978 = vmul.f32 %v2827, %v2937
  %v2979 = vmul.f32 %v2833, %v2937
  %v2980 = vmul.f32 %v2840, %v2938
  %v2981 = vmul.f32 %v2846, %v2938
  %v2982 = vmul.f32 %v2853, %v2939
  %v2983 = vmul.f32 %v2859, %v2939
  %v2984 = vmul.f32 %v2866, %v2940
  %v2985 = vmul.f32 %v2872, %v2940
  %v2986 = vmul.f32 %v2879, %v2941
  %v2987 = vmul.f32 %v2885, %v2941
  %v2988 = vmul.f32 %v2892, %v2942
  %v2989 = vmul.f32 %v2898, %v2942
  %v2990 = vmul.f32 %v2905, %v2943
  %v2991 = vmul.f32 %v2911, %v2943
  %2992 = vst.msk [vmem:[#allocation3] sm:$0xff] %vm138, %v2960
  %2993 = vst.msk [vmem:[#allocation3 + $0x8] sm:$0xff] %vm138, %v2961
  %2994 = vst.msk [vmem:[#allocation3 + $0x10] sm:$0xff] %vm138, %v2962
  %2995 = vst.msk [vmem:[#allocation3 + $0x18] sm:$0xff] %vm138, %v2963
  %2996 = vst.msk [vmem:[#allocation3 + $0x20] sm:$0xff] %vm138, %v2964
  %2997 = vst.msk [vmem:[#allocation3 + $0x28] sm:$0xff] %vm138, %v2965
  %2998 = vst.msk [vmem:[#allocation3 + $0x30] sm:$0xff] %vm138, %v2966
  %2999 = vst.msk [vmem:[#allocation3 + $0x38] sm:$0xff] %vm138, %v2967
  %3000 = vst.msk [vmem:[#allocation3 + $0x40] sm:$0xff] %vm138, %v2968
  %3001 = vst.msk [vmem:[#allocation3 + $0x48] sm:$0xff] %vm138, %v2969
  %3002 = vst.msk [vmem:[#allocation3 + $0x50] sm:$0xff] %vm138, %v2970
  %3003 = vst.msk [vmem:[#allocation3 + $0x58] sm:$0xff] %vm138, %v2971
  %3004 = vst.msk [vmem:[#allocation3 + $0x60] sm:$0xff] %vm138, %v2972
  %3005 = vst.msk [vmem:[#allocation3 + $0x68] sm:$0xff] %vm138, %v2973
  %3006 = vst.msk [vmem:[#allocation3 + $0x70] sm:$0xff] %vm138, %v2974
  %3007 = vst.msk [vmem:[#allocation3 + $0x78] sm:$0xff] %vm138, %v2975
  %3008 = vst.msk [vmem:[#allocation3 + $0x80] sm:$0xff] %vm138, %v2976
  %3009 = vst.msk [vmem:[#allocation3 + $0x88] sm:$0xff] %vm138, %v2977
  %3010 = vst.msk [vmem:[#allocation3 + $0x90] sm:$0xff] %vm138, %v2978
  %3011 = vst.msk [vmem:[#allocation3 + $0x98] sm:$0xff] %vm138, %v2979
  %3012 = vst.msk [vmem:[#allocation3 + $0xa0] sm:$0xff] %vm138, %v2980
  %3013 = vst.msk [vmem:[#allocation3 + $0xa8] sm:$0xff] %vm138, %v2981
  %3014 = vst.msk [vmem:[#allocation3 + $0xb0] sm:$0xff] %vm138, %v2982
  %3015 = vst.msk [vmem:[#allocation3 + $0xb8] sm:$0xff] %vm138, %v2983
  %3016 = vst.msk [vmem:[#allocation3 + $0xc0] sm:$0xff] %vm138, %v2984
  %3017 = vst.msk [vmem:[#allocation3 + $0xc8] sm:$0xff] %vm138, %v2985
  %3018 = vst.msk [vmem:[#allocation3 + $0xd0] sm:$0xff] %vm138, %v2986
  %3019 = vst.msk [vmem:[#allocation3 + $0xd8] sm:$0xff] %vm138, %v2987
  %3020 = vst.msk [vmem:[#allocation3 + $0xe0] sm:$0xff] %vm138, %v2988
  %3021 = vst.msk [vmem:[#allocation3 + $0xe8] sm:$0xff] %vm138, %v2989
  %3022 = vst.msk [vmem:[#allocation3 + $0xf0] sm:$0xff] %vm138, %v2990
  %3023 = vst.msk [vmem:[#allocation3 + $0xf8] sm:$0xff] %vm138, %v2991
  %v3024 = vlaneseq
  %v3025 = vshrl.u32 %v3024, 7
  %v3026 = vadd.s32 %v3025, 16
  %3027 = vset.pattern.permute.xlu0 %v3026
  %3028 = vperm.xlu0 %3027, %v2704
  %v3029 = vpop.permute.xlu0 %3028
  %v3030 = vlaneseq
  %v3031 = vshrl.u32 %v3030, 7
  %v3032 = vadd.s32 %v3031, 24
  %3033 = vset.pattern.permute.xlu0 %v3032
  %3034 = vperm.xlu0 %3033, %v2704
  %v3035 = vpop.permute.xlu0 %3034
  %v3036 = vlaneseq
  %v3037 = vshrl.u32 %v3036, 7
  %v3038 = vadd.s32 %v3037, 16
  %3039 = vset.pattern.permute.xlu0 %v3038
  %3040 = vperm.xlu0 %3039, %v2717
  %v3041 = vpop.permute.xlu0 %3040
  %v3042 = vlaneseq
  %v3043 = vshrl.u32 %v3042, 7
  %v3044 = vadd.s32 %v3043, 24
  %3045 = vset.pattern.permute.xlu0 %v3044
  %3046 = vperm.xlu0 %3045, %v2717
  %v3047 = vpop.permute.xlu0 %3046
  %v3048 = vlaneseq
  %v3049 = vshrl.u32 %v3048, 7
  %v3050 = vadd.s32 %v3049, 16
  %3051 = vset.pattern.permute.xlu0 %v3050
  %3052 = vperm.xlu0 %3051, %v2730
  %v3053 = vpop.permute.xlu0 %3052
  %v3054 = vlaneseq
  %v3055 = vshrl.u32 %v3054, 7
  %v3056 = vadd.s32 %v3055, 24
  %3057 = vset.pattern.permute.xlu0 %v3056
  %3058 = vperm.xlu0 %3057, %v2730
  %v3059 = vpop.permute.xlu0 %3058
  %v3060 = vlaneseq
  %v3061 = vshrl.u32 %v3060, 7
  %v3062 = vadd.s32 %v3061, 16
  %3063 = vset.pattern.permute.xlu0 %v3062
  %3064 = vperm.xlu0 %3063, %v2743
  %v3065 = vpop.permute.xlu0 %3064
  %v3066 = vlaneseq
  %v3067 = vshrl.u32 %v3066, 7
  %v3068 = vadd.s32 %v3067, 24
  %3069 = vset.pattern.permute.xlu0 %v3068
  %3070 = vperm.xlu0 %3069, %v2743
  %v3071 = vpop.permute.xlu0 %3070
  %v3072 = vlaneseq
  %v3073 = vshrl.u32 %v3072, 7
  %v3074 = vadd.s32 %v3073, 16
  %3075 = vset.pattern.permute.xlu0 %v3074
  %3076 = vperm.xlu0 %3075, %v2756
  %v3077 = vpop.permute.xlu0 %3076
  %v3078 = vlaneseq
  %v3079 = vshrl.u32 %v3078, 7
  %v3080 = vadd.s32 %v3079, 24
  %3081 = vset.pattern.permute.xlu0 %v3080
  %3082 = vperm.xlu0 %3081, %v2756
  %v3083 = vpop.permute.xlu0 %3082
  %v3084 = vlaneseq
  %v3085 = vshrl.u32 %v3084, 7
  %v3086 = vadd.s32 %v3085, 16
  %3087 = vset.pattern.permute.xlu0 %v3086
  %3088 = vperm.xlu0 %3087, %v2769
  %v3089 = vpop.permute.xlu0 %3088
  %v3090 = vlaneseq
  %v3091 = vshrl.u32 %v3090, 7
  %v3092 = vadd.s32 %v3091, 24
  %3093 = vset.pattern.permute.xlu0 %v3092
  %3094 = vperm.xlu0 %3093, %v2769
  %v3095 = vpop.permute.xlu0 %3094
  %v3096 = vlaneseq
  %v3097 = vshrl.u32 %v3096, 7
  %v3098 = vadd.s32 %v3097, 16
  %3099 = vset.pattern.permute.xlu0 %v3098
  %3100 = vperm.xlu0 %3099, %v2782
  %v3101 = vpop.permute.xlu0 %3100
  %v3102 = vlaneseq
  %v3103 = vshrl.u32 %v3102, 7
  %v3104 = vadd.s32 %v3103, 24
  %3105 = vset.pattern.permute.xlu0 %v3104
  %3106 = vperm.xlu0 %3105, %v2782
  %v3107 = vpop.permute.xlu0 %3106
  %v3108 = vlaneseq
  %v3109 = vshrl.u32 %v3108, 7
  %v3110 = vadd.s32 %v3109, 16
  %3111 = vset.pattern.permute.xlu0 %v3110
  %3112 = vperm.xlu0 %3111, %v2795
  %v3113 = vpop.permute.xlu0 %3112
  %v3114 = vlaneseq
  %v3115 = vshrl.u32 %v3114, 7
  %v3116 = vadd.s32 %v3115, 24
  %3117 = vset.pattern.permute.xlu0 %v3116
  %3118 = vperm.xlu0 %3117, %v2795
  %v3119 = vpop.permute.xlu0 %3118
  %v3120 = vlaneseq
  %v3121 = vshrl.u32 %v3120, 7
  %v3122 = vadd.s32 %v3121, 16
  %3123 = vset.pattern.permute.xlu0 %v3122
  %3124 = vperm.xlu0 %3123, %v2808
  %v3125 = vpop.permute.xlu0 %3124
  %v3126 = vlaneseq
  %v3127 = vshrl.u32 %v3126, 7
  %v3128 = vadd.s32 %v3127, 24
  %3129 = vset.pattern.permute.xlu0 %v3128
  %3130 = vperm.xlu0 %3129, %v2808
  %v3131 = vpop.permute.xlu0 %3130
  %v3132 = vlaneseq
  %v3133 = vshrl.u32 %v3132, 7
  %v3134 = vadd.s32 %v3133, 16
  %3135 = vset.pattern.permute.xlu0 %v3134
  %3136 = vperm.xlu0 %3135, %v2821
  %v3137 = vpop.permute.xlu0 %3136
  %v3138 = vlaneseq
  %v3139 = vshrl.u32 %v3138, 7
  %v3140 = vadd.s32 %v3139, 24
  %3141 = vset.pattern.permute.xlu0 %v3140
  %3142 = vperm.xlu0 %3141, %v2821
  %v3143 = vpop.permute.xlu0 %3142
  %v3144 = vlaneseq
  %v3145 = vshrl.u32 %v3144, 7
  %v3146 = vadd.s32 %v3145, 16
  %3147 = vset.pattern.permute.xlu0 %v3146
  %3148 = vperm.xlu0 %3147, %v2834
  %v3149 = vpop.permute.xlu0 %3148
  %v3150 = vlaneseq
  %v3151 = vshrl.u32 %v3150, 7
  %v3152 = vadd.s32 %v3151, 24
  %3153 = vset.pattern.permute.xlu0 %v3152
  %3154 = vperm.xlu0 %3153, %v2834
  %v3155 = vpop.permute.xlu0 %3154
  %v3156 = vlaneseq
  %v3157 = vshrl.u32 %v3156, 7
  %v3158 = vadd.s32 %v3157, 16
  %3159 = vset.pattern.permute.xlu0 %v3158
  %3160 = vperm.xlu0 %3159, %v2847
  %v3161 = vpop.permute.xlu0 %3160
  %v3162 = vlaneseq
  %v3163 = vshrl.u32 %v3162, 7
  %v3164 = vadd.s32 %v3163, 24
  %3165 = vset.pattern.permute.xlu0 %v3164
  %3166 = vperm.xlu0 %3165, %v2847
  %v3167 = vpop.permute.xlu0 %3166
  %v3168 = vlaneseq
  %v3169 = vshrl.u32 %v3168, 7
  %v3170 = vadd.s32 %v3169, 16
  %3171 = vset.pattern.permute.xlu0 %v3170
  %3172 = vperm.xlu0 %3171, %v2860
  %v3173 = vpop.permute.xlu0 %3172
  %v3174 = vlaneseq
  %v3175 = vshrl.u32 %v3174, 7
  %v3176 = vadd.s32 %v3175, 24
  %3177 = vset.pattern.permute.xlu0 %v3176
  %3178 = vperm.xlu0 %3177, %v2860
  %v3179 = vpop.permute.xlu0 %3178
  %v3180 = vlaneseq
  %v3181 = vshrl.u32 %v3180, 7
  %v3182 = vadd.s32 %v3181, 16
  %3183 = vset.pattern.permute.xlu0 %v3182
  %3184 = vperm.xlu0 %3183, %v2873
  %v3185 = vpop.permute.xlu0 %3184
  %v3186 = vlaneseq
  %v3187 = vshrl.u32 %v3186, 7
  %v3188 = vadd.s32 %v3187, 24
  %3189 = vset.pattern.permute.xlu0 %v3188
  %3190 = vperm.xlu0 %3189, %v2873
  %v3191 = vpop.permute.xlu0 %3190
  %v3192 = vlaneseq
  %v3193 = vshrl.u32 %v3192, 7
  %v3194 = vadd.s32 %v3193, 16
  %3195 = vset.pattern.permute.xlu0 %v3194
  %3196 = vperm.xlu0 %3195, %v2886
  %v3197 = vpop.permute.xlu0 %3196
  %v3198 = vlaneseq
  %v3199 = vshrl.u32 %v3198, 7
  %v3200 = vadd.s32 %v3199, 24
  %3201 = vset.pattern.permute.xlu0 %v3200
  %3202 = vperm.xlu0 %3201, %v2886
  %v3203 = vpop.permute.xlu0 %3202
  %v3204 = vlaneseq
  %v3205 = vshrl.u32 %v3204, 7
  %v3206 = vadd.s32 %v3205, 16
  %3207 = vset.pattern.permute.xlu0 %v3206
  %3208 = vperm.xlu0 %3207, %v2899
  %v3209 = vpop.permute.xlu0 %3208
  %v3210 = vlaneseq
  %v3211 = vshrl.u32 %v3210, 7
  %v3212 = vadd.s32 %v3211, 24
  %3213 = vset.pattern.permute.xlu0 %v3212
  %3214 = vperm.xlu0 %3213, %v2899
  %v3215 = vpop.permute.xlu0 %3214
  %3216 = vst.msk [vmem:[#allocation4] sm:$0xff] %vm138, %v3029
  %3217 = vst.msk [vmem:[#allocation4 + $0x8] sm:$0xff] %vm138, %v3035
  %3218 = vst.msk [vmem:[#allocation4 + $0x10] sm:$0xff] %vm138, %v3041
  %3219 = vst.msk [vmem:[#allocation4 + $0x18] sm:$0xff] %vm138, %v3047
  %3220 = vst.msk [vmem:[#allocation4 + $0x20] sm:$0xff] %vm138, %v3053
  %3221 = vst.msk [vmem:[#allocation4 + $0x28] sm:$0xff] %vm138, %v3059
  %3222 = vst.msk [vmem:[#allocation4 + $0x30] sm:$0xff] %vm138, %v3065
  %3223 = vst.msk [vmem:[#allocation4 + $0x38] sm:$0xff] %vm138, %v3071
  %3224 = vst.msk [vmem:[#allocation4 + $0x40] sm:$0xff] %vm138, %v3077
  %3225 = vst.msk [vmem:[#allocation4 + $0x48] sm:$0xff] %vm138, %v3083
  %3226 = vst.msk [vmem:[#allocation4 + $0x50] sm:$0xff] %vm138, %v3089
  %3227 = vst.msk [vmem:[#allocation4 + $0x58] sm:$0xff] %vm138, %v3095
  %3228 = vst.msk [vmem:[#allocation4 + $0x60] sm:$0xff] %vm138, %v3101
  %3229 = vst.msk [vmem:[#allocation4 + $0x68] sm:$0xff] %vm138, %v3107
  %3230 = vst.msk [vmem:[#allocation4 + $0x70] sm:$0xff] %vm138, %v3113
  %3231 = vst.msk [vmem:[#allocation4 + $0x78] sm:$0xff] %vm138, %v3119
  %3232 = vst.msk [vmem:[#allocation4 + $0x80] sm:$0xff] %vm138, %v3125
  %3233 = vst.msk [vmem:[#allocation4 + $0x88] sm:$0xff] %vm138, %v3131
  %3234 = vst.msk [vmem:[#allocation4 + $0x90] sm:$0xff] %vm138, %v3137
  %3235 = vst.msk [vmem:[#allocation4 + $0x98] sm:$0xff] %vm138, %v3143
  %3236 = vst.msk [vmem:[#allocation4 + $0xa0] sm:$0xff] %vm138, %v3149
  %3237 = vst.msk [vmem:[#allocation4 + $0xa8] sm:$0xff] %vm138, %v3155
  %3238 = vst.msk [vmem:[#allocation4 + $0xb0] sm:$0xff] %vm138, %v3161
  %3239 = vst.msk [vmem:[#allocation4 + $0xb8] sm:$0xff] %vm138, %v3167
  %3240 = vst.msk [vmem:[#allocation4 + $0xc0] sm:$0xff] %vm138, %v3173
  %3241 = vst.msk [vmem:[#allocation4 + $0xc8] sm:$0xff] %vm138, %v3179
  %3242 = vst.msk [vmem:[#allocation4 + $0xd0] sm:$0xff] %vm138, %v3185
  %3243 = vst.msk [vmem:[#allocation4 + $0xd8] sm:$0xff] %vm138, %v3191
  %3244 = vst.msk [vmem:[#allocation4 + $0xe0] sm:$0xff] %vm138, %v3197
  %3245 = vst.msk [vmem:[#allocation4 + $0xe8] sm:$0xff] %vm138, %v3203
  %3246 = vst.msk [vmem:[#allocation4 + $0xf0] sm:$0xff] %vm138, %v3209
  %3247 = vst.msk [vmem:[#allocation4 + $0xf8] sm:$0xff] %vm138, %v3215
  %v3248 = vlaneseq
  %v3249 = vshrl.u32 %v3248, 7
  %v3250 = vadd.s32 %v3249, 32
  %3251 = vset.pattern.permute.xlu0 %v3250
  %3252 = vperm.xlu0 %3251, %v2704
  %v3253 = vpop.permute.xlu0 %3252
  %v3254 = vlaneseq
  %v3255 = vshrl.u32 %v3254, 7
  %v3256 = vadd.s32 %v3255, 40
  %3257 = vset.pattern.permute.xlu0 %v3256
  %3258 = vperm.xlu0 %3257, %v2704
  %v3259 = vpop.permute.xlu0 %3258
  %v3260 = vlaneseq
  %v3261 = vshrl.u32 %v3260, 7
  %v3262 = vadd.s32 %v3261, 32
  %3263 = vset.pattern.permute.xlu0 %v3262
  %3264 = vperm.xlu0 %3263, %v2717
  %v3265 = vpop.permute.xlu0 %3264
  %v3266 = vlaneseq
  %v3267 = vshrl.u32 %v3266, 7
  %v3268 = vadd.s32 %v3267, 40
  %3269 = vset.pattern.permute.xlu0 %v3268
  %3270 = vperm.xlu0 %3269, %v2717
  %v3271 = vpop.permute.xlu0 %3270
  %v3272 = vlaneseq
  %v3273 = vshrl.u32 %v3272, 7
  %v3274 = vadd.s32 %v3273, 32
  %3275 = vset.pattern.permute.xlu0 %v3274
  %3276 = vperm.xlu0 %3275, %v2730
  %v3277 = vpop.permute.xlu0 %3276
  %v3278 = vlaneseq
  %v3279 = vshrl.u32 %v3278, 7
  %v3280 = vadd.s32 %v3279, 40
  %3281 = vset.pattern.permute.xlu0 %v3280
  %3282 = vperm.xlu0 %3281, %v2730
  %v3283 = vpop.permute.xlu0 %3282
  %v3284 = vlaneseq
  %v3285 = vshrl.u32 %v3284, 7
  %v3286 = vadd.s32 %v3285, 32
  %3287 = vset.pattern.permute.xlu0 %v3286
  %3288 = vperm.xlu0 %3287, %v2743
  %v3289 = vpop.permute.xlu0 %3288
  %v3290 = vlaneseq
  %v3291 = vshrl.u32 %v3290, 7
  %v3292 = vadd.s32 %v3291, 40
  %3293 = vset.pattern.permute.xlu0 %v3292
  %3294 = vperm.xlu0 %3293, %v2743
  %v3295 = vpop.permute.xlu0 %3294
  %v3296 = vlaneseq
  %v3297 = vshrl.u32 %v3296, 7
  %v3298 = vadd.s32 %v3297, 32
  %3299 = vset.pattern.permute.xlu0 %v3298
  %3300 = vperm.xlu0 %3299, %v2756
  %v3301 = vpop.permute.xlu0 %3300
  %v3302 = vlaneseq
  %v3303 = vshrl.u32 %v3302, 7
  %v3304 = vadd.s32 %v3303, 40
  %3305 = vset.pattern.permute.xlu0 %v3304
  %3306 = vperm.xlu0 %3305, %v2756
  %v3307 = vpop.permute.xlu0 %3306
  %v3308 = vlaneseq
  %v3309 = vshrl.u32 %v3308, 7
  %v3310 = vadd.s32 %v3309, 32
  %3311 = vset.pattern.permute.xlu0 %v3310
  %3312 = vperm.xlu0 %3311, %v2769
  %v3313 = vpop.permute.xlu0 %3312
  %v3314 = vlaneseq
  %v3315 = vshrl.u32 %v3314, 7
  %v3316 = vadd.s32 %v3315, 40
  %3317 = vset.pattern.permute.xlu0 %v3316
  %3318 = vperm.xlu0 %3317, %v2769
  %v3319 = vpop.permute.xlu0 %3318
  %v3320 = vlaneseq
  %v3321 = vshrl.u32 %v3320, 7
  %v3322 = vadd.s32 %v3321, 32
  %3323 = vset.pattern.permute.xlu0 %v3322
  %3324 = vperm.xlu0 %3323, %v2782
  %v3325 = vpop.permute.xlu0 %3324
  %v3326 = vlaneseq
  %v3327 = vshrl.u32 %v3326, 7
  %v3328 = vadd.s32 %v3327, 40
  %3329 = vset.pattern.permute.xlu0 %v3328
  %3330 = vperm.xlu0 %3329, %v2782
  %v3331 = vpop.permute.xlu0 %3330
  %v3332 = vlaneseq
  %v3333 = vshrl.u32 %v3332, 7
  %v3334 = vadd.s32 %v3333, 32
  %3335 = vset.pattern.permute.xlu0 %v3334
  %3336 = vperm.xlu0 %3335, %v2795
  %v3337 = vpop.permute.xlu0 %3336
  %v3338 = vlaneseq
  %v3339 = vshrl.u32 %v3338, 7
  %v3340 = vadd.s32 %v3339, 40
  %3341 = vset.pattern.permute.xlu0 %v3340
  %3342 = vperm.xlu0 %3341, %v2795
  %v3343 = vpop.permute.xlu0 %3342
  %v3344 = vlaneseq
  %v3345 = vshrl.u32 %v3344, 7
  %v3346 = vadd.s32 %v3345, 32
  %3347 = vset.pattern.permute.xlu0 %v3346
  %3348 = vperm.xlu0 %3347, %v2808
  %v3349 = vpop.permute.xlu0 %3348
  %v3350 = vlaneseq
  %v3351 = vshrl.u32 %v3350, 7
  %v3352 = vadd.s32 %v3351, 40
  %3353 = vset.pattern.permute.xlu0 %v3352
  %3354 = vperm.xlu0 %3353, %v2808
  %v3355 = vpop.permute.xlu0 %3354
  %v3356 = vlaneseq
  %v3357 = vshrl.u32 %v3356, 7
  %v3358 = vadd.s32 %v3357, 32
  %3359 = vset.pattern.permute.xlu0 %v3358
  %3360 = vperm.xlu0 %3359, %v2821
  %v3361 = vpop.permute.xlu0 %3360
  %v3362 = vlaneseq
  %v3363 = vshrl.u32 %v3362, 7
  %v3364 = vadd.s32 %v3363, 40
  %3365 = vset.pattern.permute.xlu0 %v3364
  %3366 = vperm.xlu0 %3365, %v2821
  %v3367 = vpop.permute.xlu0 %3366
  %v3368 = vlaneseq
  %v3369 = vshrl.u32 %v3368, 7
  %v3370 = vadd.s32 %v3369, 32
  %3371 = vset.pattern.permute.xlu0 %v3370
  %3372 = vperm.xlu0 %3371, %v2834
  %v3373 = vpop.permute.xlu0 %3372
  %v3374 = vlaneseq
  %v3375 = vshrl.u32 %v3374, 7
  %v3376 = vadd.s32 %v3375, 40
  %3377 = vset.pattern.permute.xlu0 %v3376
  %3378 = vperm.xlu0 %3377, %v2834
  %v3379 = vpop.permute.xlu0 %3378
  %v3380 = vlaneseq
  %v3381 = vshrl.u32 %v3380, 7
  %v3382 = vadd.s32 %v3381, 32
  %3383 = vset.pattern.permute.xlu0 %v3382
  %3384 = vperm.xlu0 %3383, %v2847
  %v3385 = vpop.permute.xlu0 %3384
  %v3386 = vlaneseq
  %v3387 = vshrl.u32 %v3386, 7
  %v3388 = vadd.s32 %v3387, 40
  %3389 = vset.pattern.permute.xlu0 %v3388
  %3390 = vperm.xlu0 %3389, %v2847
  %v3391 = vpop.permute.xlu0 %3390
  %v3392 = vlaneseq
  %v3393 = vshrl.u32 %v3392, 7
  %v3394 = vadd.s32 %v3393, 32
  %3395 = vset.pattern.permute.xlu0 %v3394
  %3396 = vperm.xlu0 %3395, %v2860
  %v3397 = vpop.permute.xlu0 %3396
  %v3398 = vlaneseq
  %v3399 = vshrl.u32 %v3398, 7
  %v3400 = vadd.s32 %v3399, 40
  %3401 = vset.pattern.permute.xlu0 %v3400
  %3402 = vperm.xlu0 %3401, %v2860
  %v3403 = vpop.permute.xlu0 %3402
  %v3404 = vlaneseq
  %v3405 = vshrl.u32 %v3404, 7
  %v3406 = vadd.s32 %v3405, 32
  %3407 = vset.pattern.permute.xlu0 %v3406
  %3408 = vperm.xlu0 %3407, %v2873
  %v3409 = vpop.permute.xlu0 %3408
  %v3410 = vlaneseq
  %v3411 = vshrl.u32 %v3410, 7
  %v3412 = vadd.s32 %v3411, 40
  %3413 = vset.pattern.permute.xlu0 %v3412
  %3414 = vperm.xlu0 %3413, %v2873
  %v3415 = vpop.permute.xlu0 %3414
  %v3416 = vlaneseq
  %v3417 = vshrl.u32 %v3416, 7
  %v3418 = vadd.s32 %v3417, 32
  %3419 = vset.pattern.permute.xlu0 %v3418
  %3420 = vperm.xlu0 %3419, %v2886
  %v3421 = vpop.permute.xlu0 %3420
  %v3422 = vlaneseq
  %v3423 = vshrl.u32 %v3422, 7
  %v3424 = vadd.s32 %v3423, 40
  %3425 = vset.pattern.permute.xlu0 %v3424
  %3426 = vperm.xlu0 %3425, %v2886
  %v3427 = vpop.permute.xlu0 %3426
  %v3428 = vlaneseq
  %v3429 = vshrl.u32 %v3428, 7
  %v3430 = vadd.s32 %v3429, 32
  %3431 = vset.pattern.permute.xlu0 %v3430
  %3432 = vperm.xlu0 %3431, %v2899
  %v3433 = vpop.permute.xlu0 %3432
  %v3434 = vlaneseq
  %v3435 = vshrl.u32 %v3434, 7
  %v3436 = vadd.s32 %v3435, 40
  %3437 = vset.pattern.permute.xlu0 %v3436
  %3438 = vperm.xlu0 %3437, %v2899
  %v3439 = vpop.permute.xlu0 %3438
  %v3440 = vmul.f32 %v3253, %v2928
  %v3441 = vmul.f32 %v3259, %v2928
  %v3442 = vmul.f32 %v3265, %v2929
  %v3443 = vmul.f32 %v3271, %v2929
  %v3444 = vmul.f32 %v3277, %v2930
  %v3445 = vmul.f32 %v3283, %v2930
  %v3446 = vmul.f32 %v3289, %v2931
  %v3447 = vmul.f32 %v3295, %v2931
  %v3448 = vmul.f32 %v3301, %v2932
  %v3449 = vmul.f32 %v3307, %v2932
  %v3450 = vmul.f32 %v3313, %v2933
  %v3451 = vmul.f32 %v3319, %v2933
  %v3452 = vmul.f32 %v3325, %v2934
  %v3453 = vmul.f32 %v3331, %v2934
  %v3454 = vmul.f32 %v3337, %v2935
  %v3455 = vmul.f32 %v3343, %v2935
  %v3456 = vmul.f32 %v3349, %v2936
  %v3457 = vmul.f32 %v3355, %v2936
  %v3458 = vmul.f32 %v3361, %v2937
  %v3459 = vmul.f32 %v3367, %v2937
  %v3460 = vmul.f32 %v3373, %v2938
  %v3461 = vmul.f32 %v3379, %v2938
  %v3462 = vmul.f32 %v3385, %v2939
  %v3463 = vmul.f32 %v3391, %v2939
  %v3464 = vmul.f32 %v3397, %v2940
  %v3465 = vmul.f32 %v3403, %v2940
  %v3466 = vmul.f32 %v3409, %v2941
  %v3467 = vmul.f32 %v3415, %v2941
  %v3468 = vmul.f32 %v3421, %v2942
  %v3469 = vmul.f32 %v3427, %v2942
  %v3470 = vmul.f32 %v3433, %v2943
  %v3471 = vmul.f32 %v3439, %v2943
  %3472 = vst.msk [vmem:[#allocation3] sm:$0xff] %vm1424, %v3440
  %3473 = vst.msk [vmem:[#allocation3 + $0x8] sm:$0xff] %vm1424, %v3441
  %3474 = vst.msk [vmem:[#allocation3 + $0x10] sm:$0xff] %vm1424, %v3442
  %3475 = vst.msk [vmem:[#allocation3 + $0x18] sm:$0xff] %vm1424, %v3443
  %3476 = vst.msk [vmem:[#allocation3 + $0x20] sm:$0xff] %vm1424, %v3444
  %3477 = vst.msk [vmem:[#allocation3 + $0x28] sm:$0xff] %vm1424, %v3445
  %3478 = vst.msk [vmem:[#allocation3 + $0x30] sm:$0xff] %vm1424, %v3446
  %3479 = vst.msk [vmem:[#allocation3 + $0x38] sm:$0xff] %vm1424, %v3447
  %3480 = vst.msk [vmem:[#allocation3 + $0x40] sm:$0xff] %vm1424, %v3448
  %3481 = vst.msk [vmem:[#allocation3 + $0x48] sm:$0xff] %vm1424, %v3449
  %3482 = vst.msk [vmem:[#allocation3 + $0x50] sm:$0xff] %vm1424, %v3450
  %3483 = vst.msk [vmem:[#allocation3 + $0x58] sm:$0xff] %vm1424, %v3451
  %3484 = vst.msk [vmem:[#allocation3 + $0x60] sm:$0xff] %vm1424, %v3452
  %3485 = vst.msk [vmem:[#allocation3 + $0x68] sm:$0xff] %vm1424, %v3453
  %3486 = vst.msk [vmem:[#allocation3 + $0x70] sm:$0xff] %vm1424, %v3454
  %3487 = vst.msk [vmem:[#allocation3 + $0x78] sm:$0xff] %vm1424, %v3455
  %3488 = vst.msk [vmem:[#allocation3 + $0x80] sm:$0xff] %vm1424, %v3456
  %3489 = vst.msk [vmem:[#allocation3 + $0x88] sm:$0xff] %vm1424, %v3457
  %3490 = vst.msk [vmem:[#allocation3 + $0x90] sm:$0xff] %vm1424, %v3458
  %3491 = vst.msk [vmem:[#allocation3 + $0x98] sm:$0xff] %vm1424, %v3459
  %3492 = vst.msk [vmem:[#allocation3 + $0xa0] sm:$0xff] %vm1424, %v3460
  %3493 = vst.msk [vmem:[#allocation3 + $0xa8] sm:$0xff] %vm1424, %v3461
  %3494 = vst.msk [vmem:[#allocation3 + $0xb0] sm:$0xff] %vm1424, %v3462
  %3495 = vst.msk [vmem:[#allocation3 + $0xb8] sm:$0xff] %vm1424, %v3463
  %3496 = vst.msk [vmem:[#allocation3 + $0xc0] sm:$0xff] %vm1424, %v3464
  %3497 = vst.msk [vmem:[#allocation3 + $0xc8] sm:$0xff] %vm1424, %v3465
  %3498 = vst.msk [vmem:[#allocation3 + $0xd0] sm:$0xff] %vm1424, %v3466
  %3499 = vst.msk [vmem:[#allocation3 + $0xd8] sm:$0xff] %vm1424, %v3467
  %3500 = vst.msk [vmem:[#allocation3 + $0xe0] sm:$0xff] %vm1424, %v3468
  %3501 = vst.msk [vmem:[#allocation3 + $0xe8] sm:$0xff] %vm1424, %v3469
  %3502 = vst.msk [vmem:[#allocation3 + $0xf0] sm:$0xff] %vm1424, %v3470
  %3503 = vst.msk [vmem:[#allocation3 + $0xf8] sm:$0xff] %vm1424, %v3471
  %v3504 = vlaneseq
  %v3505 = vshrl.u32 %v3504, 7
  %v3506 = vadd.s32 %v3505, 48
  %3507 = vset.pattern.permute.xlu0 %v3506
  %3508 = vperm.xlu0 %3507, %v2704
  %v3509 = vpop.permute.xlu0 %3508
  %v3510 = vlaneseq
  %v3511 = vshrl.u32 %v3510, 7
  %v3512 = vadd.s32 %v3511, 56
  %3513 = vset.pattern.permute.xlu0 %v3512
  %3514 = vperm.xlu0 %3513, %v2704
  %v3515 = vpop.permute.xlu0 %3514
  %v3516 = vlaneseq
  %v3517 = vshrl.u32 %v3516, 7
  %v3518 = vadd.s32 %v3517, 48
  %3519 = vset.pattern.permute.xlu0 %v3518
  %3520 = vperm.xlu0 %3519, %v2717
  %v3521 = vpop.permute.xlu0 %3520
  %v3522 = vlaneseq
  %v3523 = vshrl.u32 %v3522, 7
  %v3524 = vadd.s32 %v3523, 56
  %3525 = vset.pattern.permute.xlu0 %v3524
  %3526 = vperm.xlu0 %3525, %v2717
  %v3527 = vpop.permute.xlu0 %3526
  %v3528 = vlaneseq
  %v3529 = vshrl.u32 %v3528, 7
  %v3530 = vadd.s32 %v3529, 48
  %3531 = vset.pattern.permute.xlu0 %v3530
  %3532 = vperm.xlu0 %3531, %v2730
  %v3533 = vpop.permute.xlu0 %3532
  %v3534 = vlaneseq
  %v3535 = vshrl.u32 %v3534, 7
  %v3536 = vadd.s32 %v3535, 56
  %3537 = vset.pattern.permute.xlu0 %v3536
  %3538 = vperm.xlu0 %3537, %v2730
  %v3539 = vpop.permute.xlu0 %3538
  %v3540 = vlaneseq
  %v3541 = vshrl.u32 %v3540, 7
  %v3542 = vadd.s32 %v3541, 48
  %3543 = vset.pattern.permute.xlu0 %v3542
  %3544 = vperm.xlu0 %3543, %v2743
  %v3545 = vpop.permute.xlu0 %3544
  %v3546 = vlaneseq
  %v3547 = vshrl.u32 %v3546, 7
  %v3548 = vadd.s32 %v3547, 56
  %3549 = vset.pattern.permute.xlu0 %v3548
  %3550 = vperm.xlu0 %3549, %v2743
  %v3551 = vpop.permute.xlu0 %3550
  %v3552 = vlaneseq
  %v3553 = vshrl.u32 %v3552, 7
  %v3554 = vadd.s32 %v3553, 48
  %3555 = vset.pattern.permute.xlu0 %v3554
  %3556 = vperm.xlu0 %3555, %v2756
  %v3557 = vpop.permute.xlu0 %3556
  %v3558 = vlaneseq
  %v3559 = vshrl.u32 %v3558, 7
  %v3560 = vadd.s32 %v3559, 56
  %3561 = vset.pattern.permute.xlu0 %v3560
  %3562 = vperm.xlu0 %3561, %v2756
  %v3563 = vpop.permute.xlu0 %3562
  %v3564 = vlaneseq
  %v3565 = vshrl.u32 %v3564, 7
  %v3566 = vadd.s32 %v3565, 48
  %3567 = vset.pattern.permute.xlu0 %v3566
  %3568 = vperm.xlu0 %3567, %v2769
  %v3569 = vpop.permute.xlu0 %3568
  %v3570 = vlaneseq
  %v3571 = vshrl.u32 %v3570, 7
  %v3572 = vadd.s32 %v3571, 56
  %3573 = vset.pattern.permute.xlu0 %v3572
  %3574 = vperm.xlu0 %3573, %v2769
  %v3575 = vpop.permute.xlu0 %3574
  %v3576 = vlaneseq
  %v3577 = vshrl.u32 %v3576, 7
  %v3578 = vadd.s32 %v3577, 48
  %3579 = vset.pattern.permute.xlu0 %v3578
  %3580 = vperm.xlu0 %3579, %v2782
  %v3581 = vpop.permute.xlu0 %3580
  %v3582 = vlaneseq
  %v3583 = vshrl.u32 %v3582, 7
  %v3584 = vadd.s32 %v3583, 56
  %3585 = vset.pattern.permute.xlu0 %v3584
  %3586 = vperm.xlu0 %3585, %v2782
  %v3587 = vpop.permute.xlu0 %3586
  %v3588 = vlaneseq
  %v3589 = vshrl.u32 %v3588, 7
  %v3590 = vadd.s32 %v3589, 48
  %3591 = vset.pattern.permute.xlu0 %v3590
  %3592 = vperm.xlu0 %3591, %v2795
  %v3593 = vpop.permute.xlu0 %3592
  %v3594 = vlaneseq
  %v3595 = vshrl.u32 %v3594, 7
  %v3596 = vadd.s32 %v3595, 56
  %3597 = vset.pattern.permute.xlu0 %v3596
  %3598 = vperm.xlu0 %3597, %v2795
  %v3599 = vpop.permute.xlu0 %3598
  %v3600 = vlaneseq
  %v3601 = vshrl.u32 %v3600, 7
  %v3602 = vadd.s32 %v3601, 48
  %3603 = vset.pattern.permute.xlu0 %v3602
  %3604 = vperm.xlu0 %3603, %v2808
  %v3605 = vpop.permute.xlu0 %3604
  %v3606 = vlaneseq
  %v3607 = vshrl.u32 %v3606, 7
  %v3608 = vadd.s32 %v3607, 56
  %3609 = vset.pattern.permute.xlu0 %v3608
  %3610 = vperm.xlu0 %3609, %v2808
  %v3611 = vpop.permute.xlu0 %3610
  %v3612 = vlaneseq
  %v3613 = vshrl.u32 %v3612, 7
  %v3614 = vadd.s32 %v3613, 48
  %3615 = vset.pattern.permute.xlu0 %v3614
  %3616 = vperm.xlu0 %3615, %v2821
  %v3617 = vpop.permute.xlu0 %3616
  %v3618 = vlaneseq
  %v3619 = vshrl.u32 %v3618, 7
  %v3620 = vadd.s32 %v3619, 56
  %3621 = vset.pattern.permute.xlu0 %v3620
  %3622 = vperm.xlu0 %3621, %v2821
  %v3623 = vpop.permute.xlu0 %3622
  %v3624 = vlaneseq
  %v3625 = vshrl.u32 %v3624, 7
  %v3626 = vadd.s32 %v3625, 48
  %3627 = vset.pattern.permute.xlu0 %v3626
  %3628 = vperm.xlu0 %3627, %v2834
  %v3629 = vpop.permute.xlu0 %3628
  %v3630 = vlaneseq
  %v3631 = vshrl.u32 %v3630, 7
  %v3632 = vadd.s32 %v3631, 56
  %3633 = vset.pattern.permute.xlu0 %v3632
  %3634 = vperm.xlu0 %3633, %v2834
  %v3635 = vpop.permute.xlu0 %3634
  %v3636 = vlaneseq
  %v3637 = vshrl.u32 %v3636, 7
  %v3638 = vadd.s32 %v3637, 48
  %3639 = vset.pattern.permute.xlu0 %v3638
  %3640 = vperm.xlu0 %3639, %v2847
  %v3641 = vpop.permute.xlu0 %3640
  %v3642 = vlaneseq
  %v3643 = vshrl.u32 %v3642, 7
  %v3644 = vadd.s32 %v3643, 56
  %3645 = vset.pattern.permute.xlu0 %v3644
  %3646 = vperm.xlu0 %3645, %v2847
  %v3647 = vpop.permute.xlu0 %3646
  %v3648 = vlaneseq
  %v3649 = vshrl.u32 %v3648, 7
  %v3650 = vadd.s32 %v3649, 48
  %3651 = vset.pattern.permute.xlu0 %v3650
  %3652 = vperm.xlu0 %3651, %v2860
  %v3653 = vpop.permute.xlu0 %3652
  %v3654 = vlaneseq
  %v3655 = vshrl.u32 %v3654, 7
  %v3656 = vadd.s32 %v3655, 56
  %3657 = vset.pattern.permute.xlu0 %v3656
  %3658 = vperm.xlu0 %3657, %v2860
  %v3659 = vpop.permute.xlu0 %3658
  %v3660 = vlaneseq
  %v3661 = vshrl.u32 %v3660, 7
  %v3662 = vadd.s32 %v3661, 48
  %3663 = vset.pattern.permute.xlu0 %v3662
  %3664 = vperm.xlu0 %3663, %v2873
  %v3665 = vpop.permute.xlu0 %3664
  %v3666 = vlaneseq
  %v3667 = vshrl.u32 %v3666, 7
  %v3668 = vadd.s32 %v3667, 56
  %3669 = vset.pattern.permute.xlu0 %v3668
  %3670 = vperm.xlu0 %3669, %v2873
  %v3671 = vpop.permute.xlu0 %3670
  %v3672 = vlaneseq
  %v3673 = vshrl.u32 %v3672, 7
  %v3674 = vadd.s32 %v3673, 48
  %3675 = vset.pattern.permute.xlu0 %v3674
  %3676 = vperm.xlu0 %3675, %v2886
  %v3677 = vpop.permute.xlu0 %3676
  %v3678 = vlaneseq
  %v3679 = vshrl.u32 %v3678, 7
  %v3680 = vadd.s32 %v3679, 56
  %3681 = vset.pattern.permute.xlu0 %v3680
  %3682 = vperm.xlu0 %3681, %v2886
  %v3683 = vpop.permute.xlu0 %3682
  %v3684 = vlaneseq
  %v3685 = vshrl.u32 %v3684, 7
  %v3686 = vadd.s32 %v3685, 48
  %3687 = vset.pattern.permute.xlu0 %v3686
  %3688 = vperm.xlu0 %3687, %v2899
  %v3689 = vpop.permute.xlu0 %3688
  %v3690 = vlaneseq
  %v3691 = vshrl.u32 %v3690, 7
  %v3692 = vadd.s32 %v3691, 56
  %3693 = vset.pattern.permute.xlu0 %v3692
  %3694 = vperm.xlu0 %3693, %v2899
  %v3695 = vpop.permute.xlu0 %3694
  %3696 = vst.msk [vmem:[#allocation4] sm:$0xff] %vm1424, %v3509
  %3697 = vst.msk [vmem:[#allocation4 + $0x8] sm:$0xff] %vm1424, %v3515
  %3698 = vst.msk [vmem:[#allocation4 + $0x10] sm:$0xff] %vm1424, %v3521
  %3699 = vst.msk [vmem:[#allocation4 + $0x18] sm:$0xff] %vm1424, %v3527
  %3700 = vst.msk [vmem:[#allocation4 + $0x20] sm:$0xff] %vm1424, %v3533
  %3701 = vst.msk [vmem:[#allocation4 + $0x28] sm:$0xff] %vm1424, %v3539
  %3702 = vst.msk [vmem:[#allocation4 + $0x30] sm:$0xff] %vm1424, %v3545
  %3703 = vst.msk [vmem:[#allocation4 + $0x38] sm:$0xff] %vm1424, %v3551
  %3704 = vst.msk [vmem:[#allocation4 + $0x40] sm:$0xff] %vm1424, %v3557
  %3705 = vst.msk [vmem:[#allocation4 + $0x48] sm:$0xff] %vm1424, %v3563
  %3706 = vst.msk [vmem:[#allocation4 + $0x50] sm:$0xff] %vm1424, %v3569
  %3707 = vst.msk [vmem:[#allocation4 + $0x58] sm:$0xff] %vm1424, %v3575
  %3708 = vst.msk [vmem:[#allocation4 + $0x60] sm:$0xff] %vm1424, %v3581
  %3709 = vst.msk [vmem:[#allocation4 + $0x68] sm:$0xff] %vm1424, %v3587
  %3710 = vst.msk [vmem:[#allocation4 + $0x70] sm:$0xff] %vm1424, %v3593
  %3711 = vst.msk [vmem:[#allocation4 + $0x78] sm:$0xff] %vm1424, %v3599
  %3712 = vst.msk [vmem:[#allocation4 + $0x80] sm:$0xff] %vm1424, %v3605
  %3713 = vst.msk [vmem:[#allocation4 + $0x88] sm:$0xff] %vm1424, %v3611
  %3714 = vst.msk [vmem:[#allocation4 + $0x90] sm:$0xff] %vm1424, %v3617
  %3715 = vst.msk [vmem:[#allocation4 + $0x98] sm:$0xff] %vm1424, %v3623
  %3716 = vst.msk [vmem:[#allocation4 + $0xa0] sm:$0xff] %vm1424, %v3629
  %3717 = vst.msk [vmem:[#allocation4 + $0xa8] sm:$0xff] %vm1424, %v3635
  %3718 = vst.msk [vmem:[#allocation4 + $0xb0] sm:$0xff] %vm1424, %v3641
  %3719 = vst.msk [vmem:[#allocation4 + $0xb8] sm:$0xff] %vm1424, %v3647
  %3720 = vst.msk [vmem:[#allocation4 + $0xc0] sm:$0xff] %vm1424, %v3653
  %3721 = vst.msk [vmem:[#allocation4 + $0xc8] sm:$0xff] %vm1424, %v3659
  %3722 = vst.msk [vmem:[#allocation4 + $0xd0] sm:$0xff] %vm1424, %v3665
  %3723 = vst.msk [vmem:[#allocation4 + $0xd8] sm:$0xff] %vm1424, %v3671
  %3724 = vst.msk [vmem:[#allocation4 + $0xe0] sm:$0xff] %vm1424, %v3677
  %3725 = vst.msk [vmem:[#allocation4 + $0xe8] sm:$0xff] %vm1424, %v3683
  %3726 = vst.msk [vmem:[#allocation4 + $0xf0] sm:$0xff] %vm1424, %v3689
  %3727 = vst.msk [vmem:[#allocation4 + $0xf8] sm:$0xff] %vm1424, %v3695
  %v3728 = vld [vmem:[#allocation2] sm:$0xff]
  %v3729 = vld [vmem:[#allocation2 + $0x8] sm:$0xff]
  %v3730 = vmul.f32 %v3728, 0.0
  %v3731 = vmul.f32 %v3729, 0.0
  %v3732 = vld [vmem:[#allocation3] sm:$0xff]
  %v3733 = vld [vmem:[#allocation3 + $0x8] sm:$0xff]
  %v3734 = vadd.f32 %v3730, %v3732
  %v3735 = vadd.f32 %v3731, %v3733
  %v3736 = vld [vmem:[#allocation4] sm:$0xff]
  %v3737 = vld [vmem:[#allocation4 + $0x8] sm:$0xff]
  %v3738 = vmul.f32 %v3736, %v3734
  %v3739 = vmul.f32 %v3737, %v3735
  %v3740 = vadd.f32 %v3738, %v3739
  %v3741 = vrot.slane %v3740, 4
  %v3742 = vadd.f32 %v3740, %v3741
  %v3743 = vrot.slane %v3742, 2
  %v3744 = vadd.f32 %v3742, %v3743
  %v3745 = vrot.slane %v3744, 1
  %v3746 = vadd.f32 %v3744, %v3745
  %3747 = vst [vmem:[#allocation5] sm:$0x1] %v3746
  %v3748 = vld [vmem:[%s1701] sm:$0xff]
  %v3749 = vld [vmem:[%s1701 + $0x8] sm:$0xff]
  %v3750 = vmul.f32 %v3748, %v3734
  %v3751 = vmul.f32 %v3749, %v3735
  %v3752 = vld [vmem:[%s1706] sm:$0xff]
  %v3753 = vld [vmem:[%s1706 + $0x8] sm:$0xff]
  %v3754 = vadd.f32 %v3750, %v3752
  %v3755 = vadd.f32 %v3751, %v3753
  %v3756 = vld [vmem:[%s1711] sm:$0xff]
  %v3757 = vld [vmem:[%s1711 + $0x8] sm:$0xff]
  %v3758 = vmul.f32 %v3756, %v3754
  %v3759 = vmul.f32 %v3757, %v3755
  %v3760 = vadd.f32 %v3758, %v3759
  %v3761 = vrot.slane %v3760, 4
  %v3762 = vadd.f32 %v3760, %v3761
  %v3763 = vrot.slane %v3762, 2
  %v3764 = vadd.f32 %v3762, %v3763
  %v3765 = vrot.slane %v3764, 1
  %v3766 = vadd.f32 %v3764, %v3765
  %3767 = vst [vmem:[#allocation5 + $0x1] sm:$0x1] %v3766
  %v3768 = vld [vmem:[%s1724] sm:$0xff]
  %v3769 = vld [vmem:[%s1724 + $0x8] sm:$0xff]
  %v3770 = vmul.f32 %v3768, %v3754
  %v3771 = vmul.f32 %v3769, %v3755
  %v3772 = vld [vmem:[%s1729] sm:$0xff]
  %v3773 = vld [vmem:[%s1729 + $0x8] sm:$0xff]
  %v3774 = vadd.f32 %v3770, %v3772
  %v3775 = vadd.f32 %v3771, %v3773
  %v3776 = vld [vmem:[%s1734] sm:$0xff]
  %v3777 = vld [vmem:[%s1734 + $0x8] sm:$0xff]
  %v3778 = vmul.f32 %v3776, %v3774
  %v3779 = vmul.f32 %v3777, %v3775
  %v3780 = vadd.f32 %v3778, %v3779
  %v3781 = vrot.slane %v3780, 4
  %v3782 = vadd.f32 %v3780, %v3781
  %v3783 = vrot.slane %v3782, 2
  %v3784 = vadd.f32 %v3782, %v3783
  %v3785 = vrot.slane %v3784, 1
  %v3786 = vadd.f32 %v3784, %v3785
  %3787 = vst [vmem:[#allocation5 + $0x2] sm:$0x1] %v3786
  %v3788 = vld [vmem:[%s1747] sm:$0xff]
  %v3789 = vld [vmem:[%s1747 + $0x8] sm:$0xff]
  %v3790 = vmul.f32 %v3788, %v3774
  %v3791 = vmul.f32 %v3789, %v3775
  %v3792 = vld [vmem:[%s1752] sm:$0xff]
  %v3793 = vld [vmem:[%s1752 + $0x8] sm:$0xff]
  %v3794 = vadd.f32 %v3790, %v3792
  %v3795 = vadd.f32 %v3791, %v3793
  %v3796 = vld [vmem:[%s1757] sm:$0xff]
  %v3797 = vld [vmem:[%s1757 + $0x8] sm:$0xff]
  %v3798 = vmul.f32 %v3796, %v3794
  %v3799 = vmul.f32 %v3797, %v3795
  %v3800 = vadd.f32 %v3798, %v3799
  %v3801 = vrot.slane %v3800, 4
  %v3802 = vadd.f32 %v3800, %v3801
  %v3803 = vrot.slane %v3802, 2
  %v3804 = vadd.f32 %v3802, %v3803
  %v3805 = vrot.slane %v3804, 1
  %v3806 = vadd.f32 %v3804, %v3805
  %3807 = vst [vmem:[#allocation5 + $0x3] sm:$0x1] %v3806
  %v3808 = vld [vmem:[%s1770] sm:$0xff]
  %v3809 = vld [vmem:[%s1770 + $0x8] sm:$0xff]
  %v3810 = vmul.f32 %v3808, %v3794
  %v3811 = vmul.f32 %v3809, %v3795
  %v3812 = vld [vmem:[%s1775] sm:$0xff]
  %v3813 = vld [vmem:[%s1775 + $0x8] sm:$0xff]
  %v3814 = vadd.f32 %v3810, %v3812
  %v3815 = vadd.f32 %v3811, %v3813
  %v3816 = vld [vmem:[%s1780] sm:$0xff]
  %v3817 = vld [vmem:[%s1780 + $0x8] sm:$0xff]
  %v3818 = vmul.f32 %v3816, %v3814
  %v3819 = vmul.f32 %v3817, %v3815
  %v3820 = vadd.f32 %v3818, %v3819
  %v3821 = vrot.slane %v3820, 4
  %v3822 = vadd.f32 %v3820, %v3821
  %v3823 = vrot.slane %v3822, 2
  %v3824 = vadd.f32 %v3822, %v3823
  %v3825 = vrot.slane %v3824, 1
  %v3826 = vadd.f32 %v3824, %v3825
  %3827 = vst [vmem:[#allocation5 + $0x4] sm:$0x1] %v3826
  %v3828 = vld [vmem:[%s1793] sm:$0xff]
  %v3829 = vld [vmem:[%s1793 + $0x8] sm:$0xff]
  %v3830 = vmul.f32 %v3828, %v3814
  %v3831 = vmul.f32 %v3829, %v3815
  %v3832 = vld [vmem:[%s1798] sm:$0xff]
  %v3833 = vld [vmem:[%s1798 + $0x8] sm:$0xff]
  %v3834 = vadd.f32 %v3830, %v3832
  %v3835 = vadd.f32 %v3831, %v3833
  %v3836 = vld [vmem:[%s1803] sm:$0xff]
  %v3837 = vld [vmem:[%s1803 + $0x8] sm:$0xff]
  %v3838 = vmul.f32 %v3836, %v3834
  %v3839 = vmul.f32 %v3837, %v3835
  %v3840 = vadd.f32 %v3838, %v3839
  %v3841 = vrot.slane %v3840, 4
  %v3842 = vadd.f32 %v3840, %v3841
  %v3843 = vrot.slane %v3842, 2
  %v3844 = vadd.f32 %v3842, %v3843
  %v3845 = vrot.slane %v3844, 1
  %v3846 = vadd.f32 %v3844, %v3845
  %3847 = vst [vmem:[#allocation5 + $0x5] sm:$0x1] %v3846
  %v3848 = vld [vmem:[%s1816] sm:$0xff]
  %v3849 = vld [vmem:[%s1816 + $0x8] sm:$0xff]
  %v3850 = vmul.f32 %v3848, %v3834
  %v3851 = vmul.f32 %v3849, %v3835
  %v3852 = vld [vmem:[%s1821] sm:$0xff]
  %v3853 = vld [vmem:[%s1821 + $0x8] sm:$0xff]
  %v3854 = vadd.f32 %v3850, %v3852
  %v3855 = vadd.f32 %v3851, %v3853
  %v3856 = vld [vmem:[%s1826] sm:$0xff]
  %v3857 = vld [vmem:[%s1826 + $0x8] sm:$0xff]
  %v3858 = vmul.f32 %v3856, %v3854
  %v3859 = vmul.f32 %v3857, %v3855
  %v3860 = vadd.f32 %v3858, %v3859
  %v3861 = vrot.slane %v3860, 4
  %v3862 = vadd.f32 %v3860, %v3861
  %v3863 = vrot.slane %v3862, 2
  %v3864 = vadd.f32 %v3862, %v3863
  %v3865 = vrot.slane %v3864, 1
  %v3866 = vadd.f32 %v3864, %v3865
  %3867 = vst [vmem:[#allocation5 + $0x6] sm:$0x1] %v3866
  %v3868 = vld [vmem:[%s1839] sm:$0xff]
  %v3869 = vld [vmem:[%s1839 + $0x8] sm:$0xff]
  %v3870 = vmul.f32 %v3868, %v3854
  %v3871 = vmul.f32 %v3869, %v3855
  %v3872 = vld [vmem:[%s1844] sm:$0xff]
  %v3873 = vld [vmem:[%s1844 + $0x8] sm:$0xff]
  %v3874 = vadd.f32 %v3870, %v3872
  %v3875 = vadd.f32 %v3871, %v3873
  %v3876 = vld [vmem:[%s1849] sm:$0xff]
  %v3877 = vld [vmem:[%s1849 + $0x8] sm:$0xff]
  %v3878 = vmul.f32 %v3876, %v3874
  %v3879 = vmul.f32 %v3877, %v3875
  %v3880 = vadd.f32 %v3878, %v3879
  %v3881 = vrot.slane %v3880, 4
  %v3882 = vadd.f32 %v3880, %v3881
  %v3883 = vrot.slane %v3882, 2
  %v3884 = vadd.f32 %v3882, %v3883
  %v3885 = vrot.slane %v3884, 1
  %v3886 = vadd.f32 %v3884, %v3885
  %3887 = vst [vmem:[#allocation5 + $0x7] sm:$0x1] %v3886
  %v3888 = vld [vmem:[%s639] sm:$0xff]
  %v3889 = vld [vmem:[%s639 + $0x8] sm:$0xff]
  %v3890 = vmul.f32 %v3888, %v3874
  %v3891 = vmul.f32 %v3889, %v3875
  %v3892 = vld [vmem:[%s1866] sm:$0xff]
  %v3893 = vld [vmem:[%s1866 + $0x8] sm:$0xff]
  %v3894 = vadd.f32 %v3890, %v3892
  %v3895 = vadd.f32 %v3891, %v3893
  %v3896 = vld [vmem:[%s1871] sm:$0xff]
  %v3897 = vld [vmem:[%s1871 + $0x8] sm:$0xff]
  %v3898 = vmul.f32 %v3896, %v3894
  %v3899 = vmul.f32 %v3897, %v3895
  %v3900 = vadd.f32 %v3898, %v3899
  %v3901 = vrot.slane %v3900, 4
  %v3902 = vadd.f32 %v3900, %v3901
  %v3903 = vrot.slane %v3902, 2
  %v3904 = vadd.f32 %v3902, %v3903
  %v3905 = vrot.slane %v3904, 1
  %v3906 = vadd.f32 %v3904, %v3905
  %3907 = vst [vmem:[#allocation5 + $0x8] sm:$0x1] %v3906
  %v3908 = vld [vmem:[%s1884] sm:$0xff]
  %v3909 = vld [vmem:[%s1884 + $0x8] sm:$0xff]
  %v3910 = vmul.f32 %v3908, %v3894
  %v3911 = vmul.f32 %v3909, %v3895
  %v3912 = vld [vmem:[%s1889] sm:$0xff]
  %v3913 = vld [vmem:[%s1889 + $0x8] sm:$0xff]
  %v3914 = vadd.f32 %v3910, %v3912
  %v3915 = vadd.f32 %v3911, %v3913
  %v3916 = vld [vmem:[%s1894] sm:$0xff]
  %v3917 = vld [vmem:[%s1894 + $0x8] sm:$0xff]
  %v3918 = vmul.f32 %v3916, %v3914
  %v3919 = vmul.f32 %v3917, %v3915
  %v3920 = vadd.f32 %v3918, %v3919
  %v3921 = vrot.slane %v3920, 4
  %v3922 = vadd.f32 %v3920, %v3921
  %v3923 = vrot.slane %v3922, 2
  %v3924 = vadd.f32 %v3922, %v3923
  %v3925 = vrot.slane %v3924, 1
  %v3926 = vadd.f32 %v3924, %v3925
  %3927 = vst [vmem:[#allocation5 + $0x9] sm:$0x1] %v3926
  %v3928 = vld [vmem:[%s1907] sm:$0xff]
  %v3929 = vld [vmem:[%s1907 + $0x8] sm:$0xff]
  %v3930 = vmul.f32 %v3928, %v3914
  %v3931 = vmul.f32 %v3929, %v3915
  %v3932 = vld [vmem:[%s1912] sm:$0xff]
  %v3933 = vld [vmem:[%s1912 + $0x8] sm:$0xff]
  %v3934 = vadd.f32 %v3930, %v3932
  %v3935 = vadd.f32 %v3931, %v3933
  %v3936 = vld [vmem:[%s1917] sm:$0xff]
  %v3937 = vld [vmem:[%s1917 + $0x8] sm:$0xff]
  %v3938 = vmul.f32 %v3936, %v3934
  %v3939 = vmul.f32 %v3937, %v3935
  %v3940 = vadd.f32 %v3938, %v3939
  %v3941 = vrot.slane %v3940, 4
  %v3942 = vadd.f32 %v3940, %v3941
  %v3943 = vrot.slane %v3942, 2
  %v3944 = vadd.f32 %v3942, %v3943
  %v3945 = vrot.slane %v3944, 1
  %v3946 = vadd.f32 %v3944, %v3945
  %3947 = vst [vmem:[#allocation5 + $0xa] sm:$0x1] %v3946
  %v3948 = vld [vmem:[%s1930] sm:$0xff]
  %v3949 = vld [vmem:[%s1930 + $0x8] sm:$0xff]
  %v3950 = vmul.f32 %v3948, %v3934
  %v3951 = vmul.f32 %v3949, %v3935
  %v3952 = vld [vmem:[%s1935] sm:$0xff]
  %v3953 = vld [vmem:[%s1935 + $0x8] sm:$0xff]
  %v3954 = vadd.f32 %v3950, %v3952
  %v3955 = vadd.f32 %v3951, %v3953
  %v3956 = vld [vmem:[%s1940] sm:$0xff]
  %v3957 = vld [vmem:[%s1940 + $0x8] sm:$0xff]
  %v3958 = vmul.f32 %v3956, %v3954
  %v3959 = vmul.f32 %v3957, %v3955
  %v3960 = vadd.f32 %v3958, %v3959
  %v3961 = vrot.slane %v3960, 4
  %v3962 = vadd.f32 %v3960, %v3961
  %v3963 = vrot.slane %v3962, 2
  %v3964 = vadd.f32 %v3962, %v3963
  %v3965 = vrot.slane %v3964, 1
  %v3966 = vadd.f32 %v3964, %v3965
  %3967 = vst [vmem:[#allocation5 + $0xb] sm:$0x1] %v3966
  %v3968 = vld [vmem:[%s1953] sm:$0xff]
  %v3969 = vld [vmem:[%s1953 + $0x8] sm:$0xff]
  %v3970 = vmul.f32 %v3968, %v3954
  %v3971 = vmul.f32 %v3969, %v3955
  %v3972 = vld [vmem:[%s1958] sm:$0xff]
  %v3973 = vld [vmem:[%s1958 + $0x8] sm:$0xff]
  %v3974 = vadd.f32 %v3970, %v3972
  %v3975 = vadd.f32 %v3971, %v3973
  %v3976 = vld [vmem:[%s1963] sm:$0xff]
  %v3977 = vld [vmem:[%s1963 + $0x8] sm:$0xff]
  %v3978 = vmul.f32 %v3976, %v3974
  %v3979 = vmul.f32 %v3977, %v3975
  %v3980 = vadd.f32 %v3978, %v3979
  %v3981 = vrot.slane %v3980, 4
  %v3982 = vadd.f32 %v3980, %v3981
  %v3983 = vrot.slane %v3982, 2
  %v3984 = vadd.f32 %v3982, %v3983
  %v3985 = vrot.slane %v3984, 1
  %v3986 = vadd.f32 %v3984, %v3985
  %3987 = vst [vmem:[#allocation5 + $0xc] sm:$0x1] %v3986
  %v3988 = vld [vmem:[%s1976] sm:$0xff]
  %v3989 = vld [vmem:[%s1976 + $0x8] sm:$0xff]
  %v3990 = vmul.f32 %v3988, %v3974
  %v3991 = vmul.f32 %v3989, %v3975
  %v3992 = vld [vmem:[%s1981] sm:$0xff]
  %v3993 = vld [vmem:[%s1981 + $0x8] sm:$0xff]
  %v3994 = vadd.f32 %v3990, %v3992
  %v3995 = vadd.f32 %v3991, %v3993
  %v3996 = vld [vmem:[%s1986] sm:$0xff]
  %v3997 = vld [vmem:[%s1986 + $0x8] sm:$0xff]
  %v3998 = vmul.f32 %v3996, %v3994
  %v3999 = vmul.f32 %v3997, %v3995
  %v4000 = vadd.f32 %v3998, %v3999
  %v4001 = vrot.slane %v4000, 4
  %v4002 = vadd.f32 %v4000, %v4001
  %v4003 = vrot.slane %v4002, 2
  %v4004 = vadd.f32 %v4002, %v4003
  %v4005 = vrot.slane %v4004, 1
  %v4006 = vadd.f32 %v4004, %v4005
  %4007 = vst [vmem:[#allocation5 + $0xd] sm:$0x1] %v4006
  %v4008 = vld [vmem:[%s1999] sm:$0xff]
  %v4009 = vld [vmem:[%s1999 + $0x8] sm:$0xff]
  %v4010 = vmul.f32 %v4008, %v3994
  %v4011 = vmul.f32 %v4009, %v3995
  %v4012 = vld [vmem:[%s2004] sm:$0xff]
  %v4013 = vld [vmem:[%s2004 + $0x8] sm:$0xff]
  %v4014 = vadd.f32 %v4010, %v4012
  %v4015 = vadd.f32 %v4011, %v4013
  %v4016 = vld [vmem:[%s2009] sm:$0xff]
  %v4017 = vld [vmem:[%s2009 + $0x8] sm:$0xff]
  %v4018 = vmul.f32 %v4016, %v4014
  %v4019 = vmul.f32 %v4017, %v4015
  %v4020 = vadd.f32 %v4018, %v4019
  %v4021 = vrot.slane %v4020, 4
  %v4022 = vadd.f32 %v4020, %v4021
  %v4023 = vrot.slane %v4022, 2
  %v4024 = vadd.f32 %v4022, %v4023
  %v4025 = vrot.slane %v4024, 1
  %v4026 = vadd.f32 %v4024, %v4025
  %4027 = vst [vmem:[#allocation5 + $0xe] sm:$0x1] %v4026
  %v4028 = vld [vmem:[%s2022] sm:$0xff]
  %v4029 = vld [vmem:[%s2022 + $0x8] sm:$0xff]
  %v4030 = vmul.f32 %v4028, %v4014
  %v4031 = vmul.f32 %v4029, %v4015
  %v4032 = vld [vmem:[%s2027] sm:$0xff]
  %v4033 = vld [vmem:[%s2027 + $0x8] sm:$0xff]
  %v4034 = vadd.f32 %v4030, %v4032
  %v4035 = vadd.f32 %v4031, %v4033
  %v4036 = vld [vmem:[%s2032] sm:$0xff]
  %v4037 = vld [vmem:[%s2032 + $0x8] sm:$0xff]
  %v4038 = vmul.f32 %v4036, %v4034
  %v4039 = vmul.f32 %v4037, %v4035
  %v4040 = vadd.f32 %v4038, %v4039
  %v4041 = vrot.slane %v4040, 4
  %v4042 = vadd.f32 %v4040, %v4041
  %v4043 = vrot.slane %v4042, 2
  %v4044 = vadd.f32 %v4042, %v4043
  %v4045 = vrot.slane %v4044, 1
  %v4046 = vadd.f32 %v4044, %v4045
  %4047 = vst [vmem:[#allocation5 + $0xf] sm:$0x1] %v4046
  %v4048 = vld [vmem:[#allocation5] sm:$0xff]
  %v4049 = vld [vmem:[#allocation5 + $0x8] sm:$0xff]
  %v4051 = vperm.slane %v2166, 0
  %v4053 = vmul.f32 %v4051, %v2455
  %v4054 = vmul.f32 %v4051, %v2456
  %v4055 = vadd.f32 %v4048, %v4053
  %v4056 = vadd.f32 %v4049, %v4054
  %v4057 = vand.u32 2147483647, %v2348
  %v4058 = vand.u32 2147483647, %v2351
  %v4059 = vsub.f32 0.0, %v4057
  %v4060 = vsub.f32 0.0, %v4058
  %v4061 = vmul.f32 %v4059, 1.442695
  %v4062 = vpow.pop %v4061
  %v4063 = vmul.f32 %v4060, 1.442695
  %v4064 = vpow.pop %v4063
  %vm4065 = vcmp.ge.f32.partialorder %v2348, 0.0
  %vm4066 = vcmp.ge.f32.partialorder %v2351, 0.0
  %v4067 = vsel %vm4065, 1.0, %v4062
  %v4068 = vsel %vm4066, 1.0, %v4064
  %v4069 = vadd.f32 %v4062, 1.0
  %v4070 = vadd.f32 %v4064, 1.0
  %v4071 = vrcp.pop %v4069
  %v4072 = vmul.f32 %v4069, %v4071
  %v4073 = vsub.f32 1.0, %v4072
  %v4074 = vmul.f32 %v4071, %v4073
  %v4075 = vadd.f32 %v4071, %v4074
  %vm4076 = vweird.f32 %v4069
  %vm4077 = vweird.f32 %v4071
  %vm4078 = vmor %vm4076, %vm4077
  %v4079 = vsel %vm4078, %v4071, %v4075
  %v4080 = vand.u32 2147483647, %v4069
  %vm4081 = vcmp.eq.f32.partialorder %v4080, 8.507059e+37
  %v4082 = vand.u32 %v4069, 2147483648
  %v4083 = vor.u32 1.1754944e-38, %v4082
  %v4084 = vsel %vm4081, %v4083, %v4079
  %v4085 = vmul.f32 %v4067, %v4084
  %v4086 = vrcp.pop %v4070
  %v4087 = vmul.f32 %v4070, %v4086
  %v4088 = vsub.f32 1.0, %v4087
  %v4089 = vmul.f32 %v4086, %v4088
  %v4090 = vadd.f32 %v4086, %v4089
  %vm4091 = vweird.f32 %v4070
  %vm4092 = vweird.f32 %v4086
  %vm4093 = vmor %vm4091, %vm4092
  %v4094 = vsel %vm4093, %v4086, %v4090
  %v4095 = vand.u32 2147483647, %v4070
  %vm4096 = vcmp.eq.f32.partialorder %v4095, 8.507059e+37
  %v4097 = vand.u32 %v4070, 2147483648
  %v4098 = vor.u32 1.1754944e-38, %v4097
  %v4099 = vsel %vm4096, %v4098, %v4094
  %v4100 = vmul.f32 %v4068, %v4099
  %v4101 = vmul.f32 %v2348, %v4085
  %v4102 = vmul.f32 %v2351, %v4100
  %v4103 = vmul.f32 %v4055, %v4101
  %v4104 = vmul.f32 %v4056, %v4102
  %4105 = vmatpush.msra.mxu0 %v2183
  %4106 = vmatpush.msra.mxu0 %v2182
  %4107 = vmatpush.msra.mxu0 %v2181
  %4108 = vmatpush.msra.mxu0 %v2180
  %4109 = vmatpush.msra.mxu0 %v2179
  %4110 = vmatpush.msra.mxu0 %v2178
  %4111 = vmatpush.msra.mxu0 %v2177
  %4112 = vmatpush.msra.mxu0 %v2176
  %4113 = vmatpush.msra.mxu0 %v2175
  %4114 = vmatpush.msra.mxu0 %v2174
  %4115 = vmatpush.msra.mxu0 %v2173
  %4116 = vmatpush.msra.mxu0 %v2172
  %4117 = vmatpush.msra.mxu0 %v2171
  %4118 = vmatpush.msra.mxu0 %v2170
  %4119 = vmatpush.msra.mxu0 %v2169
  %4120 = vmatpush.msra.mxu0 %v2168
  %4121 = vmatmul.f32.gmra.mxu0 %v4103
  %v4122 = vpop.f32.mrf.mxu0
  %v4123 = vadd.f32 %v2202, %v4122
  %4124 = vmatmul.f32.gmra.mxu0 %v4104
  %v4125 = vpop.f32.mrf.mxu0
  %v4126 = vadd.f32 %v2205, %v4125
  %4127 = vdwg.mxu0
  %v4128 = vld [vmem:[%s13] sm:$0x1]
  %v4129 = vld [vmem:[%s14] sm:$0x1]
  %v4131 = vsel %vm138, %v4123, 0
  %v4134 = vsel %vm138, %v4126, 0
  %4136 = vmatpush.msra.mxu0 0.0
  %4137 = vmatpush.msra.mxu0 0.0
  %4138 = vmatpush.msra.mxu0 0.0
  %4139 = vmatpush.msra.mxu0 0.0
  %4140 = vmatpush.msra.mxu0 0.0
  %4141 = vmatpush.msra.mxu0 0.0
  %4142 = vmatpush.msra.mxu0 0.0
  %4143 = vmatpush.msra.mxu0 0.0
  %4144 = vmatpush.msra.mxu0 %v57
  %4145 = vmatpush.msra.mxu0 %v56
  %4146 = vmatpush.msra.mxu0 %v55
  %4147 = vmatpush.msra.mxu0 %v54
  %4148 = vmatpush.msra.mxu0 %v53
  %4149 = vmatpush.msra.mxu0 %v52
  %4150 = vmatpush.msra.mxu0 %v51
  %4151 = vmatpush.msra.mxu0 %v50
  %4152 = vmatmul.f32.gmra.mxu0 %v4131
  %v4153 = vpop.f32.mrf.mxu0
  %v4154 = vadd.f32 0.0, %v4153
  %4155 = vmatmul.f32.gmra.mxu0 %v4134
  %v4156 = vpop.f32.mrf.mxu0
  %v4157 = vadd.f32 0.0, %v4156
  %4158 = vdwg.mxu0
  %v4159 = vsub.f32 %v4123, %v4154
  %v4160 = vsub.f32 %v4126, %v4157
  %v4161 = vmul.f32 %v4159, %v4159
  %v4162 = vmul.f32 %v4160, %v4160
  %v4164 = vsel %vm138, %v4161, 0
  %v4167 = vsel %vm138, %v4162, 0
  %4169 = vmatpush.msra.mxu0 0.0
  %4170 = vmatpush.msra.mxu0 0.0
  %4171 = vmatpush.msra.mxu0 0.0
  %4172 = vmatpush.msra.mxu0 0.0
  %4173 = vmatpush.msra.mxu0 0.0
  %4174 = vmatpush.msra.mxu0 0.0
  %4175 = vmatpush.msra.mxu0 0.0
  %4176 = vmatpush.msra.mxu0 0.0
  %4177 = vmatpush.msra.mxu0 %v57
  %4178 = vmatpush.msra.mxu0 %v56
  %4179 = vmatpush.msra.mxu0 %v55
  %4180 = vmatpush.msra.mxu0 %v54
  %4181 = vmatpush.msra.mxu0 %v53
  %4182 = vmatpush.msra.mxu0 %v52
  %4183 = vmatpush.msra.mxu0 %v51
  %4184 = vmatpush.msra.mxu0 %v50
  %4185 = vmatmul.f32.gmra.mxu0 %v4164
  %v4186 = vpop.f32.mrf.mxu0
  %v4187 = vadd.f32 1e-05, %v4186
  %4188 = vmatmul.f32.gmra.mxu0 %v4167
  %v4189 = vpop.f32.mrf.mxu0
  %v4190 = vadd.f32 1e-05, %v4189
  %4191 = vdwg.mxu0
  %v4192 = vrsqrt.pop %v4187
  %v4193 = vmul.f32 %v4192, %v4187
  %v4194 = vmul.f32 %v4193, %v4192
  %v4195 = vmul.f32 0.5, %v4194
  %v4196 = vsub.f32 1.5, %v4195
  %v4197 = vmul.f32 %v4192, %v4196
  %vm4198 = vweird.f32 %v4187
  %vm4199 = vweird.f32 %v4192
  %vm4200 = vmor %vm4198, %vm4199
  %v4201 = vsel %vm4200, %v4192, %v4197
  %v4202 = vrsqrt.pop %v4190
  %v4203 = vmul.f32 %v4202, %v4190
  %v4204 = vmul.f32 %v4203, %v4202
  %v4205 = vmul.f32 0.5, %v4204
  %v4206 = vsub.f32 1.5, %v4205
  %v4207 = vmul.f32 %v4202, %v4206
  %vm4208 = vweird.f32 %v4190
  %vm4209 = vweird.f32 %v4202
  %vm4210 = vmor %vm4208, %vm4209
  %v4211 = vsel %vm4210, %v4202, %v4207
  %v4212 = vmul.f32 %v4159, %v4201
  %v4213 = vmul.f32 %v4160, %v4211
  %v4215 = vperm.slane %v4128, 0
  %v4217 = vmul.f32 %v4212, %v4215
  %v4218 = vmul.f32 %v4213, %v4215
  %v4220 = vperm.slane %v4129, 0
  %v4222 = vadd.f32 %v4217, %v4220
  %v4223 = vadd.f32 %v4218, %v4220
  %4224 = vst.msk [vmem:[%s15] sm:$0xff] %vm138, %v4222
  %4225 = vst.msk [vmem:[%s15 + $0x8] sm:$0xff] %vm138, %v4223
  // Predicated region
  $region62: #{mamba_blocks_forward.1} parent=0 // pred_check
    _
  $region63: #{mamba_blocks_forward.1} parent=0 // pred_check_branch
    %4227 = sbr.rel (0) target = $region65
  $region64: #{mamba_blocks_forward.1} parent=0 // pred_region
    _
  $region65: #{mamba_blocks_forward.1} parent=0 // pred_fallthru
    _
  // Predicated region
  $region66: #{mamba_blocks_forward.1} parent=0 // pred_check
    _
  $region67: #{mamba_blocks_forward.1} parent=0 // pred_check_branch
    %4229 = sbr.rel (0) target = $region69
  $region68: #{mamba_blocks_forward.1} parent=0 // pred_region
    _
  $region69: #{mamba_blocks_forward.1} parent=0 // pred_fallthru
    _

</llo_original>
